<compile_context>
chip_gen: v5e
topology: v5e:2x2
jax: 0.10.0
libtpu: 0.0.40
codegen_flags: <defaults>
</compile_context>

<pallas_src>
import functools

import jax
import jax.numpy as jnp
from jax.experimental import pallas as pl
from jax.experimental.pallas import tpu as pltpu

_VMEM_LIMIT = 32 * 1024 * 1024  # explicit, safe across v5e / v6e / v7x


# ----------------------------------------------------------------------------
# Pallas kernels
# ----------------------------------------------------------------------------
def _gemm_bias_lrelu_kernel(x_ref, w_ref, b_ref, o_ref, acc_ref, *, slope):
    """Tiled GEMM; bias folded into accumulator init; fused LeakyReLU on store.

    Grid = (M tiles ["parallel"], K tiles ["arbitrary"]); acc is f32 VMEM.
    """
    @pl.when(pl.program_id(1) == 0)
    def _():
        acc_ref[...] = jnp.broadcast_to(b_ref[...], acc_ref.shape)

    acc_ref[...] += jnp.dot(x_ref[...], w_ref[...],
                            preferred_element_type=jnp.float32)

    @pl.when(pl.program_id(1) == pl.num_programs(1) - 1)
    def _():
        y = acc_ref[...]
        o_ref[...] = jnp.maximum(y, slope * y).astype(o_ref.dtype)  # LeakyReLU


def _gemm_bn_lrelu_kernel(x_ref, w_ref, b_ref, g_ref, beta_ref, o_ref, acc_ref,
                          *, slope, eps):
    """GEMM (K-grid accumulation) + BatchNorm(batch stats) + LeakyReLU, fused.

    M is a single resident block (BN needs the full batch statistics), so the
    normalization happens in-register right before the only HBM store.
    """
    @pl.when(pl.program_id(0) == 0)
    def _():
        acc_ref[...] = jnp.broadcast_to(b_ref[...], acc_ref.shape)

    acc_ref[...] += jnp.dot(x_ref[...], w_ref[...],
                            preferred_element_type=jnp.float32)

    @pl.when(pl.program_id(0) == pl.num_programs(0) - 1)
    def _():
        y = acc_ref[...]
        inv_m = 1.0 / y.shape[0]
        mean = jnp.sum(y, axis=0, keepdims=True) * inv_m
        yc = y - mean
        var = jnp.sum(yc * yc, axis=0, keepdims=True) * inv_m  # biased variance
        z = yc * jax.lax.rsqrt(var + eps) * g_ref[...] + beta_ref[...]
        o_ref[...] = jnp.maximum(z, slope * z).astype(o_ref.dtype)


def _fc_stack_kernel(x_ref, w1_ref, b1_ref, g_ref, beta_ref, w2_ref, b2_ref,
                     o_ref, *, slope, eps):
    """fc1 + BatchNorm1d(batch stats) + LeakyReLU + fc2 in a single kernel."""
    h = jnp.dot(x_ref[...], w1_ref[...],
                preferred_element_type=jnp.float32) + b1_ref[...]
    inv_m = 1.0 / h.shape[0]
    mean = jnp.sum(h, axis=0, keepdims=True) * inv_m
    hc = h - mean
    var = jnp.sum(hc * hc, axis=0, keepdims=True) * inv_m      # biased variance
    h = hc * jax.lax.rsqrt(var + eps) * g_ref[...] + beta_ref[...]
    h = jnp.maximum(h, slope * h)                               # LeakyReLU
    # fc2 kept in f32 (13-wide logits; negligible cost, best output precision).
    o_ref[...] = (jnp.dot(h, w2_ref[...], preferred_element_type=jnp.float32)
                  + b2_ref[...]).astype(o_ref.dtype)


# ----------------------------------------------------------------------------
# Pallas wrappers
# ----------------------------------------------------------------------------
def _pick_tile(dim, cap, multiple):
    """Largest t <= cap that divides dim and is a multiple of `multiple`
    (or the whole dim)."""
    for t in range(min(cap, dim), 0, -1):
        if dim % t == 0 and (t % multiple == 0 or t == dim):
            return t
    return dim


def conv_gemm_bias_lrelu(cols, w, b, *, slope=0.2):
    """(M,K)bf16 @ (K,N)bf16 + b, LeakyReLU, bf16 out.  Tiled over (M, K)."""
    M, K = cols.shape
    K2, N = w.shape
    assert K == K2
    tm = _pick_tile(M, 512, 8)
    tk = _pick_tile(K, 512, 128)
    cost = pl.CostEstimate(
        flops=2 * M * K * N, transcendentals=0,
        bytes_accessed=cols.size * 2 + w.size * 2 + b.size * 4 + M * N * 2)
    return pl.pallas_call(
        functools.partial(_gemm_bias_lrelu_kernel, slope=slope),
        out_shape=jax.ShapeDtypeStruct((M, N), jnp.bfloat16),
        grid=(M // tm, K // tk),
        in_specs=[
            pl.BlockSpec((tm, tk), lambda i, k: (i, k)),
            pl.BlockSpec((tk, N), lambda i, k: (k, 0)),
            pl.BlockSpec((1, N), lambda i, k: (0, 0)),
        ],
        out_specs=pl.BlockSpec((tm, N), lambda i, k: (i, 0)),
        scratch_shapes=[pltpu.VMEM((tm, N), jnp.float32)],
        compiler_params=pltpu.CompilerParams(
            dimension_semantics=("parallel", "arbitrary"),
            vmem_limit_bytes=_VMEM_LIMIT),
        cost_estimate=cost,
    )(cols, w, b.reshape(1, N))


def conv_gemm_bn_lrelu(cols, w, b, gamma, beta, *, slope=0.2, eps=1e-5):
    """GEMM + BatchNorm2d(batch stats over rows) + LeakyReLU, one kernel."""
    M, K = cols.shape
    K2, N = w.shape
    assert K == K2
    tk = _pick_tile(K, 512, 128)
    cost = pl.CostEstimate(
        flops=2 * M * K * N + 8 * M * N, transcendentals=N,
        bytes_accessed=cols.size * 2 + w.size * 2 + 3 * N * 4 + M * N * 2)
    return pl.pallas_call(
        functools.partial(_gemm_bn_lrelu_kernel, slope=slope, eps=eps),
        out_shape=jax.ShapeDtypeStruct((M, N), jnp.bfloat16),
        grid=(K // tk,),
        in_specs=[
            pl.BlockSpec((M, tk), lambda k: (0, k)),
            pl.BlockSpec((tk, N), lambda k: (k, 0)),
            pl.BlockSpec((1, N), lambda k: (0, 0)),
            pl.BlockSpec((1, N), lambda k: (0, 0)),
            pl.BlockSpec((1, N), lambda k: (0, 0)),
        ],
        out_specs=pl.BlockSpec((M, N), lambda k: (0, 0)),
        scratch_shapes=[pltpu.VMEM((M, N), jnp.float32)],
        compiler_params=pltpu.CompilerParams(
            dimension_semantics=("arbitrary",),
            vmem_limit_bytes=_VMEM_LIMIT),
        cost_estimate=cost,
    )(cols, w, b.reshape(1, N), gamma.reshape(1, N), beta.reshape(1, N))


def fc_stack(flat, w1, b1, gamma, beta, w2, b2, *, slope=0.2, eps=1e-5):
    """fc1 + BN1d + LeakyReLU + fc2 fused; all weights resident in VMEM."""
    B, F = flat.shape
    F2, H = w1.shape
    H2, O = w2.shape
    assert F == F2 and H == H2
    cost = pl.CostEstimate(
        flops=2 * B * F * H + 2 * B * H * O + 10 * B * H, transcendentals=H,
        bytes_accessed=flat.size * 2 + w1.size * 2 + w2.size * 4
        + (3 * H + O) * 4 + B * O * 4)
    return pl.pallas_call(
        functools.partial(_fc_stack_kernel, slope=slope, eps=eps),
        out_shape=jax.ShapeDtypeStruct((B, O), jnp.float32),
        grid=(1,),
        in_specs=[
            pl.BlockSpec((B, F), lambda i: (0, 0)),
            pl.BlockSpec((F, H), lambda i: (0, 0)),
            pl.BlockSpec((1, H), lambda i: (0, 0)),
            pl.BlockSpec((1, H), lambda i: (0, 0)),
            pl.BlockSpec((1, H), lambda i: (0, 0)),
            pl.BlockSpec((H, O), lambda i: (0, 0)),
            pl.BlockSpec((1, O), lambda i: (0, 0)),
        ],
        out_specs=pl.BlockSpec((B, O), lambda i: (0, 0)),
        compiler_params=pltpu.CompilerParams(
            dimension_semantics=("arbitrary",),
            vmem_limit_bytes=_VMEM_LIMIT),
        cost_estimate=cost,
    )(flat, w1, b1.reshape(1, H), gamma.reshape(1, H), beta.reshape(1, H),
      w2, b2.reshape(1, O))


# ----------------------------------------------------------------------------
# Glue: im2col (stride-2, kernel-4, pad-1 convs) and parameter setup
# ----------------------------------------------------------------------------
def im2col(x_nhwc, k, stride, pad):
    """x: (N,H,W,C) -> (N*Ho*Wo, k*k*C); column order = (di, dj, c).

    TODO(synk): fold the k*k conv taps into the GEMM K-grid instead of
    materializing im2col (overlapping strided windows are not expressible with
    BlockSpec and the in-kernel route needs a sublane-merging reshape); traffic
    is mitigated here by doing the whole im2col in bf16.
    """
    x = jnp.pad(x_nhwc, ((0, 0), (pad, pad), (pad, pad), (0, 0)))
    N, H, W, C = x.shape
    Ho = (H - k) // stride + 1
    Wo = (W - k) // stride + 1
    patches = []
    for di in range(k):
        for dj in range(k):
            patches.append(
                x[:, di:di + Ho * stride:stride, dj:dj + Wo * stride:stride, :])
    cols = jnp.concatenate(patches, axis=-1)  # (N, Ho, Wo, k*k*C)
    return cols.reshape(N * Ho * Wo, k * k * C), (N, Ho, Wo)


def conv_weight_to_gemm(w_oikk):
    """PyTorch conv weight (Cout, Cin, K, K) -> (K*K*Cin, Cout) matching im2col."""
    Cout, Cin, K, _ = w_oikk.shape
    return jnp.transpose(w_oikk, (2, 3, 1, 0)).reshape(K * K * Cin, Cout)


def init_params(key, input_channel, input_size, output_dim, len_disc, len_cont):
    ks = jax.random.split(key, 16)
    n = [0]

    def nrm(shape, scale=0.02):
        i = n[0]
        n[0] += 1
        return scale * jax.random.normal(ks[i], shape, dtype=jnp.float32)

    p = {}
    p["w1"] = nrm((32, input_channel, 4, 4));  p["b1"] = jnp.zeros((32,), jnp.float32)
    p["w2"] = nrm((64, 32, 4, 4));             p["b2"] = jnp.zeros((64,), jnp.float32)
    p["w3"] = nrm((128, 64, 4, 4));            p["b3"] = jnp.zeros((128,), jnp.float32)
    p["bn2_g"] = 1.0 + nrm((128,));            p["bn2_b"] = jnp.zeros((128,), jnp.float32)
    feat = 128 * (input_size // 8) * (input_size // 8)
    p["fc1_w"] = nrm((feat, 1024));            p["fc1_b"] = jnp.zeros((1024,), jnp.float32)
    p["bn1_g"] = 1.0 + nrm((1024,));           p["bn1_b"] = jnp.zeros((1024,), jnp.float32)
    out_total = output_dim + len_cont + len_disc
    p["fc2_w"] = nrm((1024, out_total));       p["fc2_b"] = jnp.zeros((out_total,), jnp.float32)
    return p


def prepare_params(p, input_size):
    """One-time layout folding (done outside the forward pass):
      * conv weights -> im2col GEMM layout, cast to bf16,
      * the NCHW-flatten permutation folded into fc1's weight rows (so the
        runtime forward needs no activation transpose), fc1 cast to bf16,
      * fc2 kept in f32 (13-wide output logits)."""
    s8 = input_size // 8
    q = {}
    q["w1"] = conv_weight_to_gemm(p["w1"]).astype(jnp.bfloat16); q["b1"] = p["b1"]
    q["w2"] = conv_weight_to_gemm(p["w2"]).astype(jnp.bfloat16); q["b2"] = p["b2"]
    q["w3"] = conv_weight_to_gemm(p["w3"]).astype(jnp.bfloat16); q["b3"] = p["b3"]
    q["bn2_g"], q["bn2_b"] = p["bn2_g"], p["bn2_b"]
    # PyTorch flattens NCHW (c, h, w); our conv3 output rows flatten NHWC
    # (h, w, c).  Permute fc1's input rows once so the results match.
    fc1 = p["fc1_w"].reshape(128, s8, s8, 1024)
    fc1 = jnp.transpose(fc1, (1, 2, 0, 3)).reshape(128 * s8 * s8, 1024)
    q["fc1_w"] = fc1.astype(jnp.bfloat16);     q["fc1_b"] = p["fc1_b"]
    q["bn1_g"], q["bn1_b"] = p["bn1_g"], p["bn1_b"]
    q["fc2_w"], q["fc2_b"] = p["fc2_w"], p["fc2_b"]
    return q


# ----------------------------------------------------------------------------
# Forward pass
# ----------------------------------------------------------------------------
def discriminator_mwm_forward(x_nchw, q, *, input_size, output_dim,
                              len_disc, len_cont):
    slope = 0.2
    # NCHW -> NHWC once; bf16 operands for the MXU (f32 accumulation in-kernel).
    x = jnp.transpose(x_nchw, (0, 2, 3, 1)).astype(jnp.bfloat16)

    # conv1 + LeakyReLU (fused GEMM epilogue)
    cols, (N, Ho, Wo) = im2col(x, 4, 2, 1)
    x = conv_gemm_bias_lrelu(cols, q["w1"], q["b1"], slope=slope).reshape(N, Ho, Wo, 32)

    # conv2 + LeakyReLU (fused GEMM epilogue)
    cols, (N, Ho, Wo) = im2col(x, 4, 2, 1)
    x = conv_gemm_bias_lrelu(cols, q["w2"], q["b2"], slope=slope).reshape(N, Ho, Wo, 64)

    # conv3 + BatchNorm2d (batch statistics) + LeakyReLU, all in ONE kernel
    cols, (N, Ho, Wo) = im2col(x, 4, 2, 1)
    y = conv_gemm_bn_lrelu(cols, q["w3"], q["b3"], q["bn2_g"], q["bn2_b"], slope=slope)

    # Flatten: rows are already (n, h, w); the NCHW channel-major permutation is
    # folded into fc1's weight, so this reshape is free (no transpose).
    flat = y.reshape(N, Ho * Wo * 128)

    # fc1 + BatchNorm1d + LeakyReLU + fc2, all in ONE kernel
    logits = fc_stack(flat, q["fc1_w"], q["fc1_b"], q["bn1_g"], q["bn1_b"],
                      q["fc2_w"], q["fc2_b"], slope=slope)

    # NOTE: mirrors the original module exactly: `a` indexes column `output_dim`
    # (i.e. column 1 for output_dim=1), not column 0, and overlaps with `b`.
    a = jax.nn.sigmoid(logits[:, output_dim])
    b = logits[:, output_dim:output_dim + len_disc]
    c = logits[:, output_dim + len_disc:]
    return a, b, c


if __name__ == "__main__":
    # Small shapes consistent with the module: input_size must be divisible by 8.
    BATCH, IN_CH, IN_SIZE = 4, 1, 16
    OUT_DIM, LEN_DISC, LEN_CONT = 1, 10, 2

    key = jax.random.PRNGKey(0)
    k_x, k_p = jax.random.split(key)
    x = jax.random.normal(k_x, (BATCH, IN_CH, IN_SIZE, IN_SIZE), dtype=jnp.float32)
    params = prepare_params(
        init_params(k_p, IN_CH, IN_SIZE, OUT_DIM, LEN_DISC, LEN_CONT), IN_SIZE)

    fwd = jax.jit(functools.partial(
        discriminator_mwm_forward,
        input_size=IN_SIZE, output_dim=OUT_DIM,
        len_disc=LEN_DISC, len_cont=LEN_CONT))

    a, b, c = fwd(x, params)
    jax.block_until_ready((a, b, c))

    assert a.shape == (BATCH,)
    assert b.shape == (BATCH, LEN_DISC)
    assert c.shape == (BATCH, LEN_CONT)
    print("KERNEL_OK")
</pallas_src>

<mosaic_0001>
module attributes {stable_mosaic.version = 11 : i64} {
  func.func @_gemm_bias_lrelu_kernel(%arg0: i32, %arg1: i32, %arg2: memref<256x16xbf16, #tpu.memory_space<vmem>>, %arg3: memref<16x32xbf16, #tpu.memory_space<vmem>>, %arg4: memref<1x32xf32, #tpu.memory_space<vmem>>, %arg5: memref<256x32xbf16, #tpu.memory_space<vmem>>, %arg6: memref<256x32xf32, #tpu.memory_space<vmem>>) attributes {dimension_semantics = [#tpu.dimension_semantics<parallel>, #tpu.dimension_semantics<arbitrary>], iteration_bounds = array<i64: 1, 1>, scalar_prefetch = 0 : i64, scratch_operands = 1 : i64, tpu.core_type = #tpu.core_type<tc>, window_params = [{transform_indices = @transform_0, window_bounds = array<i64: 256, 16>}, {transform_indices = @transform_1, window_bounds = array<i64: 16, 32>}, {pipeline_mode = #tpu.pipeline_mode<synchronous>, transform_indices = @transform_2, window_bounds = array<i64: 1, 32>}, {transform_indices = @transform_3, window_bounds = array<i64: 256, 32>}]} {
    %c0_i32 = arith.constant 0 : i32
    %0 = arith.cmpi eq, %arg1, %c0_i32 : i32
    %1 = arith.extui %0 : i1 to i32
    %c0_i32_0 = arith.constant 0 : i32
    %2 = arith.cmpi ne, %1, %c0_i32_0 : i32
    scf.if %2 {
      %c0_10 = arith.constant 0 : index
      %c0_11 = arith.constant 0 : index
      %12 = vector.load %arg4[%c0_10, %c0_11] : memref<1x32xf32, #tpu.memory_space<vmem>>, vector<1x32xf32>
      %13 = vector.shape_cast %12 : vector<1x32xf32> to vector<1x32xf32>
      %14 = vector.broadcast %13 : vector<1x32xf32> to vector<256x32xf32>
      %c0_12 = arith.constant 0 : index
      %c0_13 = arith.constant 0 : index
      %15 = vector.load %arg6[%c0_12, %c0_13] : memref<256x32xf32, #tpu.memory_space<vmem>>, vector<256x32xf32>
      tpu.vector_store %arg6[%c0_12, %c0_13], %14 {strides = array<i32>} : memref<256x32xf32, #tpu.memory_space<vmem>>, vector<256x32xf32>,
    } else {
    }
    %c0 = arith.constant 0 : index
    %c0_1 = arith.constant 0 : index
    %3 = vector.load %arg6[%c0, %c0_1] : memref<256x32xf32, #tpu.memory_space<vmem>>, vector<256x32xf32>
    %c0_2 = arith.constant 0 : index
    %c0_3 = arith.constant 0 : index
    %4 = vector.load %arg2[%c0_2, %c0_3] : memref<256x16xbf16, #tpu.memory_space<vmem>>, vector<256x16xbf16>
    %c0_4 = arith.constant 0 : index
    %c0_5 = arith.constant 0 : index
    %5 = vector.load %arg3[%c0_4, %c0_5] : memref<16x32xbf16, #tpu.memory_space<vmem>>, vector<16x32xbf16>
    %cst = arith.constant dense<0.000000e+00> : vector<256x32xf32>
    %6 = tpu.matmul %4, %5, %cst {dimension_numbers = #tpu.dot_dimension_numbers<[1], [0], [0], [1], [0, 0, 1, 1], [], []>} : vector<256x16xbf16>, vector<16x32xbf16>, vector<256x32xf32> -> vector<256x32xf32>
    %7 = arith.addf %3, %6 : vector<256x32xf32>
    %c0_6 = arith.constant 0 : index
    %c0_7 = arith.constant 0 : index
    %8 = vector.load %arg6[%c0_6, %c0_7] : memref<256x32xf32, #tpu.memory_space<vmem>>, vector<256x32xf32>
    tpu.vector_store %arg6[%c0_6, %c0_7], %7 {strides = array<i32>} : memref<256x32xf32, #tpu.memory_space<vmem>>, vector<256x32xf32>,
    %c0_i32_8 = arith.constant 0 : i32
    %9 = arith.cmpi eq, %arg1, %c0_i32_8 : i32
    %10 = arith.extui %9 : i1 to i32
    %c0_i32_9 = arith.constant 0 : i32
    %11 = arith.cmpi ne, %10, %c0_i32_9 : i32
    scf.if %11 {
      %c0_10 = arith.constant 0 : index
      %c0_11 = arith.constant 0 : index
      %12 = vector.load %arg6[%c0_10, %c0_11] : memref<256x32xf32, #tpu.memory_space<vmem>>, vector<256x32xf32>
      %cst_12 = arith.constant 2.000000e-01 : f32
      %13 = vector.broadcast %cst_12 : f32 to vector<256x32xf32>
      %14 = arith.mulf %13, %12 : vector<256x32xf32>
      %15 = arith.maximumf %12, %14 : vector<256x32xf32>
      %16 = arith.truncf %15 : vector<256x32xf32> to vector<256x32xbf16>
      %c0_13 = arith.constant 0 : index
      %c0_14 = arith.constant 0 : index
      %17 = vector.load %arg5[%c0_13, %c0_14] : memref<256x32xbf16, #tpu.memory_space<vmem>>, vector<256x32xbf16>
      tpu.vector_store %arg5[%c0_13, %c0_14], %16 {strides = array<i32>} : memref<256x32xbf16, #tpu.memory_space<vmem>>, vector<256x32xbf16>,
    } else {
    }
    return
  }
  func.func @transform_0(%arg0: i32, %arg1: i32) -> (i32, i32) {
    %c0_i32 = arith.constant 0 : i32
    return %arg0, %arg1 : i32, i32
  }
  func.func @transform_1(%arg0: i32, %arg1: i32) -> (i32, i32) {
    %c0_i32 = arith.constant 0 : i32
    %c0_i32_0 = arith.constant 0 : i32
    return %arg1, %c0_i32 : i32, i32
  }
  func.func @transform_2(%arg0: i32, %arg1: i32) -> (i32, i32) {
    %c0_i32 = arith.constant 0 : i32
    %c0_i32_0 = arith.constant 0 : i32
    %c0_i32_1 = arith.constant 0 : i32
    return %c0_i32, %c0_i32_0 : i32, i32
  }
  func.func @transform_3(%arg0: i32, %arg1: i32) -> (i32, i32) {
    %c0_i32 = arith.constant 0 : i32
    %c0_i32_0 = arith.constant 0 : i32
    return %arg0, %c0_i32 : i32, i32
  }
}

module attributes {stable_mosaic.version = 11 : i64} {
  func.func @_gemm_bias_lrelu_kernel(%arg0: i32, %arg1: i32, %arg2: memref<64x512xbf16, #tpu.memory_space<vmem>>, %arg3: memref<512x64xbf16, #tpu.memory_space<vmem>>, %arg4: memref<1x64xf32, #tpu.memory_space<vmem>>, %arg5: memref<64x64xbf16, #tpu.memory_space<vmem>>, %arg6: memref<64x64xf32, #tpu.memory_space<vmem>>) attributes {dimension_semantics = [#tpu.dimension_semantics<parallel>, #tpu.dimension_semantics<arbitrary>], iteration_bounds = array<i64: 1, 1>, scalar_prefetch = 0 : i64, scratch_operands = 1 : i64, tpu.core_type = #tpu.core_type<tc>, window_params = [{transform_indices = @transform_0, window_bounds = array<i64: 64, 512>}, {transform_indices = @transform_1, window_bounds = array<i64: 512, 64>}, {pipeline_mode = #tpu.pipeline_mode<synchronous>, transform_indices = @transform_2, window_bounds = array<i64: 1, 64>}, {transform_indices = @transform_3, window_bounds = array<i64: 64, 64>}]} {
    %c0_i32 = arith.constant 0 : i32
    %0 = arith.cmpi eq, %arg1, %c0_i32 : i32
    %1 = arith.extui %0 : i1 to i32
    %c0_i32_0 = arith.constant 0 : i32
    %2 = arith.cmpi ne, %1, %c0_i32_0 : i32
    scf.if %2 {
      %c0_10 = arith.constant 0 : index
      %c0_11 = arith.constant 0 : index
      %12 = vector.load %arg4[%c0_10, %c0_11] : memref<1x64xf32, #tpu.memory_space<vmem>>, vector<1x64xf32>
      %13 = vector.shape_cast %12 : vector<1x64xf32> to vector<1x64xf32>
      %14 = vector.broadcast %13 : vector<1x64xf32> to vector<64x64xf32>
      %c0_12 = arith.constant 0 : index
      %c0_13 = arith.constant 0 : index
      %15 = vector.load %arg6[%c0_12, %c0_13] : memref<64x64xf32, #tpu.memory_space<vmem>>, vector<64x64xf32>
      tpu.vector_store %arg6[%c0_12, %c0_13], %14 {strides = array<i32>} : memref<64x64xf32, #tpu.memory_space<vmem>>, vector<64x64xf32>,
    } else {
    }
    %c0 = arith.constant 0 : index
    %c0_1 = arith.constant 0 : index
    %3 = vector.load %arg6[%c0, %c0_1] : memref<64x64xf32, #tpu.memory_space<vmem>>, vector<64x64xf32>
    %c0_2 = arith.constant 0 : index
    %c0_3 = arith.constant 0 : index
    %4 = vector.load %arg2[%c0_2, %c0_3] : memref<64x512xbf16, #tpu.memory_space<vmem>>, vector<64x512xbf16>
    %c0_4 = arith.constant 0 : index
    %c0_5 = arith.constant 0 : index
    %5 = vector.load %arg3[%c0_4, %c0_5] : memref<512x64xbf16, #tpu.memory_space<vmem>>, vector<512x64xbf16>
    %cst = arith.constant dense<0.000000e+00> : vector<64x64xf32>
    %6 = tpu.matmul %4, %5, %cst {dimension_numbers = #tpu.dot_dimension_numbers<[1], [0], [0], [1], [0, 0, 1, 1], [], []>} : vector<64x512xbf16>, vector<512x64xbf16>, vector<64x64xf32> -> vector<64x64xf32>
    %7 = arith.addf %3, %6 : vector<64x64xf32>
    %c0_6 = arith.constant 0 : index
    %c0_7 = arith.constant 0 : index
    %8 = vector.load %arg6[%c0_6, %c0_7] : memref<64x64xf32, #tpu.memory_space<vmem>>, vector<64x64xf32>
    tpu.vector_store %arg6[%c0_6, %c0_7], %7 {strides = array<i32>} : memref<64x64xf32, #tpu.memory_space<vmem>>, vector<64x64xf32>,
    %c0_i32_8 = arith.constant 0 : i32
    %9 = arith.cmpi eq, %arg1, %c0_i32_8 : i32
    %10 = arith.extui %9 : i1 to i32
    %c0_i32_9 = arith.constant 0 : i32
    %11 = arith.cmpi ne, %10, %c0_i32_9 : i32
    scf.if %11 {
      %c0_10 = arith.constant 0 : index
      %c0_11 = arith.constant 0 : index
      %12 = vector.load %arg6[%c0_10, %c0_11] : memref<64x64xf32, #tpu.memory_space<vmem>>, vector<64x64xf32>
      %cst_12 = arith.constant 2.000000e-01 : f32
      %13 = vector.broadcast %cst_12 : f32 to vector<64x64xf32>
      %14 = arith.mulf %13, %12 : vector<64x64xf32>
      %15 = arith.maximumf %12, %14 : vector<64x64xf32>
      %16 = arith.truncf %15 : vector<64x64xf32> to vector<64x64xbf16>
      %c0_13 = arith.constant 0 : index
      %c0_14 = arith.constant 0 : index
      %17 = vector.load %arg5[%c0_13, %c0_14] : memref<64x64xbf16, #tpu.memory_space<vmem>>, vector<64x64xbf16>
      tpu.vector_store %arg5[%c0_13, %c0_14], %16 {strides = array<i32>} : memref<64x64xbf16, #tpu.memory_space<vmem>>, vector<64x64xbf16>,
    } else {
    }
    return
  }
  func.func @transform_0(%arg0: i32, %arg1: i32) -> (i32, i32) {
    %c0_i32 = arith.constant 0 : i32
    return %arg0, %arg1 : i32, i32
  }
  func.func @transform_1(%arg0: i32, %arg1: i32) -> (i32, i32) {
    %c0_i32 = arith.constant 0 : i32
    %c0_i32_0 = arith.constant 0 : i32
    return %arg1, %c0_i32 : i32, i32
  }
  func.func @transform_2(%arg0: i32, %arg1: i32) -> (i32, i32) {
    %c0_i32 = arith.constant 0 : i32
    %c0_i32_0 = arith.constant 0 : i32
    %c0_i32_1 = arith.constant 0 : i32
    return %c0_i32, %c0_i32_0 : i32, i32
  }
  func.func @transform_3(%arg0: i32, %arg1: i32) -> (i32, i32) {
    %c0_i32 = arith.constant 0 : i32
    %c0_i32_0 = arith.constant 0 : i32
    return %arg0, %c0_i32 : i32, i32
  }
}

module attributes {stable_mosaic.version = 11 : i64} {
  func.func @_gemm_bn_lrelu_kernel(%arg0: i32, %arg1: memref<16x512xbf16, #tpu.memory_space<vmem>>, %arg2: memref<512x128xbf16, #tpu.memory_space<vmem>>, %arg3: memref<1x128xf32, #tpu.memory_space<vmem>>, %arg4: memref<1x128xf32, #tpu.memory_space<vmem>>, %arg5: memref<1x128xf32, #tpu.memory_space<vmem>>, %arg6: memref<16x128xbf16, #tpu.memory_space<vmem>>, %arg7: memref<16x128xf32, #tpu.memory_space<vmem>>) attributes {dimension_semantics = [#tpu.dimension_semantics<arbitrary>], iteration_bounds = array<i64: 2>, scalar_prefetch = 0 : i64, scratch_operands = 1 : i64, tpu.core_type = #tpu.core_type<tc>, window_params = [{transform_indices = @transform_0, window_bounds = array<i64: 16, 512>}, {transform_indices = @transform_1, window_bounds = array<i64: 512, 128>}, {pipeline_mode = #tpu.pipeline_mode<synchronous>, transform_indices = @transform_2, window_bounds = array<i64: 1, 128>}, {pipeline_mode = #tpu.pipeline_mode<synchronous>, transform_indices = @transform_3, window_bounds = array<i64: 1, 128>}, {pipeline_mode = #tpu.pipeline_mode<synchronous>, transform_indices = @transform_4, window_bounds = array<i64: 1, 128>}, {pipeline_mode = #tpu.pipeline_mode<synchronous>, transform_indices = @transform_5, window_bounds = array<i64: 16, 128>}]} {
    %c0_i32 = arith.constant 0 : i32
    %0 = arith.cmpi eq, %arg0, %c0_i32 : i32
    %1 = arith.extui %0 : i1 to i32
    %c0_i32_0 = arith.constant 0 : i32
    %2 = arith.cmpi ne, %1, %c0_i32_0 : i32
    scf.if %2 {
      %c0_9 = arith.constant 0 : index
      %c0_10 = arith.constant 0 : index
      %12 = vector.load %arg3[%c0_9, %c0_10] : memref<1x128xf32, #tpu.memory_space<vmem>>, vector<1x128xf32>
      %13 = vector.shape_cast %12 : vector<1x128xf32> to vector<1x128xf32>
      %14 = vector.broadcast %13 : vector<1x128xf32> to vector<16x128xf32>
      %c0_11 = arith.constant 0 : index
      %c0_12 = arith.constant 0 : index
      %15 = vector.load %arg7[%c0_11, %c0_12] : memref<16x128xf32, #tpu.memory_space<vmem>>, vector<16x128xf32>
      tpu.vector_store %arg7[%c0_11, %c0_12], %14 {strides = array<i32>} : memref<16x128xf32, #tpu.memory_space<vmem>>, vector<16x128xf32>,
    } else {
    }
    %c0 = arith.constant 0 : index
    %c0_1 = arith.constant 0 : index
    %3 = vector.load %arg7[%c0, %c0_1] : memref<16x128xf32, #tpu.memory_space<vmem>>, vector<16x128xf32>
    %c0_2 = arith.constant 0 : index
    %c0_3 = arith.constant 0 : index
    %4 = vector.load %arg1[%c0_2, %c0_3] : memref<16x512xbf16, #tpu.memory_space<vmem>>, vector<16x512xbf16>
    %c0_4 = arith.constant 0 : index
    %c0_5 = arith.constant 0 : index
    %5 = vector.load %arg2[%c0_4, %c0_5] : memref<512x128xbf16, #tpu.memory_space<vmem>>, vector<512x128xbf16>
    %cst = arith.constant dense<0.000000e+00> : vector<16x128xf32>
    %6 = tpu.matmul %4, %5, %cst {dimension_numbers = #tpu.dot_dimension_numbers<[1], [0], [0], [1], [0, 0, 1, 1], [], []>} : vector<16x512xbf16>, vector<512x128xbf16>, vector<16x128xf32> -> vector<16x128xf32>
    %7 = arith.addf %3, %6 : vector<16x128xf32>
    %c0_6 = arith.constant 0 : index
    %c0_7 = arith.constant 0 : index
    %8 = vector.load %arg7[%c0_6, %c0_7] : memref<16x128xf32, #tpu.memory_space<vmem>>, vector<16x128xf32>
    tpu.vector_store %arg7[%c0_6, %c0_7], %7 {strides = array<i32>} : memref<16x128xf32, #tpu.memory_space<vmem>>, vector<16x128xf32>,
    %c1_i32 = arith.constant 1 : i32
    %9 = arith.cmpi eq, %arg0, %c1_i32 : i32
    %10 = arith.extui %9 : i1 to i32
    %c0_i32_8 = arith.constant 0 : i32
    %11 = arith.cmpi ne, %10, %c0_i32_8 : i32
    scf.if %11 {
      %c0_9 = arith.constant 0 : index
      %c0_10 = arith.constant 0 : index
      %12 = vector.load %arg7[%c0_9, %c0_10] : memref<16x128xf32, #tpu.memory_space<vmem>>, vector<16x128xf32>
      %cst_11 = arith.constant dense<0.000000e+00> : vector<128xf32>
      %13 = vector.multi_reduction <add>, %12, %cst_11 [0] : vector<16x128xf32> to vector<128xf32>
      %14 = vector.shape_cast %13 : vector<128xf32> to vector<1x128xf32>
      %cst_12 = arith.constant 6.250000e-02 : f32
      %15 = vector.broadcast %cst_12 : f32 to vector<1x128xf32>
      %16 = arith.mulf %14, %15 : vector<1x128xf32>
      %17 = vector.broadcast %16 : vector<1x128xf32> to vector<16x128xf32>
      %18 = arith.subf %12, %17 : vector<16x128xf32>
      %19 = arith.mulf %18, %18 : vector<16x128xf32>
      %cst_13 = arith.constant dense<0.000000e+00> : vector<128xf32>
      %20 = vector.multi_reduction <add>, %19, %cst_13 [0] : vector<16x128xf32> to vector<128xf32>
      %21 = vector.shape_cast %20 : vector<128xf32> to vector<1x128xf32>
      %cst_14 = arith.constant 6.250000e-02 : f32
      %22 = vector.broadcast %cst_14 : f32 to vector<1x128xf32>
      %23 = arith.mulf %21, %22 : vector<1x128xf32>
      %cst_15 = arith.constant 9.99999974E-6 : f32
      %24 = vector.broadcast %cst_15 : f32 to vector<1x128xf32>
      %25 = arith.addf %23, %24 : vector<1x128xf32>
      %26 = math.rsqrt %25 : vector<1x128xf32>
      %27 = vector.broadcast %26 : vector<1x128xf32> to vector<16x128xf32>
      %28 = arith.mulf %18, %27 : vector<16x128xf32>
      %c0_16 = arith.constant 0 : index
      %c0_17 = arith.constant 0 : index
      %29 = vector.load %arg4[%c0_16, %c0_17] : memref<1x128xf32, #tpu.memory_space<vmem>>, vector<1x128xf32>
      %30 = vector.broadcast %29 : vector<1x128xf32> to vector<16x128xf32>
      %31 = arith.mulf %28, %30 : vector<16x128xf32>
      %c0_18 = arith.constant 0 : index
      %c0_19 = arith.constant 0 : index
      %32 = vector.load %arg5[%c0_18, %c0_19] : memref<1x128xf32, #tpu.memory_space<vmem>>, vector<1x128xf32>
      %33 = vector.broadcast %32 : vector<1x128xf32> to vector<16x128xf32>
      %34 = arith.addf %31, %33 : vector<16x128xf32>
      %cst_20 = arith.constant 2.000000e-01 : f32
      %35 = vector.broadcast %cst_20 : f32 to vector<16x128xf32>
      %36 = arith.mulf %35, %34 : vector<16x128xf32>
      %37 = arith.maximumf %34, %36 : vector<16x128xf32>
      %38 = arith.truncf %37 : vector<16x128xf32> to vector<16x128xbf16>
      %c0_21 = arith.constant 0 : index
      %c0_22 = arith.constant 0 : index
      %39 = vector.load %arg6[%c0_21, %c0_22] : memref<16x128xbf16, #tpu.memory_space<vmem>>, vector<16x128xbf16>
      tpu.vector_store %arg6[%c0_21, %c0_22], %38 {strides = array<i32>} : memref<16x128xbf16, #tpu.memory_space<vmem>>, vector<16x128xbf16>,
    } else {
    }
    return
  }
  func.func @transform_0(%arg0: i32) -> (i32, i32) {
    %c0_i32 = arith.constant 0 : i32
    %c0_i32_0 = arith.constant 0 : i32
    return %c0_i32, %arg0 : i32, i32
  }
  func.func @transform_1(%arg0: i32) -> (i32, i32) {
    %c0_i32 = arith.constant 0 : i32
    %c0_i32_0 = arith.constant 0 : i32
    return %arg0, %c0_i32 : i32, i32
  }
  func.func @transform_2(%arg0: i32) -> (i32, i32) {
    %c0_i32 = arith.constant 0 : i32
    %c0_i32_0 = arith.constant 0 : i32
    %c0_i32_1 = arith.constant 0 : i32
    return %c0_i32, %c0_i32_0 : i32, i32
  }
  func.func @transform_3(%arg0: i32) -> (i32, i32) {
    %c0_i32 = arith.constant 0 : i32
    %c0_i32_0 = arith.constant 0 : i32
    %c0_i32_1 = arith.constant 0 : i32
    return %c0_i32, %c0_i32_0 : i32, i32
  }
  func.func @transform_4(%arg0: i32) -> (i32, i32) {
    %c0_i32 = arith.constant 0 : i32
    %c0_i32_0 = arith.constant 0 : i32
    %c0_i32_1 = arith.constant 0 : i32
    return %c0_i32, %c0_i32_0 : i32, i32
  }
  func.func @transform_5(%arg0: i32) -> (i32, i32) {
    %c0_i32 = arith.constant 0 : i32
    %c0_i32_0 = arith.constant 0 : i32
    %c0_i32_1 = arith.constant 0 : i32
    return %c0_i32, %c0_i32_0 : i32, i32
  }
}

module attributes {stable_mosaic.version = 11 : i64} {
  func.func @_fc_stack_kernel(%arg0: i32, %arg1: memref<4x512xbf16, #tpu.memory_space<vmem>>, %arg2: memref<512x1024xbf16, #tpu.memory_space<vmem>>, %arg3: memref<1x1024xf32, #tpu.memory_space<vmem>>, %arg4: memref<1x1024xf32, #tpu.memory_space<vmem>>, %arg5: memref<1x1024xf32, #tpu.memory_space<vmem>>, %arg6: memref<1024x13xf32, #tpu.memory_space<vmem>>, %arg7: memref<1x13xf32, #tpu.memory_space<vmem>>, %arg8: memref<4x13xf32, #tpu.memory_space<vmem>>) attributes {dimension_semantics = [#tpu.dimension_semantics<arbitrary>], iteration_bounds = array<i64: 1>, scalar_prefetch = 0 : i64, scratch_operands = 0 : i64, tpu.core_type = #tpu.core_type<tc>, window_params = [{pipeline_mode = #tpu.pipeline_mode<synchronous>, transform_indices = @transform_0, window_bounds = array<i64: 4, 512>}, {pipeline_mode = #tpu.pipeline_mode<synchronous>, transform_indices = @transform_1, window_bounds = array<i64: 512, 1024>}, {pipeline_mode = #tpu.pipeline_mode<synchronous>, transform_indices = @transform_2, window_bounds = array<i64: 1, 1024>}, {pipeline_mode = #tpu.pipeline_mode<synchronous>, transform_indices = @transform_3, window_bounds = array<i64: 1, 1024>}, {pipeline_mode = #tpu.pipeline_mode<synchronous>, transform_indices = @transform_4, window_bounds = array<i64: 1, 1024>}, {pipeline_mode = #tpu.pipeline_mode<synchronous>, transform_indices = @transform_5, window_bounds = array<i64: 1024, 13>}, {pipeline_mode = #tpu.pipeline_mode<synchronous>, transform_indices = @transform_6, window_bounds = array<i64: 1, 13>}, {pipeline_mode = #tpu.pipeline_mode<synchronous>, transform_indices = @transform_7, window_bounds = array<i64: 4, 13>}]} {
    %c0 = arith.constant 0 : index
    %c0_0 = arith.constant 0 : index
    %0 = vector.load %arg1[%c0, %c0_0] : memref<4x512xbf16, #tpu.memory_space<vmem>>, vector<4x512xbf16>
    %c0_1 = arith.constant 0 : index
    %c0_2 = arith.constant 0 : index
    %1 = vector.load %arg2[%c0_1, %c0_2] : memref<512x1024xbf16, #tpu.memory_space<vmem>>, vector<512x1024xbf16>
    %cst = arith.constant dense<0.000000e+00> : vector<4x1024xf32>
    %2 = tpu.matmul %0, %1, %cst {dimension_numbers = #tpu.dot_dimension_numbers<[1], [0], [0], [1], [0, 0, 1, 1], [], []>} : vector<4x512xbf16>, vector<512x1024xbf16>, vector<4x1024xf32> -> vector<4x1024xf32>
    %c0_3 = arith.constant 0 : index
    %c0_4 = arith.constant 0 : index
    %3 = vector.load %arg3[%c0_3, %c0_4] : memref<1x1024xf32, #tpu.memory_space<vmem>>, vector<1x1024xf32>
    %4 = vector.broadcast %3 : vector<1x1024xf32> to vector<4x1024xf32>
    %5 = arith.addf %2, %4 : vector<4x1024xf32>
    %cst_5 = arith.constant dense<0.000000e+00> : vector<1024xf32>
    %6 = vector.multi_reduction <add>, %5, %cst_5 [0] : vector<4x1024xf32> to vector<1024xf32>
    %7 = vector.shape_cast %6 : vector<1024xf32> to vector<1x1024xf32>
    %cst_6 = arith.constant 2.500000e-01 : f32
    %8 = vector.broadcast %cst_6 : f32 to vector<1x1024xf32>
    %9 = arith.mulf %7, %8 : vector<1x1024xf32>
    %10 = vector.broadcast %9 : vector<1x1024xf32> to vector<4x1024xf32>
    %11 = arith.subf %5, %10 : vector<4x1024xf32>
    %12 = arith.mulf %11, %11 : vector<4x1024xf32>
    %cst_7 = arith.constant dense<0.000000e+00> : vector<1024xf32>
    %13 = vector.multi_reduction <add>, %12, %cst_7 [0] : vector<4x1024xf32> to vector<1024xf32>
    %14 = vector.shape_cast %13 : vector<1024xf32> to vector<1x1024xf32>
    %cst_8 = arith.constant 2.500000e-01 : f32
    %15 = vector.broadcast %cst_8 : f32 to vector<1x1024xf32>
    %16 = arith.mulf %14, %15 : vector<1x1024xf32>
    %cst_9 = arith.constant 9.99999974E-6 : f32
    %17 = vector.broadcast %cst_9 : f32 to vector<1x1024xf32>
    %18 = arith.addf %16, %17 : vector<1x1024xf32>
    %19 = math.rsqrt %18 : vector<1x1024xf32>
    %20 = vector.broadcast %19 : vector<1x1024xf32> to vector<4x1024xf32>
    %21 = arith.mulf %11, %20 : vector<4x1024xf32>
    %c0_10 = arith.constant 0 : index
    %c0_11 = arith.constant 0 : index
    %22 = vector.load %arg4[%c0_10, %c0_11] : memref<1x1024xf32, #tpu.memory_space<vmem>>, vector<1x1024xf32>
    %23 = vector.broadcast %22 : vector<1x1024xf32> to vector<4x1024xf32>
    %24 = arith.mulf %21, %23 : vector<4x1024xf32>
    %c0_12 = arith.constant 0 : index
    %c0_13 = arith.constant 0 : index
    %25 = vector.load %arg5[%c0_12, %c0_13] : memref<1x1024xf32, #tpu.memory_space<vmem>>, vector<1x1024xf32>
    %26 = vector.broadcast %25 : vector<1x1024xf32> to vector<4x1024xf32>
    %27 = arith.addf %24, %26 : vector<4x1024xf32>
    %cst_14 = arith.constant 2.000000e-01 : f32
    %28 = vector.broadcast %cst_14 : f32 to vector<4x1024xf32>
    %29 = arith.mulf %28, %27 : vector<4x1024xf32>
    %30 = arith.maximumf %27, %29 : vector<4x1024xf32>
    %c0_15 = arith.constant 0 : index
    %c0_16 = arith.constant 0 : index
    %31 = vector.load %arg6[%c0_15, %c0_16] : memref<1024x13xf32, #tpu.memory_space<vmem>>, vector<1024x13xf32>
    %cst_17 = arith.constant dense<0.000000e+00> : vector<4x13xf32>
    %32 = tpu.matmul %30, %31, %cst_17 {dimension_numbers = #tpu.dot_dimension_numbers<[1], [0], [0], [1], [0, 0, 1, 1], [], []>} : vector<4x1024xf32>, vector<1024x13xf32>, vector<4x13xf32> -> vector<4x13xf32>
    %c0_18 = arith.constant 0 : index
    %c0_19 = arith.constant 0 : index
    %33 = vector.load %arg7[%c0_18, %c0_19] : memref<1x13xf32, #tpu.memory_space<vmem>>, vector<1x13xf32>
    %34 = vector.broadcast %33 : vector<1x13xf32> to vector<4x13xf32>
    %35 = arith.addf %32, %34 : vector<4x13xf32>
    %c0_20 = arith.constant 0 : index
    %c0_21 = arith.constant 0 : index
    %36 = vector.load %arg8[%c0_20, %c0_21] : memref<4x13xf32, #tpu.memory_space<vmem>>, vector<4x13xf32>
    tpu.vector_store %arg8[%c0_20, %c0_21], %35 {strides = array<i32>} : memref<4x13xf32, #tpu.memory_space<vmem>>, vector<4x13xf32>,
    return
  }
  func.func @transform_0(%arg0: i32) -> (i32, i32) {
    %c0_i32 = arith.constant 0 : i32
    %c0_i32_0 = arith.constant 0 : i32
    %c0_i32_1 = arith.constant 0 : i32
    return %c0_i32, %c0_i32_0 : i32, i32
  }
  func.func @transform_1(%arg0: i32) -> (i32, i32) {
    %c0_i32 = arith.constant 0 : i32
    %c0_i32_0 = arith.constant 0 : i32
    %c0_i32_1 = arith.constant 0 : i32
    return %c0_i32, %c0_i32_0 : i32, i32
  }
  func.func @transform_2(%arg0: i32) -> (i32, i32) {
    %c0_i32 = arith.constant 0 : i32
    %c0_i32_0 = arith.constant 0 : i32
    %c0_i32_1 = arith.constant 0 : i32
    return %c0_i32, %c0_i32_0 : i32, i32
  }
  func.func @transform_3(%arg0: i32) -> (i32, i32) {
    %c0_i32 = arith.constant 0 : i32
    %c0_i32_0 = arith.constant 0 : i32
    %c0_i32_1 = arith.constant 0 : i32
    return %c0_i32, %c0_i32_0 : i32, i32
  }
  func.func @transform_4(%arg0: i32) -> (i32, i32) {
    %c0_i32 = arith.constant 0 : i32
    %c0_i32_0 = arith.constant 0 : i32
    %c0_i32_1 = arith.constant 0 : i32
    return %c0_i32, %c0_i32_0 : i32, i32
  }
  func.func @transform_5(%arg0: i32) -> (i32, i32) {
    %c0_i32 = arith.constant 0 : i32
    %c0_i32_0 = arith.constant 0 : i32
    %c0_i32_1 = arith.constant 0 : i32
    return %c0_i32, %c0_i32_0 : i32, i32
  }
  func.func @transform_6(%arg0: i32) -> (i32, i32) {
    %c0_i32 = arith.constant 0 : i32
    %c0_i32_0 = arith.constant 0 : i32
    %c0_i32_1 = arith.constant 0 : i32
    return %c0_i32, %c0_i32_0 : i32, i32
  }
  func.func @transform_7(%arg0: i32) -> (i32, i32) {
    %c0_i32 = arith.constant 0 : i32
    %c0_i32_0 = arith.constant 0 : i32
    %c0_i32_1 = arith.constant 0 : i32
    return %c0_i32, %c0_i32_0 : i32, i32
  }
}

</mosaic_0001>

<llo_original>
// kernel: discriminator_mwm_forward.4
$region0: #{discriminator_mwm_forward.4}
  #allocation0 [shape = 'u32[]', space=smem, size = 0x4, offset = 0x4, fixed_abs, tag = 'smem constant byte address 0x4 - core index']
  #allocation1 [shape = 'u32[72,128]{1,0:T(1,128)}', space=vmem, size = 0x9000, scoped, tag = 'internal scratch']
  #allocation2 [shape = 'f32[256,32]{1,0:T(8,128)}', space=vmem, size = 0x20000, scoped, tag = 'scratch operand']
  %s0 = inlined_call_operand.vmem [shape: bf16[256,16], index: 0, kind: input, shape index: {}]
  %s1 = inlined_call_operand.vmem [shape: bf16[16,32], index: 1, kind: input, shape index: {}]
  %s2 = inlined_call_operand.vmem [shape: f32[1,32], index: 2, kind: input, shape index: {}]
  %s3 = inlined_call_operand.vmem [shape: bf16[256,32], index: 3, kind: output, shape index: {}]
  %s4 = sld [smem:[#allocation0]]
  $region30: #{discriminator_mwm_forward.4} parent=0
    _
  %s6 = ssub.s32 1, %s4
  %s7 = scalar_select 0, %s6, %s4
  // Predicated region
  $region2: #{discriminator_mwm_forward.4} parent=0 // pred_check
    _
  $region3: #{discriminator_mwm_forward.4} parent=0 // pred_check_branch
    %9 = sbr.rel (0) target = $region5
  $region4: #{discriminator_mwm_forward.4} parent=0 // pred_region
    _
  $region5: #{discriminator_mwm_forward.4} parent=0 // pred_fallthru
    _
  // Predicated region
  $region6: #{discriminator_mwm_forward.4} parent=0 // pred_check
    _
  $region7: #{discriminator_mwm_forward.4} parent=0 // pred_check_branch
    %11 = sbr.rel (0) target = $region9
  $region8: #{discriminator_mwm_forward.4} parent=0 // pred_region
    _
  $region9: #{discriminator_mwm_forward.4} parent=0 // pred_fallthru
    _
  // Predicated region
  $region10: #{discriminator_mwm_forward.4} parent=0 // pred_check
    _
  $region11: #{discriminator_mwm_forward.4} parent=0 // pred_check_branch
    %13 = sbr.rel (0) target = $region13
  $region12: #{discriminator_mwm_forward.4} parent=0 // pred_region
    _
  $region13: #{discriminator_mwm_forward.4} parent=0 // pred_fallthru
    _
  %p15 = scmp.eq.s32.totalorder 0, 0
  // Predicated region
  $region14: #{discriminator_mwm_forward.4} parent=0 // pred_check
    %p16 = pneg %p15
  $region15: #{discriminator_mwm_forward.4} parent=0 // pred_check_branch
    %18 = sbr.rel (%p16) target = $region17
  $region16: #{discriminator_mwm_forward.4} parent=0 // pred_region
    %v19 = vld [vmem:[%s2] sm:$0x1]
    %v21 = vperm.slane %v19, 0
    %vm23 = vcmask 261120
    %24 = vst.msk [vmem:[#allocation2] sm:$0xff] %vm23, %v21
    %25 = vst.msk [vmem:[#allocation2 + $0x8] sm:$0xff] %vm23, %v21
    %26 = vst.msk [vmem:[#allocation2 + $0x10] sm:$0xff] %vm23, %v21
    %27 = vst.msk [vmem:[#allocation2 + $0x18] sm:$0xff] %vm23, %v21
    %28 = vst.msk [vmem:[#allocation2 + $0x20] sm:$0xff] %vm23, %v21
    %29 = vst.msk [vmem:[#allocation2 + $0x28] sm:$0xff] %vm23, %v21
    %30 = vst.msk [vmem:[#allocation2 + $0x30] sm:$0xff] %vm23, %v21
    %31 = vst.msk [vmem:[#allocation2 + $0x38] sm:$0xff] %vm23, %v21
    %32 = vst.msk [vmem:[#allocation2 + $0x40] sm:$0xff] %vm23, %v21
    %33 = vst.msk [vmem:[#allocation2 + $0x48] sm:$0xff] %vm23, %v21
    %34 = vst.msk [vmem:[#allocation2 + $0x50] sm:$0xff] %vm23, %v21
    %35 = vst.msk [vmem:[#allocation2 + $0x58] sm:$0xff] %vm23, %v21
    %36 = vst.msk [vmem:[#allocation2 + $0x60] sm:$0xff] %vm23, %v21
    %37 = vst.msk [vmem:[#allocation2 + $0x68] sm:$0xff] %vm23, %v21
    %38 = vst.msk [vmem:[#allocation2 + $0x70] sm:$0xff] %vm23, %v21
    %39 = vst.msk [vmem:[#allocation2 + $0x78] sm:$0xff] %vm23, %v21
    %40 = vst.msk [vmem:[#allocation2 + $0x80] sm:$0xff] %vm23, %v21
    %41 = vst.msk [vmem:[#allocation2 + $0x88] sm:$0xff] %vm23, %v21
    %42 = vst.msk [vmem:[#allocation2 + $0x90] sm:$0xff] %vm23, %v21
    %43 = vst.msk [vmem:[#allocation2 + $0x98] sm:$0xff] %vm23, %v21
    %44 = vst.msk [vmem:[#allocation2 + $0xa0] sm:$0xff] %vm23, %v21
    %45 = vst.msk [vmem:[#allocation2 + $0xa8] sm:$0xff] %vm23, %v21
    %46 = vst.msk [vmem:[#allocation2 + $0xb0] sm:$0xff] %vm23, %v21
    %47 = vst.msk [vmem:[#allocation2 + $0xb8] sm:$0xff] %vm23, %v21
    %48 = vst.msk [vmem:[#allocation2 + $0xc0] sm:$0xff] %vm23, %v21
    %49 = vst.msk [vmem:[#allocation2 + $0xc8] sm:$0xff] %vm23, %v21
    %50 = vst.msk [vmem:[#allocation2 + $0xd0] sm:$0xff] %vm23, %v21
    %51 = vst.msk [vmem:[#allocation2 + $0xd8] sm:$0xff] %vm23, %v21
    %52 = vst.msk [vmem:[#allocation2 + $0xe0] sm:$0xff] %vm23, %v21
    %53 = vst.msk [vmem:[#allocation2 + $0xe8] sm:$0xff] %vm23, %v21
    %54 = vst.msk [vmem:[#allocation2 + $0xf0] sm:$0xff] %vm23, %v21
    %55 = vst.msk [vmem:[#allocation2 + $0xf8] sm:$0xff] %vm23, %v21
  $region17: #{discriminator_mwm_forward.4} parent=0 // pred_fallthru
    _
  %v56 = vld [vmem:[#allocation2] sm:$0xff]
  %v57 = vld [vmem:[#allocation2 + $0x8] sm:$0xff]
  %v58 = vld [vmem:[#allocation2 + $0x10] sm:$0xff]
  %v59 = vld [vmem:[#allocation2 + $0x18] sm:$0xff]
  %v60 = vld [vmem:[#allocation2 + $0x20] sm:$0xff]
  %v61 = vld [vmem:[#allocation2 + $0x28] sm:$0xff]
  %v62 = vld [vmem:[#allocation2 + $0x30] sm:$0xff]
  %v63 = vld [vmem:[#allocation2 + $0x38] sm:$0xff]
  %v64 = vld [vmem:[#allocation2 + $0x40] sm:$0xff]
  %v65 = vld [vmem:[#allocation2 + $0x48] sm:$0xff]
  %v66 = vld [vmem:[#allocation2 + $0x50] sm:$0xff]
  %v67 = vld [vmem:[#allocation2 + $0x58] sm:$0xff]
  %v68 = vld [vmem:[#allocation2 + $0x60] sm:$0xff]
  %v69 = vld [vmem:[#allocation2 + $0x68] sm:$0xff]
  %v70 = vld [vmem:[#allocation2 + $0x70] sm:$0xff]
  %v71 = vld [vmem:[#allocation2 + $0x78] sm:$0xff]
  %v72 = vld [vmem:[#allocation2 + $0x80] sm:$0xff]
  %v73 = vld [vmem:[#allocation2 + $0x88] sm:$0xff]
  %v74 = vld [vmem:[#allocation2 + $0x90] sm:$0xff]
  %v75 = vld [vmem:[#allocation2 + $0x98] sm:$0xff]
  %v76 = vld [vmem:[#allocation2 + $0xa0] sm:$0xff]
  %v77 = vld [vmem:[#allocation2 + $0xa8] sm:$0xff]
  %v78 = vld [vmem:[#allocation2 + $0xb0] sm:$0xff]
  %v79 = vld [vmem:[#allocation2 + $0xb8] sm:$0xff]
  %v80 = vld [vmem:[#allocation2 + $0xc0] sm:$0xff]
  %v81 = vld [vmem:[#allocation2 + $0xc8] sm:$0xff]
  %v82 = vld [vmem:[#allocation2 + $0xd0] sm:$0xff]
  %v83 = vld [vmem:[#allocation2 + $0xd8] sm:$0xff]
  %v84 = vld [vmem:[#allocation2 + $0xe0] sm:$0xff]
  %v85 = vld [vmem:[#allocation2 + $0xe8] sm:$0xff]
  %v86 = vld [vmem:[#allocation2 + $0xf0] sm:$0xff]
  %v87 = vld [vmem:[#allocation2 + $0xf8] sm:$0xff]
  %v88 = vld [vmem:[%s0] sm:$0xf]
  %v89 = vld [vmem:[%s0 + $0x4] sm:$0xf]
  %v90 = vld [vmem:[%s0 + $0x8] sm:$0xf]
  %v91 = vld [vmem:[%s0 + $0xc] sm:$0xf]
  %v92 = vld [vmem:[%s0 + $0x10] sm:$0xf]
  %v93 = vld [vmem:[%s0 + $0x14] sm:$0xf]
  %v94 = vld [vmem:[%s0 + $0x18] sm:$0xf]
  %v95 = vld [vmem:[%s0 + $0x1c] sm:$0xf]
  %v96 = vld [vmem:[%s0 + $0x20] sm:$0xf]
  %v97 = vld [vmem:[%s0 + $0x24] sm:$0xf]
  %v98 = vld [vmem:[%s0 + $0x28] sm:$0xf]
  %v99 = vld [vmem:[%s0 + $0x2c] sm:$0xf]
  %v100 = vld [vmem:[%s0 + $0x30] sm:$0xf]
  %v101 = vld [vmem:[%s0 + $0x34] sm:$0xf]
  %v102 = vld [vmem:[%s0 + $0x38] sm:$0xf]
  %v103 = vld [vmem:[%s0 + $0x3c] sm:$0xf]
  %v104 = vld [vmem:[%s0 + $0x40] sm:$0xf]
  %v105 = vld [vmem:[%s0 + $0x44] sm:$0xf]
  %v106 = vld [vmem:[%s0 + $0x48] sm:$0xf]
  %v107 = vld [vmem:[%s0 + $0x4c] sm:$0xf]
  %v108 = vld [vmem:[%s0 + $0x50] sm:$0xf]
  %v109 = vld [vmem:[%s0 + $0x54] sm:$0xf]
  %v110 = vld [vmem:[%s0 + $0x58] sm:$0xf]
  %v111 = vld [vmem:[%s0 + $0x5c] sm:$0xf]
  %v112 = vld [vmem:[%s0 + $0x60] sm:$0xf]
  %v113 = vld [vmem:[%s0 + $0x64] sm:$0xf]
  %v114 = vld [vmem:[%s0 + $0x68] sm:$0xf]
  %v115 = vld [vmem:[%s0 + $0x6c] sm:$0xf]
  %v116 = vld [vmem:[%s0 + $0x70] sm:$0xf]
  %v117 = vld [vmem:[%s0 + $0x74] sm:$0xf]
  %v118 = vld [vmem:[%s0 + $0x78] sm:$0xf]
  %v119 = vld [vmem:[%s0 + $0x7c] sm:$0xf]
  %v120 = vld [vmem:[%s1] sm:$0xf]
  %v121 = vld [vmem:[%s1 + $0x4] sm:$0xf]
  %v154 = vunpack.c.l.b16 %v88
  %v155 = vunpack.c.l.b16 %v89
  %v156 = vunpack.c.l.b16 %v90
  %v157 = vunpack.c.l.b16 %v91
  %v158 = vunpack.c.l.b16 %v92
  %v159 = vunpack.c.l.b16 %v93
  %v160 = vunpack.c.l.b16 %v94
  %v161 = vunpack.c.l.b16 %v95
  %v162 = vunpack.c.l.b16 %v96
  %v163 = vunpack.c.l.b16 %v97
  %v164 = vunpack.c.l.b16 %v98
  %v165 = vunpack.c.l.b16 %v99
  %v166 = vunpack.c.l.b16 %v100
  %v167 = vunpack.c.l.b16 %v101
  %v168 = vunpack.c.l.b16 %v102
  %v169 = vunpack.c.l.b16 %v103
  %v170 = vunpack.c.l.b16 %v104
  %v171 = vunpack.c.l.b16 %v105
  %v172 = vunpack.c.l.b16 %v106
  %v173 = vunpack.c.l.b16 %v107
  %v174 = vunpack.c.l.b16 %v108
  %v175 = vunpack.c.l.b16 %v109
  %v176 = vunpack.c.l.b16 %v110
  %v177 = vunpack.c.l.b16 %v111
  %v178 = vunpack.c.l.b16 %v112
  %v179 = vunpack.c.l.b16 %v113
  %v180 = vunpack.c.l.b16 %v114
  %v181 = vunpack.c.l.b16 %v115
  %v182 = vunpack.c.l.b16 %v116
  %v183 = vunpack.c.l.b16 %v117
  %v184 = vunpack.c.l.b16 %v118
  %v185 = vunpack.c.l.b16 %v119
  %v186 = vpack.c.b16 %v155, %v154
  %v187 = vpack.c.b16 %v157, %v156
  %v188 = vpack.c.b16 %v159, %v158
  %v189 = vpack.c.b16 %v161, %v160
  %v190 = vpack.c.b16 %v163, %v162
  %v191 = vpack.c.b16 %v165, %v164
  %v192 = vpack.c.b16 %v167, %v166
  %v193 = vpack.c.b16 %v169, %v168
  %v194 = vpack.c.b16 %v171, %v170
  %v195 = vpack.c.b16 %v173, %v172
  %v196 = vpack.c.b16 %v175, %v174
  %v197 = vpack.c.b16 %v177, %v176
  %v198 = vpack.c.b16 %v179, %v178
  %v199 = vpack.c.b16 %v181, %v180
  %v200 = vpack.c.b16 %v183, %v182
  %v201 = vpack.c.b16 %v185, %v184
  %v204 = vunpack.c.l.b16 %v120
  %v205 = vunpack.c.l.b16 %v121
  %v206 = vpack.c.b16 %v205, %v204
  %vm208 = vcmask 130048
  %v210 = vsel %vm208, %v186, 0
  %v213 = vsel %vm208, %v187, 0
  %v216 = vsel %vm208, %v188, 0
  %v219 = vsel %vm208, %v189, 0
  %v222 = vsel %vm208, %v190, 0
  %v225 = vsel %vm208, %v191, 0
  %v228 = vsel %vm208, %v192, 0
  %v231 = vsel %vm208, %v193, 0
  %v234 = vsel %vm208, %v194, 0
  %v237 = vsel %vm208, %v195, 0
  %v240 = vsel %vm208, %v196, 0
  %v243 = vsel %vm208, %v197, 0
  %v246 = vsel %vm208, %v198, 0
  %v249 = vsel %vm208, %v199, 0
  %v252 = vsel %vm208, %v200, 0
  %v255 = vsel %vm208, %v201, 0
  %257 = vmatpush.bf16.msra.mxu0 0
  %258 = vmatpush.bf16.msra.mxu0 0
  %259 = vmatpush.bf16.msra.mxu0 0
  %260 = vmatpush.bf16.msra.mxu0 0
  %261 = vmatpush.bf16.msra.mxu0 0
  %262 = vmatpush.bf16.msra.mxu0 0
  %263 = vmatpush.bf16.msra.mxu0 0
  %264 = vmatpush.bf16.msra.mxu0 %v206
  %265 = vmatmul.bf16.gmra.mxu0 %v210
  %v266 = vpop.f32.mrf.mxu0
  %v267 = vadd.f32 0.0, %v266
  %v268 = vpop.f32.mrf.mxu0
  %v269 = vadd.f32 0.0, %v268
  %270 = vmatmul.bf16.gmra.mxu0 %v213
  %v271 = vpop.f32.mrf.mxu0
  %v272 = vadd.f32 0.0, %v271
  %v273 = vpop.f32.mrf.mxu0
  %v274 = vadd.f32 0.0, %v273
  %275 = vmatmul.bf16.gmra.mxu0 %v216
  %v276 = vpop.f32.mrf.mxu0
  %v277 = vadd.f32 0.0, %v276
  %v278 = vpop.f32.mrf.mxu0
  %v279 = vadd.f32 0.0, %v278
  %280 = vmatmul.bf16.gmra.mxu0 %v219
  %v281 = vpop.f32.mrf.mxu0
  %v282 = vadd.f32 0.0, %v281
  %v283 = vpop.f32.mrf.mxu0
  %v284 = vadd.f32 0.0, %v283
  %285 = vmatmul.bf16.gmra.mxu0 %v222
  %v286 = vpop.f32.mrf.mxu0
  %v287 = vadd.f32 0.0, %v286
  %v288 = vpop.f32.mrf.mxu0
  %v289 = vadd.f32 0.0, %v288
  %290 = vmatmul.bf16.gmra.mxu0 %v225
  %v291 = vpop.f32.mrf.mxu0
  %v292 = vadd.f32 0.0, %v291
  %v293 = vpop.f32.mrf.mxu0
  %v294 = vadd.f32 0.0, %v293
  %295 = vmatmul.bf16.gmra.mxu0 %v228
  %v296 = vpop.f32.mrf.mxu0
  %v297 = vadd.f32 0.0, %v296
  %v298 = vpop.f32.mrf.mxu0
  %v299 = vadd.f32 0.0, %v298
  %300 = vmatmul.bf16.gmra.mxu0 %v231
  %v301 = vpop.f32.mrf.mxu0
  %v302 = vadd.f32 0.0, %v301
  %v303 = vpop.f32.mrf.mxu0
  %v304 = vadd.f32 0.0, %v303
  %305 = vmatmul.bf16.gmra.mxu0 %v234
  %v306 = vpop.f32.mrf.mxu0
  %v307 = vadd.f32 0.0, %v306
  %v308 = vpop.f32.mrf.mxu0
  %v309 = vadd.f32 0.0, %v308
  %310 = vmatmul.bf16.gmra.mxu0 %v237
  %v311 = vpop.f32.mrf.mxu0
  %v312 = vadd.f32 0.0, %v311
  %v313 = vpop.f32.mrf.mxu0
  %v314 = vadd.f32 0.0, %v313
  %315 = vmatmul.bf16.gmra.mxu0 %v240
  %v316 = vpop.f32.mrf.mxu0
  %v317 = vadd.f32 0.0, %v316
  %v318 = vpop.f32.mrf.mxu0
  %v319 = vadd.f32 0.0, %v318
  %320 = vmatmul.bf16.gmra.mxu0 %v243
  %v321 = vpop.f32.mrf.mxu0
  %v322 = vadd.f32 0.0, %v321
  %v323 = vpop.f32.mrf.mxu0
  %v324 = vadd.f32 0.0, %v323
  %325 = vmatmul.bf16.gmra.mxu0 %v246
  %v326 = vpop.f32.mrf.mxu0
  %v327 = vadd.f32 0.0, %v326
  %v328 = vpop.f32.mrf.mxu0
  %v329 = vadd.f32 0.0, %v328
  %330 = vmatmul.bf16.gmra.mxu0 %v249
  %v331 = vpop.f32.mrf.mxu0
  %v332 = vadd.f32 0.0, %v331
  %v333 = vpop.f32.mrf.mxu0
  %v334 = vadd.f32 0.0, %v333
  %335 = vmatmul.bf16.gmra.mxu0 %v252
  %v336 = vpop.f32.mrf.mxu0
  %v337 = vadd.f32 0.0, %v336
  %v338 = vpop.f32.mrf.mxu0
  %v339 = vadd.f32 0.0, %v338
  %340 = vmatmul.bf16.gmra.mxu0 %v255
  %v341 = vpop.f32.mrf.mxu0
  %v342 = vadd.f32 0.0, %v341
  %v343 = vpop.f32.mrf.mxu0
  %v344 = vadd.f32 0.0, %v343
  %345 = vdwg.mxu0
  %v346 = vadd.f32 %v56, %v267
  %v347 = vadd.f32 %v57, %v269
  %v348 = vadd.f32 %v58, %v272
  %v349 = vadd.f32 %v59, %v274
  %v350 = vadd.f32 %v60, %v277
  %v351 = vadd.f32 %v61, %v279
  %v352 = vadd.f32 %v62, %v282
  %v353 = vadd.f32 %v63, %v284
  %v354 = vadd.f32 %v64, %v287
  %v355 = vadd.f32 %v65, %v289
  %v356 = vadd.f32 %v66, %v292
  %v357 = vadd.f32 %v67, %v294
  %v358 = vadd.f32 %v68, %v297
  %v359 = vadd.f32 %v69, %v299
  %v360 = vadd.f32 %v70, %v302
  %v361 = vadd.f32 %v71, %v304
  %v362 = vadd.f32 %v72, %v307
  %v363 = vadd.f32 %v73, %v309
  %v364 = vadd.f32 %v74, %v312
  %v365 = vadd.f32 %v75, %v314
  %v366 = vadd.f32 %v76, %v317
  %v367 = vadd.f32 %v77, %v319
  %v368 = vadd.f32 %v78, %v322
  %v369 = vadd.f32 %v79, %v324
  %v370 = vadd.f32 %v80, %v327
  %v371 = vadd.f32 %v81, %v329
  %v372 = vadd.f32 %v82, %v332
  %v373 = vadd.f32 %v83, %v334
  %v374 = vadd.f32 %v84, %v337
  %v375 = vadd.f32 %v85, %v339
  %v376 = vadd.f32 %v86, %v342
  %v377 = vadd.f32 %v87, %v344
  %vm378 = vcmask 261120
  %379 = vst.msk [vmem:[#allocation2] sm:$0xff] %vm378, %v346
  %380 = vst.msk [vmem:[#allocation2 + $0x8] sm:$0xff] %vm378, %v347
  %381 = vst.msk [vmem:[#allocation2 + $0x10] sm:$0xff] %vm378, %v348
  %382 = vst.msk [vmem:[#allocation2 + $0x18] sm:$0xff] %vm378, %v349
  %383 = vst.msk [vmem:[#allocation2 + $0x20] sm:$0xff] %vm378, %v350
  %384 = vst.msk [vmem:[#allocation2 + $0x28] sm:$0xff] %vm378, %v351
  %385 = vst.msk [vmem:[#allocation2 + $0x30] sm:$0xff] %vm378, %v352
  %386 = vst.msk [vmem:[#allocation2 + $0x38] sm:$0xff] %vm378, %v353
  %387 = vst.msk [vmem:[#allocation2 + $0x40] sm:$0xff] %vm378, %v354
  %388 = vst.msk [vmem:[#allocation2 + $0x48] sm:$0xff] %vm378, %v355
  %389 = vst.msk [vmem:[#allocation2 + $0x50] sm:$0xff] %vm378, %v356
  %390 = vst.msk [vmem:[#allocation2 + $0x58] sm:$0xff] %vm378, %v357
  %391 = vst.msk [vmem:[#allocation2 + $0x60] sm:$0xff] %vm378, %v358
  %392 = vst.msk [vmem:[#allocation2 + $0x68] sm:$0xff] %vm378, %v359
  %393 = vst.msk [vmem:[#allocation2 + $0x70] sm:$0xff] %vm378, %v360
  %394 = vst.msk [vmem:[#allocation2 + $0x78] sm:$0xff] %vm378, %v361
  %395 = vst.msk [vmem:[#allocation2 + $0x80] sm:$0xff] %vm378, %v362
  %396 = vst.msk [vmem:[#allocation2 + $0x88] sm:$0xff] %vm378, %v363
  %397 = vst.msk [vmem:[#allocation2 + $0x90] sm:$0xff] %vm378, %v364
  %398 = vst.msk [vmem:[#allocation2 + $0x98] sm:$0xff] %vm378, %v365
  %399 = vst.msk [vmem:[#allocation2 + $0xa0] sm:$0xff] %vm378, %v366
  %400 = vst.msk [vmem:[#allocation2 + $0xa8] sm:$0xff] %vm378, %v367
  %401 = vst.msk [vmem:[#allocation2 + $0xb0] sm:$0xff] %vm378, %v368
  %402 = vst.msk [vmem:[#allocation2 + $0xb8] sm:$0xff] %vm378, %v369
  %403 = vst.msk [vmem:[#allocation2 + $0xc0] sm:$0xff] %vm378, %v370
  %404 = vst.msk [vmem:[#allocation2 + $0xc8] sm:$0xff] %vm378, %v371
  %405 = vst.msk [vmem:[#allocation2 + $0xd0] sm:$0xff] %vm378, %v372
  %406 = vst.msk [vmem:[#allocation2 + $0xd8] sm:$0xff] %vm378, %v373
  %407 = vst.msk [vmem:[#allocation2 + $0xe0] sm:$0xff] %vm378, %v374
  %408 = vst.msk [vmem:[#allocation2 + $0xe8] sm:$0xff] %vm378, %v375
  %409 = vst.msk [vmem:[#allocation2 + $0xf0] sm:$0xff] %vm378, %v376
  %410 = vst.msk [vmem:[#allocation2 + $0xf8] sm:$0xff] %vm378, %v377
  // Predicated region
  $region18: #{discriminator_mwm_forward.4} parent=0 // pred_check
    %p411 = pneg %p15
  $region19: #{discriminator_mwm_forward.4} parent=0 // pred_check_branch
    %413 = sbr.rel (%p411) target = $region21
  $region20: #{discriminator_mwm_forward.4} parent=0 // pred_region
    %v414 = vld [vmem:[#allocation2] sm:$0xff]
    %v415 = vld [vmem:[#allocation2 + $0x8] sm:$0xff]
    %v416 = vld [vmem:[#allocation2 + $0x10] sm:$0xff]
    %v417 = vld [vmem:[#allocation2 + $0x18] sm:$0xff]
    %v418 = vld [vmem:[#allocation2 + $0x20] sm:$0xff]
    %v419 = vld [vmem:[#allocation2 + $0x28] sm:$0xff]
    %v420 = vld [vmem:[#allocation2 + $0x30] sm:$0xff]
    %v421 = vld [vmem:[#allocation2 + $0x38] sm:$0xff]
    %v422 = vld [vmem:[#allocation2 + $0x40] sm:$0xff]
    %v423 = vld [vmem:[#allocation2 + $0x48] sm:$0xff]
    %v424 = vld [vmem:[#allocation2 + $0x50] sm:$0xff]
    %v425 = vld [vmem:[#allocation2 + $0x58] sm:$0xff]
    %v426 = vld [vmem:[#allocation2 + $0x60] sm:$0xff]
    %v427 = vld [vmem:[#allocation2 + $0x68] sm:$0xff]
    %v428 = vld [vmem:[#allocation2 + $0x70] sm:$0xff]
    %v429 = vld [vmem:[#allocation2 + $0x78] sm:$0xff]
    %v430 = vld [vmem:[#allocation2 + $0x80] sm:$0xff]
    %v431 = vld [vmem:[#allocation2 + $0x88] sm:$0xff]
    %v432 = vld [vmem:[#allocation2 + $0x90] sm:$0xff]
    %v433 = vld [vmem:[#allocation2 + $0x98] sm:$0xff]
    %v434 = vld [vmem:[#allocation2 + $0xa0] sm:$0xff]
    %v435 = vld [vmem:[#allocation2 + $0xa8] sm:$0xff]
    %v436 = vld [vmem:[#allocation2 + $0xb0] sm:$0xff]
    %v437 = vld [vmem:[#allocation2 + $0xb8] sm:$0xff]
    %v438 = vld [vmem:[#allocation2 + $0xc0] sm:$0xff]
    %v439 = vld [vmem:[#allocation2 + $0xc8] sm:$0xff]
    %v440 = vld [vmem:[#allocation2 + $0xd0] sm:$0xff]
    %v441 = vld [vmem:[#allocation2 + $0xd8] sm:$0xff]
    %v442 = vld [vmem:[#allocation2 + $0xe0] sm:$0xff]
    %v443 = vld [vmem:[#allocation2 + $0xe8] sm:$0xff]
    %v444 = vld [vmem:[#allocation2 + $0xf0] sm:$0xff]
    %v445 = vld [vmem:[#allocation2 + $0xf8] sm:$0xff]
    %v446 = vmul.f32 %v414, 0.2
    %v447 = vmul.f32 %v415, 0.2
    %v448 = vmul.f32 %v416, 0.2
    %v449 = vmul.f32 %v417, 0.2
    %v450 = vmul.f32 %v418, 0.2
    %v451 = vmul.f32 %v419, 0.2
    %v452 = vmul.f32 %v420, 0.2
    %v453 = vmul.f32 %v421, 0.2
    %v454 = vmul.f32 %v422, 0.2
    %v455 = vmul.f32 %v423, 0.2
    %v456 = vmul.f32 %v424, 0.2
    %v457 = vmul.f32 %v425, 0.2
    %v458 = vmul.f32 %v426, 0.2
    %v459 = vmul.f32 %v427, 0.2
    %v460 = vmul.f32 %v428, 0.2
    %v461 = vmul.f32 %v429, 0.2
    %v462 = vmul.f32 %v430, 0.2
    %v463 = vmul.f32 %v431, 0.2
    %v464 = vmul.f32 %v432, 0.2
    %v465 = vmul.f32 %v433, 0.2
    %v466 = vmul.f32 %v434, 0.2
    %v467 = vmul.f32 %v435, 0.2
    %v468 = vmul.f32 %v436, 0.2
    %v469 = vmul.f32 %v437, 0.2
    %v470 = vmul.f32 %v438, 0.2
    %v471 = vmul.f32 %v439, 0.2
    %v472 = vmul.f32 %v440, 0.2
    %v473 = vmul.f32 %v441, 0.2
    %v474 = vmul.f32 %v442, 0.2
    %v475 = vmul.f32 %v443, 0.2
    %v476 = vmul.f32 %v444, 0.2
    %v477 = vmul.f32 %v445, 0.2
    %v478 = vmax.f32 %v414, %v446
    %v479 = vmax.f32 %v415, %v447
    %v480 = vmax.f32 %v416, %v448
    %v481 = vmax.f32 %v417, %v449
    %v482 = vmax.f32 %v418, %v450
    %v483 = vmax.f32 %v419, %v451
    %v484 = vmax.f32 %v420, %v452
    %v485 = vmax.f32 %v421, %v453
    %v486 = vmax.f32 %v422, %v454
    %v487 = vmax.f32 %v423, %v455
    %v488 = vmax.f32 %v424, %v456
    %v489 = vmax.f32 %v425, %v457
    %v490 = vmax.f32 %v426, %v458
    %v491 = vmax.f32 %v427, %v459
    %v492 = vmax.f32 %v428, %v460
    %v493 = vmax.f32 %v429, %v461
    %v494 = vmax.f32 %v430, %v462
    %v495 = vmax.f32 %v431, %v463
    %v496 = vmax.f32 %v432, %v464
    %v497 = vmax.f32 %v433, %v465
    %v498 = vmax.f32 %v434, %v466
    %v499 = vmax.f32 %v435, %v467
    %v500 = vmax.f32 %v436, %v468
    %v501 = vmax.f32 %v437, %v469
    %v502 = vmax.f32 %v438, %v470
    %v503 = vmax.f32 %v439, %v471
    %v504 = vmax.f32 %v440, %v472
    %v505 = vmax.f32 %v441, %v473
    %v506 = vmax.f32 %v442, %v474
    %v507 = vmax.f32 %v443, %v475
    %v508 = vmax.f32 %v444, %v476
    %v509 = vmax.f32 %v445, %v477
    %v510 = vpack.c.bf16 %v478, %v478
    %v511 = vpack.c.bf16 %v479, %v479
    %v512 = vpack.c.bf16 %v480, %v480
    %v513 = vpack.c.bf16 %v481, %v481
    %v514 = vpack.c.bf16 %v482, %v482
    %v515 = vpack.c.bf16 %v483, %v483
    %v516 = vpack.c.bf16 %v484, %v484
    %v517 = vpack.c.bf16 %v485, %v485
    %v518 = vpack.c.bf16 %v486, %v486
    %v519 = vpack.c.bf16 %v487, %v487
    %v520 = vpack.c.bf16 %v488, %v488
    %v521 = vpack.c.bf16 %v489, %v489
    %v522 = vpack.c.bf16 %v490, %v490
    %v523 = vpack.c.bf16 %v491, %v491
    %v524 = vpack.c.bf16 %v492, %v492
    %v525 = vpack.c.bf16 %v493, %v493
    %v526 = vpack.c.bf16 %v494, %v494
    %v527 = vpack.c.bf16 %v495, %v495
    %v528 = vpack.c.bf16 %v496, %v496
    %v529 = vpack.c.bf16 %v497, %v497
    %v530 = vpack.c.bf16 %v498, %v498
    %v531 = vpack.c.bf16 %v499, %v499
    %v532 = vpack.c.bf16 %v500, %v500
    %v533 = vpack.c.bf16 %v501, %v501
    %v534 = vpack.c.bf16 %v502, %v502
    %v535 = vpack.c.bf16 %v503, %v503
    %v536 = vpack.c.bf16 %v504, %v504
    %v537 = vpack.c.bf16 %v505, %v505
    %v538 = vpack.c.bf16 %v506, %v506
    %v539 = vpack.c.bf16 %v507, %v507
    %v540 = vpack.c.bf16 %v508, %v508
    %v541 = vpack.c.bf16 %v509, %v509
    %vm542 = vcmask 257024
    %543 = vst.msk [vmem:[%s3] sm:$0xf] %vm542, %v510
    %544 = vst.msk [vmem:[%s3 + $0x4] sm:$0xf] %vm542, %v511
    %545 = vst.msk [vmem:[%s3 + $0x8] sm:$0xf] %vm542, %v512
    %546 = vst.msk [vmem:[%s3 + $0xc] sm:$0xf] %vm542, %v513
    %547 = vst.msk [vmem:[%s3 + $0x10] sm:$0xf] %vm542, %v514
    %548 = vst.msk [vmem:[%s3 + $0x14] sm:$0xf] %vm542, %v515
    %549 = vst.msk [vmem:[%s3 + $0x18] sm:$0xf] %vm542, %v516
    %550 = vst.msk [vmem:[%s3 + $0x1c] sm:$0xf] %vm542, %v517
    %551 = vst.msk [vmem:[%s3 + $0x20] sm:$0xf] %vm542, %v518
    %552 = vst.msk [vmem:[%s3 + $0x24] sm:$0xf] %vm542, %v519
    %553 = vst.msk [vmem:[%s3 + $0x28] sm:$0xf] %vm542, %v520
    %554 = vst.msk [vmem:[%s3 + $0x2c] sm:$0xf] %vm542, %v521
    %555 = vst.msk [vmem:[%s3 + $0x30] sm:$0xf] %vm542, %v522
    %556 = vst.msk [vmem:[%s3 + $0x34] sm:$0xf] %vm542, %v523
    %557 = vst.msk [vmem:[%s3 + $0x38] sm:$0xf] %vm542, %v524
    %558 = vst.msk [vmem:[%s3 + $0x3c] sm:$0xf] %vm542, %v525
    %559 = vst.msk [vmem:[%s3 + $0x40] sm:$0xf] %vm542, %v526
    %560 = vst.msk [vmem:[%s3 + $0x44] sm:$0xf] %vm542, %v527
    %561 = vst.msk [vmem:[%s3 + $0x48] sm:$0xf] %vm542, %v528
    %562 = vst.msk [vmem:[%s3 + $0x4c] sm:$0xf] %vm542, %v529
    %563 = vst.msk [vmem:[%s3 + $0x50] sm:$0xf] %vm542, %v530
    %564 = vst.msk [vmem:[%s3 + $0x54] sm:$0xf] %vm542, %v531
    %565 = vst.msk [vmem:[%s3 + $0x58] sm:$0xf] %vm542, %v532
    %566 = vst.msk [vmem:[%s3 + $0x5c] sm:$0xf] %vm542, %v533
    %567 = vst.msk [vmem:[%s3 + $0x60] sm:$0xf] %vm542, %v534
    %568 = vst.msk [vmem:[%s3 + $0x64] sm:$0xf] %vm542, %v535
    %569 = vst.msk [vmem:[%s3 + $0x68] sm:$0xf] %vm542, %v536
    %570 = vst.msk [vmem:[%s3 + $0x6c] sm:$0xf] %vm542, %v537
    %571 = vst.msk [vmem:[%s3 + $0x70] sm:$0xf] %vm542, %v538
    %572 = vst.msk [vmem:[%s3 + $0x74] sm:$0xf] %vm542, %v539
    %573 = vst.msk [vmem:[%s3 + $0x78] sm:$0xf] %vm542, %v540
    %574 = vst.msk [vmem:[%s3 + $0x7c] sm:$0xf] %vm542, %v541
  $region21: #{discriminator_mwm_forward.4} parent=0 // pred_fallthru
    _
  // Predicated region
  $region22: #{discriminator_mwm_forward.4} parent=0 // pred_check
    _
  $region23: #{discriminator_mwm_forward.4} parent=0 // pred_check_branch
    %576 = sbr.rel (0) target = $region25
  $region24: #{discriminator_mwm_forward.4} parent=0 // pred_region
    _
  $region25: #{discriminator_mwm_forward.4} parent=0 // pred_fallthru
    _
  // Predicated region
  $region26: #{discriminator_mwm_forward.4} parent=0 // pred_check
    _
  $region27: #{discriminator_mwm_forward.4} parent=0 // pred_check_branch
    %578 = sbr.rel (0) target = $region29
  $region28: #{discriminator_mwm_forward.4} parent=0 // pred_region
    _
  $region29: #{discriminator_mwm_forward.4} parent=0 // pred_fallthru
    _

// kernel: discriminator_mwm_forward.5
$region0: #{discriminator_mwm_forward.5}
  #allocation0 [shape = 'u32[]', space=smem, size = 0x4, offset = 0x4, fixed_abs, tag = 'smem constant byte address 0x4 - core index']
  #allocation1 [shape = 'u32[72,128]{1,0:T(1,128)}', space=vmem, size = 0x9000, scoped, tag = 'internal scratch']
  #allocation2 [shape = 'f32[64,64]{1,0:T(8,128)}', space=vmem, size = 0x8000, scoped, tag = 'scratch operand']
  %s0 = inlined_call_operand.vmem [shape: bf16[64,512], index: 0, kind: input, shape index: {}]
  %s1 = inlined_call_operand.vmem [shape: bf16[512,64], index: 1, kind: input, shape index: {}]
  %s2 = inlined_call_operand.vmem [shape: f32[1,64], index: 2, kind: input, shape index: {}]
  %s3 = inlined_call_operand.vmem [shape: bf16[64,64], index: 3, kind: output, shape index: {}]
  %s4 = sld [smem:[#allocation0]]
  $region30: #{discriminator_mwm_forward.5} parent=0
    _
  %s6 = ssub.s32 1, %s4
  %s7 = scalar_select 0, %s6, %s4
  // Predicated region
  $region2: #{discriminator_mwm_forward.5} parent=0 // pred_check
    _
  $region3: #{discriminator_mwm_forward.5} parent=0 // pred_check_branch
    %9 = sbr.rel (0) target = $region5
  $region4: #{discriminator_mwm_forward.5} parent=0 // pred_region
    _
  $region5: #{discriminator_mwm_forward.5} parent=0 // pred_fallthru
    _
  // Predicated region
  $region6: #{discriminator_mwm_forward.5} parent=0 // pred_check
    _
  $region7: #{discriminator_mwm_forward.5} parent=0 // pred_check_branch
    %11 = sbr.rel (0) target = $region9
  $region8: #{discriminator_mwm_forward.5} parent=0 // pred_region
    _
  $region9: #{discriminator_mwm_forward.5} parent=0 // pred_fallthru
    _
  // Predicated region
  $region10: #{discriminator_mwm_forward.5} parent=0 // pred_check
    _
  $region11: #{discriminator_mwm_forward.5} parent=0 // pred_check_branch
    %13 = sbr.rel (0) target = $region13
  $region12: #{discriminator_mwm_forward.5} parent=0 // pred_region
    _
  $region13: #{discriminator_mwm_forward.5} parent=0 // pred_fallthru
    _
  %p14 = scmp.eq.s32.totalorder 0, 0
  // Predicated region
  $region14: #{discriminator_mwm_forward.5} parent=0 // pred_check
    %p15 = pneg %p14
  $region15: #{discriminator_mwm_forward.5} parent=0 // pred_check_branch
    %17 = sbr.rel (%p15) target = $region17
  $region16: #{discriminator_mwm_forward.5} parent=0 // pred_region
    %v18 = vld [vmem:[%s2] sm:$0x1]
    %v20 = vperm.slane %v18, 0
    %vm22 = vcmask 523264
    %23 = vst.msk [vmem:[#allocation2] sm:$0xff] %vm22, %v20
    %24 = vst.msk [vmem:[#allocation2 + $0x8] sm:$0xff] %vm22, %v20
    %25 = vst.msk [vmem:[#allocation2 + $0x10] sm:$0xff] %vm22, %v20
    %26 = vst.msk [vmem:[#allocation2 + $0x18] sm:$0xff] %vm22, %v20
    %27 = vst.msk [vmem:[#allocation2 + $0x20] sm:$0xff] %vm22, %v20
    %28 = vst.msk [vmem:[#allocation2 + $0x28] sm:$0xff] %vm22, %v20
    %29 = vst.msk [vmem:[#allocation2 + $0x30] sm:$0xff] %vm22, %v20
    %30 = vst.msk [vmem:[#allocation2 + $0x38] sm:$0xff] %vm22, %v20
  $region17: #{discriminator_mwm_forward.5} parent=0 // pred_fallthru
    _
  %v31 = vld [vmem:[#allocation2] sm:$0xff]
  %v32 = vld [vmem:[#allocation2 + $0x8] sm:$0xff]
  %v33 = vld [vmem:[#allocation2 + $0x10] sm:$0xff]
  %v34 = vld [vmem:[#allocation2 + $0x18] sm:$0xff]
  %v35 = vld [vmem:[#allocation2 + $0x20] sm:$0xff]
  %v36 = vld [vmem:[#allocation2 + $0x28] sm:$0xff]
  %v37 = vld [vmem:[#allocation2 + $0x30] sm:$0xff]
  %v38 = vld [vmem:[#allocation2 + $0x38] sm:$0xff]
  %v39 = vld [vmem:[%s0] sm:$0xff]
  %v40 = vld [vmem:[%s0 + $0x8] sm:$0xff]
  %v41 = vld [vmem:[%s0 + $0x10] sm:$0xff]
  %v42 = vld [vmem:[%s0 + $0x18] sm:$0xff]
  %v43 = vld [vmem:[%s0 + $0x20] sm:$0xff]
  %v44 = vld [vmem:[%s0 + $0x28] sm:$0xff]
  %v45 = vld [vmem:[%s0 + $0x30] sm:$0xff]
  %v46 = vld [vmem:[%s0 + $0x38] sm:$0xff]
  %v47 = vld [vmem:[%s0 + $0x40] sm:$0xff]
  %v48 = vld [vmem:[%s0 + $0x48] sm:$0xff]
  %v49 = vld [vmem:[%s0 + $0x50] sm:$0xff]
  %v50 = vld [vmem:[%s0 + $0x58] sm:$0xff]
  %v51 = vld [vmem:[%s0 + $0x60] sm:$0xff]
  %v52 = vld [vmem:[%s0 + $0x68] sm:$0xff]
  %v53 = vld [vmem:[%s0 + $0x70] sm:$0xff]
  %v54 = vld [vmem:[%s0 + $0x78] sm:$0xff]
  %v55 = vld [vmem:[%s1] sm:$0xf]
  %v56 = vld [vmem:[%s1 + $0x4] sm:$0xf]
  %v57 = vld [vmem:[%s1 + $0x8] sm:$0xf]
  %v58 = vld [vmem:[%s1 + $0xc] sm:$0xf]
  %v59 = vld [vmem:[%s1 + $0x10] sm:$0xf]
  %v60 = vld [vmem:[%s1 + $0x14] sm:$0xf]
  %v61 = vld [vmem:[%s1 + $0x18] sm:$0xf]
  %v62 = vld [vmem:[%s1 + $0x1c] sm:$0xf]
  %v63 = vld [vmem:[%s1 + $0x20] sm:$0xf]
  %v64 = vld [vmem:[%s1 + $0x24] sm:$0xf]
  %v65 = vld [vmem:[%s1 + $0x28] sm:$0xf]
  %v66 = vld [vmem:[%s1 + $0x2c] sm:$0xf]
  %v67 = vld [vmem:[%s1 + $0x30] sm:$0xf]
  %v68 = vld [vmem:[%s1 + $0x34] sm:$0xf]
  %v69 = vld [vmem:[%s1 + $0x38] sm:$0xf]
  %v70 = vld [vmem:[%s1 + $0x3c] sm:$0xf]
  %v71 = vld [vmem:[%s1 + $0x40] sm:$0xf]
  %v72 = vld [vmem:[%s1 + $0x44] sm:$0xf]
  %v73 = vld [vmem:[%s1 + $0x48] sm:$0xf]
  %v74 = vld [vmem:[%s1 + $0x4c] sm:$0xf]
  %v75 = vld [vmem:[%s1 + $0x50] sm:$0xf]
  %v76 = vld [vmem:[%s1 + $0x54] sm:$0xf]
  %v77 = vld [vmem:[%s1 + $0x58] sm:$0xf]
  %v78 = vld [vmem:[%s1 + $0x5c] sm:$0xf]
  %v79 = vld [vmem:[%s1 + $0x60] sm:$0xf]
  %v80 = vld [vmem:[%s1 + $0x64] sm:$0xf]
  %v81 = vld [vmem:[%s1 + $0x68] sm:$0xf]
  %v82 = vld [vmem:[%s1 + $0x6c] sm:$0xf]
  %v83 = vld [vmem:[%s1 + $0x70] sm:$0xf]
  %v84 = vld [vmem:[%s1 + $0x74] sm:$0xf]
  %v85 = vld [vmem:[%s1 + $0x78] sm:$0xf]
  %v86 = vld [vmem:[%s1 + $0x7c] sm:$0xf]
  %v87 = vld [vmem:[%s1 + $0x80] sm:$0xf]
  %v88 = vld [vmem:[%s1 + $0x84] sm:$0xf]
  %v89 = vld [vmem:[%s1 + $0x88] sm:$0xf]
  %v90 = vld [vmem:[%s1 + $0x8c] sm:$0xf]
  %v91 = vld [vmem:[%s1 + $0x90] sm:$0xf]
  %v92 = vld [vmem:[%s1 + $0x94] sm:$0xf]
  %v93 = vld [vmem:[%s1 + $0x98] sm:$0xf]
  %v94 = vld [vmem:[%s1 + $0x9c] sm:$0xf]
  %v95 = vld [vmem:[%s1 + $0xa0] sm:$0xf]
  %v96 = vld [vmem:[%s1 + $0xa4] sm:$0xf]
  %v97 = vld [vmem:[%s1 + $0xa8] sm:$0xf]
  %v98 = vld [vmem:[%s1 + $0xac] sm:$0xf]
  %v99 = vld [vmem:[%s1 + $0xb0] sm:$0xf]
  %v100 = vld [vmem:[%s1 + $0xb4] sm:$0xf]
  %v101 = vld [vmem:[%s1 + $0xb8] sm:$0xf]
  %v102 = vld [vmem:[%s1 + $0xbc] sm:$0xf]
  %v103 = vld [vmem:[%s1 + $0xc0] sm:$0xf]
  %v104 = vld [vmem:[%s1 + $0xc4] sm:$0xf]
  %v105 = vld [vmem:[%s1 + $0xc8] sm:$0xf]
  %v106 = vld [vmem:[%s1 + $0xcc] sm:$0xf]
  %v107 = vld [vmem:[%s1 + $0xd0] sm:$0xf]
  %v108 = vld [vmem:[%s1 + $0xd4] sm:$0xf]
  %v109 = vld [vmem:[%s1 + $0xd8] sm:$0xf]
  %v110 = vld [vmem:[%s1 + $0xdc] sm:$0xf]
  %v111 = vld [vmem:[%s1 + $0xe0] sm:$0xf]
  %v112 = vld [vmem:[%s1 + $0xe4] sm:$0xf]
  %v113 = vld [vmem:[%s1 + $0xe8] sm:$0xf]
  %v114 = vld [vmem:[%s1 + $0xec] sm:$0xf]
  %v115 = vld [vmem:[%s1 + $0xf0] sm:$0xf]
  %v116 = vld [vmem:[%s1 + $0xf4] sm:$0xf]
  %v117 = vld [vmem:[%s1 + $0xf8] sm:$0xf]
  %v118 = vld [vmem:[%s1 + $0xfc] sm:$0xf]
  %v135 = vunpack.c.l.b16 %v39
  %v136 = vunpack.c.h.b16 %v39
  %v137 = vunpack.c.l.b16 %v40
  %v138 = vunpack.c.h.b16 %v40
  %v139 = vunpack.c.l.b16 %v41
  %v140 = vunpack.c.h.b16 %v41
  %v141 = vunpack.c.l.b16 %v42
  %v142 = vunpack.c.h.b16 %v42
  %v143 = vunpack.c.l.b16 %v43
  %v144 = vunpack.c.h.b16 %v43
  %v145 = vunpack.c.l.b16 %v44
  %v146 = vunpack.c.h.b16 %v44
  %v147 = vunpack.c.l.b16 %v45
  %v148 = vunpack.c.h.b16 %v45
  %v149 = vunpack.c.l.b16 %v46
  %v150 = vunpack.c.h.b16 %v46
  %v151 = vunpack.c.l.b16 %v47
  %v152 = vunpack.c.h.b16 %v47
  %v153 = vunpack.c.l.b16 %v48
  %v154 = vunpack.c.h.b16 %v48
  %v155 = vunpack.c.l.b16 %v49
  %v156 = vunpack.c.h.b16 %v49
  %v157 = vunpack.c.l.b16 %v50
  %v158 = vunpack.c.h.b16 %v50
  %v159 = vunpack.c.l.b16 %v51
  %v160 = vunpack.c.h.b16 %v51
  %v161 = vunpack.c.l.b16 %v52
  %v162 = vunpack.c.h.b16 %v52
  %v163 = vunpack.c.l.b16 %v53
  %v164 = vunpack.c.h.b16 %v53
  %v165 = vunpack.c.l.b16 %v54
  %v166 = vunpack.c.h.b16 %v54
  %v167 = vpack.c.b16 %v139, %v135
  %v168 = vpack.c.b16 %v140, %v136
  %v169 = vpack.c.b16 %v141, %v137
  %v170 = vpack.c.b16 %v142, %v138
  %v171 = vpack.c.b16 %v147, %v143
  %v172 = vpack.c.b16 %v148, %v144
  %v173 = vpack.c.b16 %v149, %v145
  %v174 = vpack.c.b16 %v150, %v146
  %v175 = vpack.c.b16 %v155, %v151
  %v176 = vpack.c.b16 %v156, %v152
  %v177 = vpack.c.b16 %v157, %v153
  %v178 = vpack.c.b16 %v158, %v154
  %v179 = vpack.c.b16 %v163, %v159
  %v180 = vpack.c.b16 %v164, %v160
  %v181 = vpack.c.b16 %v165, %v161
  %v182 = vpack.c.b16 %v166, %v162
  %v263 = vunpack.c.l.b16 %v55
  %v264 = vunpack.c.l.b16 %v56
  %v265 = vunpack.c.l.b16 %v57
  %v266 = vunpack.c.l.b16 %v58
  %v267 = vunpack.c.l.b16 %v59
  %v268 = vunpack.c.l.b16 %v60
  %v269 = vunpack.c.l.b16 %v61
  %v270 = vunpack.c.l.b16 %v62
  %v271 = vunpack.c.l.b16 %v63
  %v272 = vunpack.c.l.b16 %v64
  %v273 = vunpack.c.l.b16 %v65
  %v274 = vunpack.c.l.b16 %v66
  %v275 = vunpack.c.l.b16 %v67
  %v276 = vunpack.c.l.b16 %v68
  %v277 = vunpack.c.l.b16 %v69
  %v278 = vunpack.c.l.b16 %v70
  %v279 = vunpack.c.l.b16 %v71
  %v280 = vunpack.c.l.b16 %v72
  %v281 = vunpack.c.l.b16 %v73
  %v282 = vunpack.c.l.b16 %v74
  %v283 = vunpack.c.l.b16 %v75
  %v284 = vunpack.c.l.b16 %v76
  %v285 = vunpack.c.l.b16 %v77
  %v286 = vunpack.c.l.b16 %v78
  %v287 = vunpack.c.l.b16 %v79
  %v288 = vunpack.c.l.b16 %v80
  %v289 = vunpack.c.l.b16 %v81
  %v290 = vunpack.c.l.b16 %v82
  %v291 = vunpack.c.l.b16 %v83
  %v292 = vunpack.c.l.b16 %v84
  %v293 = vunpack.c.l.b16 %v85
  %v294 = vunpack.c.l.b16 %v86
  %v295 = vunpack.c.l.b16 %v87
  %v296 = vunpack.c.l.b16 %v88
  %v297 = vunpack.c.l.b16 %v89
  %v298 = vunpack.c.l.b16 %v90
  %v299 = vunpack.c.l.b16 %v91
  %v300 = vunpack.c.l.b16 %v92
  %v301 = vunpack.c.l.b16 %v93
  %v302 = vunpack.c.l.b16 %v94
  %v303 = vunpack.c.l.b16 %v95
  %v304 = vunpack.c.l.b16 %v96
  %v305 = vunpack.c.l.b16 %v97
  %v306 = vunpack.c.l.b16 %v98
  %v307 = vunpack.c.l.b16 %v99
  %v308 = vunpack.c.l.b16 %v100
  %v309 = vunpack.c.l.b16 %v101
  %v310 = vunpack.c.l.b16 %v102
  %v311 = vunpack.c.l.b16 %v103
  %v312 = vunpack.c.l.b16 %v104
  %v313 = vunpack.c.l.b16 %v105
  %v314 = vunpack.c.l.b16 %v106
  %v315 = vunpack.c.l.b16 %v107
  %v316 = vunpack.c.l.b16 %v108
  %v317 = vunpack.c.l.b16 %v109
  %v318 = vunpack.c.l.b16 %v110
  %v319 = vunpack.c.l.b16 %v111
  %v320 = vunpack.c.l.b16 %v112
  %v321 = vunpack.c.l.b16 %v113
  %v322 = vunpack.c.l.b16 %v114
  %v323 = vunpack.c.l.b16 %v115
  %v324 = vunpack.c.l.b16 %v116
  %v325 = vunpack.c.l.b16 %v117
  %v326 = vunpack.c.l.b16 %v118
  %v327 = vpack.c.b16 %v264, %v263
  %v328 = vpack.c.b16 %v266, %v265
  %v329 = vpack.c.b16 %v268, %v267
  %v330 = vpack.c.b16 %v270, %v269
  %v331 = vpack.c.b16 %v272, %v271
  %v332 = vpack.c.b16 %v274, %v273
  %v333 = vpack.c.b16 %v276, %v275
  %v334 = vpack.c.b16 %v278, %v277
  %v335 = vpack.c.b16 %v280, %v279
  %v336 = vpack.c.b16 %v282, %v281
  %v337 = vpack.c.b16 %v284, %v283
  %v338 = vpack.c.b16 %v286, %v285
  %v339 = vpack.c.b16 %v288, %v287
  %v340 = vpack.c.b16 %v290, %v289
  %v341 = vpack.c.b16 %v292, %v291
  %v342 = vpack.c.b16 %v294, %v293
  %v343 = vpack.c.b16 %v296, %v295
  %v344 = vpack.c.b16 %v298, %v297
  %v345 = vpack.c.b16 %v300, %v299
  %v346 = vpack.c.b16 %v302, %v301
  %v347 = vpack.c.b16 %v304, %v303
  %v348 = vpack.c.b16 %v306, %v305
  %v349 = vpack.c.b16 %v308, %v307
  %v350 = vpack.c.b16 %v310, %v309
  %v351 = vpack.c.b16 %v312, %v311
  %v352 = vpack.c.b16 %v314, %v313
  %v353 = vpack.c.b16 %v316, %v315
  %v354 = vpack.c.b16 %v318, %v317
  %v355 = vpack.c.b16 %v320, %v319
  %v356 = vpack.c.b16 %v322, %v321
  %v357 = vpack.c.b16 %v324, %v323
  %v358 = vpack.c.b16 %v326, %v325
  %391 = vmatpush.bf16.msra.mxu0 %v334
  %392 = vmatpush.bf16.msra.mxu0 %v333
  %393 = vmatpush.bf16.msra.mxu0 %v332
  %394 = vmatpush.bf16.msra.mxu0 %v331
  %395 = vmatpush.bf16.msra.mxu0 %v330
  %396 = vmatpush.bf16.msra.mxu0 %v329
  %397 = vmatpush.bf16.msra.mxu0 %v328
  %398 = vmatpush.bf16.msra.mxu0 %v327
  %399 = vmatmul.bf16.gmra.mxu0 %v167
  %v400 = vpop.f32.mrf.mxu0
  %v401 = vadd.f32 0.0, %v400
  %v402 = vpop.f32.mrf.mxu0
  %v403 = vadd.f32 0.0, %v402
  %404 = vmatmul.bf16.gmra.mxu0 %v171
  %v405 = vpop.f32.mrf.mxu0
  %v406 = vadd.f32 0.0, %v405
  %v407 = vpop.f32.mrf.mxu0
  %v408 = vadd.f32 0.0, %v407
  %409 = vmatmul.bf16.gmra.mxu0 %v175
  %v410 = vpop.f32.mrf.mxu0
  %v411 = vadd.f32 0.0, %v410
  %v412 = vpop.f32.mrf.mxu0
  %v413 = vadd.f32 0.0, %v412
  %414 = vmatmul.bf16.gmra.mxu0 %v179
  %v415 = vpop.f32.mrf.mxu0
  %v416 = vadd.f32 0.0, %v415
  %v417 = vpop.f32.mrf.mxu0
  %v418 = vadd.f32 0.0, %v417
  %419 = vdwg.mxu0
  %420 = vmatpush.bf16.msra.mxu0 %v342
  %421 = vmatpush.bf16.msra.mxu0 %v341
  %422 = vmatpush.bf16.msra.mxu0 %v340
  %423 = vmatpush.bf16.msra.mxu0 %v339
  %424 = vmatpush.bf16.msra.mxu0 %v338
  %425 = vmatpush.bf16.msra.mxu0 %v337
  %426 = vmatpush.bf16.msra.mxu0 %v336
  %427 = vmatpush.bf16.msra.mxu0 %v335
  %428 = vmatmul.bf16.gmra.mxu0 %v168
  %v429 = vpop.f32.mrf.mxu0
  %v430 = vadd.f32 %v401, %v429
  %v431 = vpop.f32.mrf.mxu0
  %v432 = vadd.f32 %v403, %v431
  %433 = vmatmul.bf16.gmra.mxu0 %v172
  %v434 = vpop.f32.mrf.mxu0
  %v435 = vadd.f32 %v406, %v434
  %v436 = vpop.f32.mrf.mxu0
  %v437 = vadd.f32 %v408, %v436
  %438 = vmatmul.bf16.gmra.mxu0 %v176
  %v439 = vpop.f32.mrf.mxu0
  %v440 = vadd.f32 %v411, %v439
  %v441 = vpop.f32.mrf.mxu0
  %v442 = vadd.f32 %v413, %v441
  %443 = vmatmul.bf16.gmra.mxu0 %v180
  %v444 = vpop.f32.mrf.mxu0
  %v445 = vadd.f32 %v416, %v444
  %v446 = vpop.f32.mrf.mxu0
  %v447 = vadd.f32 %v418, %v446
  %448 = vdwg.mxu0
  %449 = vmatpush.bf16.msra.mxu0 %v350
  %450 = vmatpush.bf16.msra.mxu0 %v349
  %451 = vmatpush.bf16.msra.mxu0 %v348
  %452 = vmatpush.bf16.msra.mxu0 %v347
  %453 = vmatpush.bf16.msra.mxu0 %v346
  %454 = vmatpush.bf16.msra.mxu0 %v345
  %455 = vmatpush.bf16.msra.mxu0 %v344
  %456 = vmatpush.bf16.msra.mxu0 %v343
  %457 = vmatmul.bf16.gmra.mxu0 %v169
  %v458 = vpop.f32.mrf.mxu0
  %v459 = vadd.f32 %v430, %v458
  %v460 = vpop.f32.mrf.mxu0
  %v461 = vadd.f32 %v432, %v460
  %462 = vmatmul.bf16.gmra.mxu0 %v173
  %v463 = vpop.f32.mrf.mxu0
  %v464 = vadd.f32 %v435, %v463
  %v465 = vpop.f32.mrf.mxu0
  %v466 = vadd.f32 %v437, %v465
  %467 = vmatmul.bf16.gmra.mxu0 %v177
  %v468 = vpop.f32.mrf.mxu0
  %v469 = vadd.f32 %v440, %v468
  %v470 = vpop.f32.mrf.mxu0
  %v471 = vadd.f32 %v442, %v470
  %472 = vmatmul.bf16.gmra.mxu0 %v181
  %v473 = vpop.f32.mrf.mxu0
  %v474 = vadd.f32 %v445, %v473
  %v475 = vpop.f32.mrf.mxu0
  %v476 = vadd.f32 %v447, %v475
  %477 = vdwg.mxu0
  %478 = vmatpush.bf16.msra.mxu0 %v358
  %479 = vmatpush.bf16.msra.mxu0 %v357
  %480 = vmatpush.bf16.msra.mxu0 %v356
  %481 = vmatpush.bf16.msra.mxu0 %v355
  %482 = vmatpush.bf16.msra.mxu0 %v354
  %483 = vmatpush.bf16.msra.mxu0 %v353
  %484 = vmatpush.bf16.msra.mxu0 %v352
  %485 = vmatpush.bf16.msra.mxu0 %v351
  %486 = vmatmul.bf16.gmra.mxu0 %v170
  %v487 = vpop.f32.mrf.mxu0
  %v488 = vadd.f32 %v459, %v487
  %v489 = vpop.f32.mrf.mxu0
  %v490 = vadd.f32 %v461, %v489
  %491 = vmatmul.bf16.gmra.mxu0 %v174
  %v492 = vpop.f32.mrf.mxu0
  %v493 = vadd.f32 %v464, %v492
  %v494 = vpop.f32.mrf.mxu0
  %v495 = vadd.f32 %v466, %v494
  %496 = vmatmul.bf16.gmra.mxu0 %v178
  %v497 = vpop.f32.mrf.mxu0
  %v498 = vadd.f32 %v469, %v497
  %v499 = vpop.f32.mrf.mxu0
  %v500 = vadd.f32 %v471, %v499
  %501 = vmatmul.bf16.gmra.mxu0 %v182
  %v502 = vpop.f32.mrf.mxu0
  %v503 = vadd.f32 %v474, %v502
  %v504 = vpop.f32.mrf.mxu0
  %v505 = vadd.f32 %v476, %v504
  %506 = vdwg.mxu0
  %v507 = vadd.f32 %v31, %v488
  %v508 = vadd.f32 %v32, %v490
  %v509 = vadd.f32 %v33, %v493
  %v510 = vadd.f32 %v34, %v495
  %v511 = vadd.f32 %v35, %v498
  %v512 = vadd.f32 %v36, %v500
  %v513 = vadd.f32 %v37, %v503
  %v514 = vadd.f32 %v38, %v505
  %vm515 = vcmask 523264
  %516 = vst.msk [vmem:[#allocation2] sm:$0xff] %vm515, %v507
  %517 = vst.msk [vmem:[#allocation2 + $0x8] sm:$0xff] %vm515, %v508
  %518 = vst.msk [vmem:[#allocation2 + $0x10] sm:$0xff] %vm515, %v509
  %519 = vst.msk [vmem:[#allocation2 + $0x18] sm:$0xff] %vm515, %v510
  %520 = vst.msk [vmem:[#allocation2 + $0x20] sm:$0xff] %vm515, %v511
  %521 = vst.msk [vmem:[#allocation2 + $0x28] sm:$0xff] %vm515, %v512
  %522 = vst.msk [vmem:[#allocation2 + $0x30] sm:$0xff] %vm515, %v513
  %523 = vst.msk [vmem:[#allocation2 + $0x38] sm:$0xff] %vm515, %v514
  // Predicated region
  $region18: #{discriminator_mwm_forward.5} parent=0 // pred_check
    %p524 = pneg %p14
  $region19: #{discriminator_mwm_forward.5} parent=0 // pred_check_branch
    %526 = sbr.rel (%p524) target = $region21
  $region20: #{discriminator_mwm_forward.5} parent=0 // pred_region
    %v527 = vld [vmem:[#allocation2] sm:$0xff]
    %v528 = vld [vmem:[#allocation2 + $0x8] sm:$0xff]
    %v529 = vld [vmem:[#allocation2 + $0x10] sm:$0xff]
    %v530 = vld [vmem:[#allocation2 + $0x18] sm:$0xff]
    %v531 = vld [vmem:[#allocation2 + $0x20] sm:$0xff]
    %v532 = vld [vmem:[#allocation2 + $0x28] sm:$0xff]
    %v533 = vld [vmem:[#allocation2 + $0x30] sm:$0xff]
    %v534 = vld [vmem:[#allocation2 + $0x38] sm:$0xff]
    %v535 = vmul.f32 %v527, 0.2
    %v536 = vmul.f32 %v528, 0.2
    %v537 = vmul.f32 %v529, 0.2
    %v538 = vmul.f32 %v530, 0.2
    %v539 = vmul.f32 %v531, 0.2
    %v540 = vmul.f32 %v532, 0.2
    %v541 = vmul.f32 %v533, 0.2
    %v542 = vmul.f32 %v534, 0.2
    %v543 = vmax.f32 %v527, %v535
    %v544 = vmax.f32 %v528, %v536
    %v545 = vmax.f32 %v529, %v537
    %v546 = vmax.f32 %v530, %v538
    %v547 = vmax.f32 %v531, %v539
    %v548 = vmax.f32 %v532, %v540
    %v549 = vmax.f32 %v533, %v541
    %v550 = vmax.f32 %v534, %v542
    %v551 = vpack.c.bf16 %v543, %v543
    %v552 = vpack.c.bf16 %v544, %v544
    %v553 = vpack.c.bf16 %v545, %v545
    %v554 = vpack.c.bf16 %v546, %v546
    %v555 = vpack.c.bf16 %v547, %v547
    %v556 = vpack.c.bf16 %v548, %v548
    %v557 = vpack.c.bf16 %v549, %v549
    %v558 = vpack.c.bf16 %v550, %v550
    %vm559 = vcmask 519168
    %560 = vst.msk [vmem:[%s3] sm:$0xf] %vm559, %v551
    %561 = vst.msk [vmem:[%s3 + $0x4] sm:$0xf] %vm559, %v552
    %562 = vst.msk [vmem:[%s3 + $0x8] sm:$0xf] %vm559, %v553
    %563 = vst.msk [vmem:[%s3 + $0xc] sm:$0xf] %vm559, %v554
    %564 = vst.msk [vmem:[%s3 + $0x10] sm:$0xf] %vm559, %v555
    %565 = vst.msk [vmem:[%s3 + $0x14] sm:$0xf] %vm559, %v556
    %566 = vst.msk [vmem:[%s3 + $0x18] sm:$0xf] %vm559, %v557
    %567 = vst.msk [vmem:[%s3 + $0x1c] sm:$0xf] %vm559, %v558
  $region21: #{discriminator_mwm_forward.5} parent=0 // pred_fallthru
    _
  // Predicated region
  $region22: #{discriminator_mwm_forward.5} parent=0 // pred_check
    _
  $region23: #{discriminator_mwm_forward.5} parent=0 // pred_check_branch
    %569 = sbr.rel (0) target = $region25
  $region24: #{discriminator_mwm_forward.5} parent=0 // pred_region
    _
  $region25: #{discriminator_mwm_forward.5} parent=0 // pred_fallthru
    _
  // Predicated region
  $region26: #{discriminator_mwm_forward.5} parent=0 // pred_check
    _
  $region27: #{discriminator_mwm_forward.5} parent=0 // pred_check_branch
    %571 = sbr.rel (0) target = $region29
  $region28: #{discriminator_mwm_forward.5} parent=0 // pred_region
    _
  $region29: #{discriminator_mwm_forward.5} parent=0 // pred_fallthru
    _

// kernel: discriminator_mwm_forward.6
$region0: #{discriminator_mwm_forward.6}
  #allocation0 [shape = 'u32[]', space=smem, size = 0x4, offset = 0x4, fixed_abs, tag = 'smem constant byte address 0x4 - core index']
  #allocation1 [shape = 'u32[72,128]{1,0:T(1,128)}', space=vmem, size = 0x9000, scoped, tag = 'internal scratch']
  #allocation2 [shape = 'f32[16,128]{1,0:T(8,128)}', space=vmem, size = 0x2000, scoped, tag = 'scratch operand']
  %s0 = inlined_call_operand.vmem [shape: bf16[16,1024], index: 0, kind: input, shape index: {}]
  %s1 = inlined_call_operand.vmem [shape: bf16[1024,128], index: 1, kind: input, shape index: {}]
  %s2 = inlined_call_operand.vmem [shape: f32[1,128], index: 2, kind: input, shape index: {}]
  %s3 = inlined_call_operand.vmem [shape: f32[1,128], index: 3, kind: input, shape index: {}]
  %s4 = inlined_call_operand.vmem [shape: f32[1,128], index: 4, kind: input, shape index: {}]
  %s5 = inlined_call_operand.vmem [shape: bf16[16,128], index: 5, kind: output, shape index: {}]
  %s6 = sld [smem:[#allocation0]]
  $region84: #{discriminator_mwm_forward.6} parent=0
    _
  %s8 = ssub.s32 1, %s6
  %s9 = scalar_select 0, %s8, %s6
  $region1: #{discriminator_mwm_forward.6} parent=0
    #allocation3 [shape = 'u8[32768]{0}', space=vmem, size = 0x8000, scoped, tag = 'input window, operand 0']
    loop: start=0, step=1, limit=4
    $region2: #{discriminator_mwm_forward.6} parent=1 // loop_pre_header
      _
    $region3: #{discriminator_mwm_forward.6} parent=1 // loop_header
      %s11 = sphi 0, %s15
      %p12 = scmp.ge.s32.totalorder %s11, 4
      %s21 = sphi 0, %s23
      %s24 = sphi 0, %s21
      %s25 = sphi 0, %s24
      %s41 = sphi 0, %s25
      %s47 = sphi 0, %s49
      %s50 = sphi 0, %s47
      %s51 = sphi 0, %s50
      %s67 = sphi 0, %s51
      %s71 = sphi 0, %s71
      %s73 = sphi 0, %s71
      %s74 = sphi 0, %s73
      %s88 = sphi 0, %s74
      %s92 = sphi 0, %s92
      %s94 = sphi 0, %s92
      %s95 = sphi 0, %s94
      %s109 = sphi 0, %s95
      %s113 = sphi 0, %s113
      %s115 = sphi 0, %s113
      %s116 = sphi 0, %s115
      %s130 = sphi 0, %s116
      %s134 = sphi 0, %s134
      %s136 = sphi 0, %s134
      %s137 = sphi 0, %s136
      %s151 = sphi 0, %s137
    $region4: #{discriminator_mwm_forward.6} parent=1 // loop_header_branch
      %14 = sbr.rel (%p12) target = $region8
    $region5: #{discriminator_mwm_forward.6} parent=1 // loop_body
      %s16 = ssub.s32 %s11, 1
      %s17 = ssub.s32 %s11, 2
      %s18 = sadd.s32 %s11, 1
      %s19 = ssub.s32 %s11, %s18
      %p20 = scmp.eq.s32.totalorder %s19, 0
      %s22 = sadd.s32 %s21, 1
      %s23 = scalar_select %p20, %s21, %s22
      %p26 = pneg %p20
      %p27 = scmp.eq.s32.totalorder %s11, 1
      %p28 = por %p26, %p27
      %p29 = scmp.ne.s32.totalorder %s21, %s24
      %p30 = scmp.eq.s32.totalorder %s11, 0
      %p31 = por %p29, %p30
      %p32 = scmp.ne.s32.totalorder %s21, %s24
      %p33 = scmp.eq.s32.totalorder %s16, 1
      %p34 = por %p32, %p33
      %p35 = scmp.ne.s32.totalorder %s24, %s25
      %p36 = scmp.eq.s32.totalorder %s16, 0
      %p37 = por %p35, %p36
      %p38 = scmp.ne.s32.totalorder %s24, %s25
      %p39 = scmp.eq.s32.totalorder %s17, 1
      %p40 = por %p38, %p39
      %p42 = scmp.ne.s32.totalorder %s25, %s41
      %p43 = scmp.eq.s32.totalorder %s17, 0
      %p44 = por %p42, %p43
      %s45 = ssub.s32 %s11, %s18
      %p46 = scmp.eq.s32.totalorder %s45, 0
      %s48 = sadd.s32 %s47, 1
      %s49 = scalar_select %p46, %s47, %s48
      %p52 = pneg %p46
      %p53 = scmp.eq.s32.totalorder %s11, 1
      %p54 = por %p52, %p53
      %p55 = scmp.ne.s32.totalorder %s47, %s50
      %p56 = scmp.eq.s32.totalorder %s11, 0
      %p57 = por %p55, %p56
      %p58 = scmp.ne.s32.totalorder %s47, %s50
      %p59 = scmp.eq.s32.totalorder %s16, 1
      %p60 = por %p58, %p59
      %p61 = scmp.ne.s32.totalorder %s50, %s51
      %p62 = scmp.eq.s32.totalorder %s16, 0
      %p63 = por %p61, %p62
      %p64 = scmp.ne.s32.totalorder %s50, %s51
      %p65 = scmp.eq.s32.totalorder %s17, 1
      %p66 = por %p64, %p65
      %p68 = scmp.ne.s32.totalorder %s51, %s67
      %p69 = scmp.eq.s32.totalorder %s17, 0
      %p70 = por %p68, %p69
      %s72 = sadd.s32 %s71, 1
      %p75 = scmp.eq.s32.totalorder %s11, 1
      %p76 = scmp.ne.s32.totalorder %s71, %s73
      %p77 = scmp.eq.s32.totalorder %s11, 0
      %p78 = por %p76, %p77
      %p79 = scmp.ne.s32.totalorder %s71, %s73
      %p80 = scmp.eq.s32.totalorder %s16, 1
      %p81 = por %p79, %p80
      %p82 = scmp.ne.s32.totalorder %s73, %s74
      %p83 = scmp.eq.s32.totalorder %s16, 0
      %p84 = por %p82, %p83
      %p85 = scmp.ne.s32.totalorder %s73, %s74
      %p86 = scmp.eq.s32.totalorder %s17, 1
      %p87 = por %p85, %p86
      %p89 = scmp.ne.s32.totalorder %s74, %s88
      %p90 = scmp.eq.s32.totalorder %s17, 0
      %p91 = por %p89, %p90
      %s93 = sadd.s32 %s92, 1
      %p96 = scmp.eq.s32.totalorder %s11, 1
      %p97 = scmp.ne.s32.totalorder %s92, %s94
      %p98 = scmp.eq.s32.totalorder %s11, 0
      %p99 = por %p97, %p98
      %p100 = scmp.ne.s32.totalorder %s92, %s94
      %p101 = scmp.eq.s32.totalorder %s16, 1
      %p102 = por %p100, %p101
      %p103 = scmp.ne.s32.totalorder %s94, %s95
      %p104 = scmp.eq.s32.totalorder %s16, 0
      %p105 = por %p103, %p104
      %p106 = scmp.ne.s32.totalorder %s94, %s95
      %p107 = scmp.eq.s32.totalorder %s17, 1
      %p108 = por %p106, %p107
      %p110 = scmp.ne.s32.totalorder %s95, %s109
      %p111 = scmp.eq.s32.totalorder %s17, 0
      %p112 = por %p110, %p111
      %s114 = sadd.s32 %s113, 1
      %p117 = scmp.eq.s32.totalorder %s11, 1
      %p118 = scmp.ne.s32.totalorder %s113, %s115
      %p119 = scmp.eq.s32.totalorder %s11, 0
      %p120 = por %p118, %p119
      %p121 = scmp.ne.s32.totalorder %s113, %s115
      %p122 = scmp.eq.s32.totalorder %s16, 1
      %p123 = por %p121, %p122
      %p124 = scmp.ne.s32.totalorder %s115, %s116
      %p125 = scmp.eq.s32.totalorder %s16, 0
      %p126 = por %p124, %p125
      %p127 = scmp.ne.s32.totalorder %s115, %s116
      %p128 = scmp.eq.s32.totalorder %s17, 1
      %p129 = por %p127, %p128
      %p131 = scmp.ne.s32.totalorder %s116, %s130
      %p132 = scmp.eq.s32.totalorder %s17, 0
      %p133 = por %p131, %p132
      %s135 = sadd.s32 %s134, 1
      %p138 = scmp.eq.s32.totalorder %s11, 1
      %p139 = scmp.ne.s32.totalorder %s134, %s136
      %p140 = scmp.eq.s32.totalorder %s11, 0
      %p141 = por %p139, %p140
      %p142 = scmp.ne.s32.totalorder %s134, %s136
      %p143 = scmp.eq.s32.totalorder %s16, 1
      %p144 = por %p142, %p143
      %p145 = scmp.ne.s32.totalorder %s136, %s137
      %p146 = scmp.eq.s32.totalorder %s16, 0
      %p147 = por %p145, %p146
      %p148 = scmp.ne.s32.totalorder %s136, %s137
      %p149 = scmp.eq.s32.totalorder %s17, 1
      %p150 = por %p148, %p149
      %p152 = scmp.ne.s32.totalorder %s137, %s151
      %p153 = scmp.eq.s32.totalorder %s17, 0
      %p154 = por %p152, %p153
      %p155 = scmp.le.s32.totalorder 1, %s11
      %p156 = scmp.lt.s32.totalorder %s11, 3
      %p157 = pnand %p155, %p156
      %p158 = pneg %p157
      // Predicated region
      $region9: #{discriminator_mwm_forward.6} parent=5 // pred_check
        _
      $region10: #{discriminator_mwm_forward.6} parent=5 // pred_check_branch
        %160 = sbr.rel (%p157) target = $region12
      $region11: #{discriminator_mwm_forward.6} parent=5 // pred_region
        %s161 = ssub.s32 %s11, 1
        // Predicated region
        $region13: #{discriminator_mwm_forward.6} parent=11 // pred_check
          %p162 = pneg %p84
        $region14: #{discriminator_mwm_forward.6} parent=11 // pred_check_branch
          %164 = sbr.rel (%p162) target = $region16
        $region15: #{discriminator_mwm_forward.6} parent=11 // pred_region
          _
        $region16: #{discriminator_mwm_forward.6} parent=11 // pred_fallthru
          _
        // Predicated region
        $region17: #{discriminator_mwm_forward.6} parent=11 // pred_check
          %p165 = pneg %p105
        $region18: #{discriminator_mwm_forward.6} parent=11 // pred_check_branch
          %167 = sbr.rel (%p165) target = $region20
        $region19: #{discriminator_mwm_forward.6} parent=11 // pred_region
          _
        $region20: #{discriminator_mwm_forward.6} parent=11 // pred_fallthru
          _
        // Predicated region
        $region21: #{discriminator_mwm_forward.6} parent=11 // pred_check
          %p168 = pneg %p126
        $region22: #{discriminator_mwm_forward.6} parent=11 // pred_check_branch
          %170 = sbr.rel (%p168) target = $region24
        $region23: #{discriminator_mwm_forward.6} parent=11 // pred_region
          _
        $region24: #{discriminator_mwm_forward.6} parent=11 // pred_fallthru
          _
      $region12: #{discriminator_mwm_forward.6} parent=5 // pred_fallthru
        _
      %p171 = scmp.lt.s32.totalorder %s11, 2
      // Predicated region
      $region25: #{discriminator_mwm_forward.6} parent=5 // pred_check
        %p172 = pneg %p171
      $region26: #{discriminator_mwm_forward.6} parent=5 // pred_check_branch
        %174 = sbr.rel (%p172) target = $region28
      $region27: #{discriminator_mwm_forward.6} parent=5 // pred_region
        // Predicated region
        $region29: #{discriminator_mwm_forward.6} parent=27 // pred_check
          %p175 = pneg %p31
        $region30: #{discriminator_mwm_forward.6} parent=27 // pred_check_branch
          %177 = sbr.rel (%p175) target = $region32
        $region31: #{discriminator_mwm_forward.6} parent=27 // pred_region
          %s178 = sand.u32 %s21, 1
          %s179 = sand.u32 %s21, 1
          %s180 = smul.addr %s179, 32
          %s181 = scalar_lea.vmem [#allocation3], %s180
          %s182 = smul.u32 4, %s11
          %s183 = smul.addr %s182, 4
          %s184 = scalar_lea.vmem %s0, %s183
          // Predicated region
          $region33: #{discriminator_mwm_forward.6} parent=31 // pred_check
            _
          $region34: #{discriminator_mwm_forward.6} parent=31 // pred_check_branch
            %186 = sbr.rel (0) target = $region36
          $region35: #{discriminator_mwm_forward.6} parent=31 // pred_region
            // Predicated region
            $region37: #{discriminator_mwm_forward.6} parent=35 // pred_check
              _
            $region38: #{discriminator_mwm_forward.6} parent=35 // pred_check_branch
              %188 = sbr.rel (0) target = $region40
            $region39: #{discriminator_mwm_forward.6} parent=35 // pred_region
              loop: start=0, step=1, limit=1
              $region41: #{discriminator_mwm_forward.6} parent=39 // loop_pre_header
                _
              $region42: #{discriminator_mwm_forward.6} parent=39 // loop_header
                %s190 = sphi 0, %s194
                %p191 = scmp.ge.s32.totalorder %s190, 1
                %s195 = sphi %s184, %s184
                %s196 = sphi %s181, %s181
              $region43: #{discriminator_mwm_forward.6} parent=39 // loop_header_branch
                %193 = sbr.rel (%p191) target = $region47
              $region44: #{discriminator_mwm_forward.6} parent=39 // loop_body
                %v197 = vld [vmem:[%s195] sm:$0xff]
                %198 = vst [vmem:[%s196] sm:$0xff] %v197
                %v199 = vld [vmem:[%s195 + $0x8] sm:$0xff]
                %200 = vst [vmem:[%s196 + $0x8] sm:$0xff] %v199
                %v201 = vld [vmem:[%s195 + $0x20] sm:$0xff]
                %202 = vst [vmem:[%s196 + $0x10] sm:$0xff] %v201
                %v203 = vld [vmem:[%s195 + $0x28] sm:$0xff]
                %204 = vst [vmem:[%s196 + $0x18] sm:$0xff] %v203
              $region45: #{discriminator_mwm_forward.6} parent=39 // loop_footer
                %s194 = sadd.s32 1, %s190
              $region46: #{discriminator_mwm_forward.6} parent=39 // loop_footer_branch
                %189 = sbr.rel target = $region42
              $region47: #{discriminator_mwm_forward.6} parent=39 // loop_exit
                _
            $region40: #{discriminator_mwm_forward.6} parent=35 // pred_fallthru
              _
            // Predicated region
            $region48: #{discriminator_mwm_forward.6} parent=35 // pred_check
              _
            $region49: #{discriminator_mwm_forward.6} parent=35 // pred_check_branch
              %206 = sbr.rel target = $region51
            $region50: #{discriminator_mwm_forward.6} parent=35 // pred_region
              _
            $region51: #{discriminator_mwm_forward.6} parent=35 // pred_fallthru
              _
          $region36: #{discriminator_mwm_forward.6} parent=31 // pred_fallthru
            _
          %207 = vnop
        $region32: #{discriminator_mwm_forward.6} parent=27 // pred_fallthru
          _
        // Predicated region
        $region52: #{discriminator_mwm_forward.6} parent=27 // pred_check
          %p208 = pneg %p57
        $region53: #{discriminator_mwm_forward.6} parent=27 // pred_check_branch
          %210 = sbr.rel (%p208) target = $region55
        $region54: #{discriminator_mwm_forward.6} parent=27 // pred_region
          %s211 = smul.u32 64, %s11
          %p212 = scmp.lt.s32.totalorder %s211, 127
          %s213 = scalar_select %p212, %s211, 127
          %s214 = smul.addr %s213, 4
          %s215 = scalar_lea.vmem %s1, %s214
          %s216 = smul.u32 64, %s11
        $region55: #{discriminator_mwm_forward.6} parent=27 // pred_fallthru
          _
      $region28: #{discriminator_mwm_forward.6} parent=5 // pred_fallthru
        _
      %p217 = scmp.le.s32.totalorder 1, %s11
      %p218 = scmp.lt.s32.totalorder %s11, 3
      %p219 = pnand %p217, %p218
      %p220 = pneg %p219
      // Predicated region
      $region56: #{discriminator_mwm_forward.6} parent=5 // pred_check
        _
      $region57: #{discriminator_mwm_forward.6} parent=5 // pred_check_branch
        %222 = sbr.rel (%p219) target = $region59
      $region58: #{discriminator_mwm_forward.6} parent=5 // pred_region
        %s223 = ssub.s32 %s11, 1
        %s224 = sand.u32 %s24, 1
        %s225 = sand.u32 %s24, 1
        %s226 = smul.addr %s225, 32
        %s227 = scalar_lea.vmem [#allocation3], %s226
        // Predicated region
        $region60: #{discriminator_mwm_forward.6} parent=58 // pred_check
          %p228 = pneg %p37
        $region61: #{discriminator_mwm_forward.6} parent=58 // pred_check_branch
          %230 = sbr.rel (%p228) target = $region63
        $region62: #{discriminator_mwm_forward.6} parent=58 // pred_region
          _
        $region63: #{discriminator_mwm_forward.6} parent=58 // pred_fallthru
          _
        %s231 = sand.u32 %s24, 1
        %s232 = sand.u32 %s24, 1
        %s233 = smul.addr %s232, 32
        %s234 = scalar_lea.vmem [#allocation3], %s233
        %p235 = pneg %p37
        %p236 = pneg %p34
        %s237 = smul.u32 64, %s16
        %p238 = scmp.lt.s32.totalorder %s237, 127
        %s239 = scalar_select %p238, %s237, 127
        %s240 = smul.addr %s239, 4
        %s241 = scalar_lea.vmem %s1, %s240
        %p242 = pneg %p63
        %p243 = pneg %p60
        %p244 = pneg %p84
        %p245 = pneg %p81
        %p246 = pneg %p105
        %p247 = pneg %p102
        %p248 = pneg %p126
        %p249 = pneg %p123
        %p250 = pneg %p147
        %p251 = pneg %p144
        %s252 = smul.u32 4, %s16
        %s253 = smul.u32 64, %s16
        %p254 = scmp.lt.s32.totalorder %s253, 127
        %s255 = scalar_select %p254, %s253, 127
        %s256 = smul.addr %s255, 4
        %s257 = scalar_lea.vmem %s1, %s256
        %s258 = smul.u32 64, %s16
        %p259 = scmp.eq.s32.totalorder %s16, 0
        // Predicated region
        $region64: #{discriminator_mwm_forward.6} parent=58 // pred_check
          %p260 = pneg %p259
        $region65: #{discriminator_mwm_forward.6} parent=58 // pred_check_branch
          %262 = sbr.rel (%p260) target = $region67
        $region66: #{discriminator_mwm_forward.6} parent=58 // pred_region
          %v263 = vld [vmem:[%s2] sm:$0x1]
          %v265 = vperm.slane %v263, 0
          %267 = vst [vmem:[#allocation2] sm:$0xff] %v265
          %268 = vst [vmem:[#allocation2 + $0x8] sm:$0xff] %v265
        $region67: #{discriminator_mwm_forward.6} parent=58 // pred_fallthru
          _
        %v269 = vld [vmem:[#allocation2] sm:$0xff]
        %v270 = vld [vmem:[#allocation2 + $0x8] sm:$0xff]
        %v271 = vld [vmem:[%s227] sm:$0xff]
        %v272 = vld [vmem:[%s227 + $0x8] sm:$0xff]
        %v273 = vld [vmem:[%s227 + $0x10] sm:$0xff]
        %v274 = vld [vmem:[%s227 + $0x18] sm:$0xff]
        %v275 = vld [vmem:[%s257] sm:$0xf]
        %v276 = vld [vmem:[%s257 + $0x4] sm:$0xf]
        %v277 = vld [vmem:[%s257 + $0x8] sm:$0xf]
        %v278 = vld [vmem:[%s257 + $0xc] sm:$0xf]
        %v279 = vld [vmem:[%s257 + $0x10] sm:$0xf]
        %v280 = vld [vmem:[%s257 + $0x14] sm:$0xf]
        %v281 = vld [vmem:[%s257 + $0x18] sm:$0xf]
        %v282 = vld [vmem:[%s257 + $0x1c] sm:$0xf]
        %v283 = vld [vmem:[%s257 + $0x20] sm:$0xf]
        %v284 = vld [vmem:[%s257 + $0x24] sm:$0xf]
        %v285 = vld [vmem:[%s257 + $0x28] sm:$0xf]
        %v286 = vld [vmem:[%s257 + $0x2c] sm:$0xf]
        %v287 = vld [vmem:[%s257 + $0x30] sm:$0xf]
        %v288 = vld [vmem:[%s257 + $0x34] sm:$0xf]
        %v289 = vld [vmem:[%s257 + $0x38] sm:$0xf]
        %v290 = vld [vmem:[%s257 + $0x3c] sm:$0xf]
        %v291 = vld [vmem:[%s257 + $0x40] sm:$0xf]
        %v292 = vld [vmem:[%s257 + $0x44] sm:$0xf]
        %v293 = vld [vmem:[%s257 + $0x48] sm:$0xf]
        %v294 = vld [vmem:[%s257 + $0x4c] sm:$0xf]
        %v295 = vld [vmem:[%s257 + $0x50] sm:$0xf]
        %v296 = vld [vmem:[%s257 + $0x54] sm:$0xf]
        %v297 = vld [vmem:[%s257 + $0x58] sm:$0xf]
        %v298 = vld [vmem:[%s257 + $0x5c] sm:$0xf]
        %v299 = vld [vmem:[%s257 + $0x60] sm:$0xf]
        %v300 = vld [vmem:[%s257 + $0x64] sm:$0xf]
        %v301 = vld [vmem:[%s257 + $0x68] sm:$0xf]
        %v302 = vld [vmem:[%s257 + $0x6c] sm:$0xf]
        %v303 = vld [vmem:[%s257 + $0x70] sm:$0xf]
        %v304 = vld [vmem:[%s257 + $0x74] sm:$0xf]
        %v305 = vld [vmem:[%s257 + $0x78] sm:$0xf]
        %v306 = vld [vmem:[%s257 + $0x7c] sm:$0xf]
        %v307 = vld [vmem:[%s257 + $0x80] sm:$0xf]
        %v308 = vld [vmem:[%s257 + $0x84] sm:$0xf]
        %v309 = vld [vmem:[%s257 + $0x88] sm:$0xf]
        %v310 = vld [vmem:[%s257 + $0x8c] sm:$0xf]
        %v311 = vld [vmem:[%s257 + $0x90] sm:$0xf]
        %v312 = vld [vmem:[%s257 + $0x94] sm:$0xf]
        %v313 = vld [vmem:[%s257 + $0x98] sm:$0xf]
        %v314 = vld [vmem:[%s257 + $0x9c] sm:$0xf]
        %v315 = vld [vmem:[%s257 + $0xa0] sm:$0xf]
        %v316 = vld [vmem:[%s257 + $0xa4] sm:$0xf]
        %v317 = vld [vmem:[%s257 + $0xa8] sm:$0xf]
        %v318 = vld [vmem:[%s257 + $0xac] sm:$0xf]
        %v319 = vld [vmem:[%s257 + $0xb0] sm:$0xf]
        %v320 = vld [vmem:[%s257 + $0xb4] sm:$0xf]
        %v321 = vld [vmem:[%s257 + $0xb8] sm:$0xf]
        %v322 = vld [vmem:[%s257 + $0xbc] sm:$0xf]
        %v323 = vld [vmem:[%s257 + $0xc0] sm:$0xf]
        %v324 = vld [vmem:[%s257 + $0xc4] sm:$0xf]
        %v325 = vld [vmem:[%s257 + $0xc8] sm:$0xf]
        %v326 = vld [vmem:[%s257 + $0xcc] sm:$0xf]
        %v327 = vld [vmem:[%s257 + $0xd0] sm:$0xf]
        %v328 = vld [vmem:[%s257 + $0xd4] sm:$0xf]
        %v329 = vld [vmem:[%s257 + $0xd8] sm:$0xf]
        %v330 = vld [vmem:[%s257 + $0xdc] sm:$0xf]
        %v331 = vld [vmem:[%s257 + $0xe0] sm:$0xf]
        %v332 = vld [vmem:[%s257 + $0xe4] sm:$0xf]
        %v333 = vld [vmem:[%s257 + $0xe8] sm:$0xf]
        %v334 = vld [vmem:[%s257 + $0xec] sm:$0xf]
        %v335 = vld [vmem:[%s257 + $0xf0] sm:$0xf]
        %v336 = vld [vmem:[%s257 + $0xf4] sm:$0xf]
        %v337 = vld [vmem:[%s257 + $0xf8] sm:$0xf]
        %v338 = vld [vmem:[%s257 + $0xfc] sm:$0xf]
        %v343 = vunpack.c.l.b16 %v271
        %v344 = vunpack.c.h.b16 %v271
        %v345 = vunpack.c.l.b16 %v272
        %v346 = vunpack.c.h.b16 %v272
        %v347 = vunpack.c.l.b16 %v273
        %v348 = vunpack.c.h.b16 %v273
        %v349 = vunpack.c.l.b16 %v274
        %v350 = vunpack.c.h.b16 %v274
        %v351 = vpack.c.b16 %v347, %v343
        %v352 = vpack.c.b16 %v348, %v344
        %v353 = vpack.c.b16 %v349, %v345
        %v354 = vpack.c.b16 %v350, %v346
        %v423 = vunpack.c.l.b16 %v275
        %v424 = vunpack.c.l.b16 %v276
        %v425 = vunpack.c.l.b16 %v277
        %v426 = vunpack.c.l.b16 %v278
        %v427 = vunpack.c.l.b16 %v279
        %v428 = vunpack.c.l.b16 %v280
        %v429 = vunpack.c.l.b16 %v281
        %v430 = vunpack.c.l.b16 %v282
        %v431 = vunpack.c.l.b16 %v283
        %v432 = vunpack.c.l.b16 %v284
        %v433 = vunpack.c.l.b16 %v285
        %v434 = vunpack.c.l.b16 %v286
        %v435 = vunpack.c.l.b16 %v287
        %v436 = vunpack.c.l.b16 %v288
        %v437 = vunpack.c.l.b16 %v289
        %v438 = vunpack.c.l.b16 %v290
        %v439 = vunpack.c.l.b16 %v291
        %v440 = vunpack.c.l.b16 %v292
        %v441 = vunpack.c.l.b16 %v293
        %v442 = vunpack.c.l.b16 %v294
        %v443 = vunpack.c.l.b16 %v295
        %v444 = vunpack.c.l.b16 %v296
        %v445 = vunpack.c.l.b16 %v297
        %v446 = vunpack.c.l.b16 %v298
        %v447 = vunpack.c.l.b16 %v299
        %v448 = vunpack.c.l.b16 %v300
        %v449 = vunpack.c.l.b16 %v301
        %v450 = vunpack.c.l.b16 %v302
        %v451 = vunpack.c.l.b16 %v303
        %v452 = vunpack.c.l.b16 %v304
        %v453 = vunpack.c.l.b16 %v305
        %v454 = vunpack.c.l.b16 %v306
        %v455 = vunpack.c.l.b16 %v307
        %v456 = vunpack.c.l.b16 %v308
        %v457 = vunpack.c.l.b16 %v309
        %v458 = vunpack.c.l.b16 %v310
        %v459 = vunpack.c.l.b16 %v311
        %v460 = vunpack.c.l.b16 %v312
        %v461 = vunpack.c.l.b16 %v313
        %v462 = vunpack.c.l.b16 %v314
        %v463 = vunpack.c.l.b16 %v315
        %v464 = vunpack.c.l.b16 %v316
        %v465 = vunpack.c.l.b16 %v317
        %v466 = vunpack.c.l.b16 %v318
        %v467 = vunpack.c.l.b16 %v319
        %v468 = vunpack.c.l.b16 %v320
        %v469 = vunpack.c.l.b16 %v321
        %v470 = vunpack.c.l.b16 %v322
        %v471 = vunpack.c.l.b16 %v323
        %v472 = vunpack.c.l.b16 %v324
        %v473 = vunpack.c.l.b16 %v325
        %v474 = vunpack.c.l.b16 %v326
        %v475 = vunpack.c.l.b16 %v327
        %v476 = vunpack.c.l.b16 %v328
        %v477 = vunpack.c.l.b16 %v329
        %v478 = vunpack.c.l.b16 %v330
        %v479 = vunpack.c.l.b16 %v331
        %v480 = vunpack.c.l.b16 %v332
        %v481 = vunpack.c.l.b16 %v333
        %v482 = vunpack.c.l.b16 %v334
        %v483 = vunpack.c.l.b16 %v335
        %v484 = vunpack.c.l.b16 %v336
        %v485 = vunpack.c.l.b16 %v337
        %v486 = vunpack.c.l.b16 %v338
        %v487 = vpack.c.b16 %v424, %v423
        %v488 = vpack.c.b16 %v426, %v425
        %v489 = vpack.c.b16 %v428, %v427
        %v490 = vpack.c.b16 %v430, %v429
        %v491 = vpack.c.b16 %v432, %v431
        %v492 = vpack.c.b16 %v434, %v433
        %v493 = vpack.c.b16 %v436, %v435
        %v494 = vpack.c.b16 %v438, %v437
        %v495 = vpack.c.b16 %v440, %v439
        %v496 = vpack.c.b16 %v442, %v441
        %v497 = vpack.c.b16 %v444, %v443
        %v498 = vpack.c.b16 %v446, %v445
        %v499 = vpack.c.b16 %v448, %v447
        %v500 = vpack.c.b16 %v450, %v449
        %v501 = vpack.c.b16 %v452, %v451
        %v502 = vpack.c.b16 %v454, %v453
        %v503 = vpack.c.b16 %v456, %v455
        %v504 = vpack.c.b16 %v458, %v457
        %v505 = vpack.c.b16 %v460, %v459
        %v506 = vpack.c.b16 %v462, %v461
        %v507 = vpack.c.b16 %v464, %v463
        %v508 = vpack.c.b16 %v466, %v465
        %v509 = vpack.c.b16 %v468, %v467
        %v510 = vpack.c.b16 %v470, %v469
        %v511 = vpack.c.b16 %v472, %v471
        %v512 = vpack.c.b16 %v474, %v473
        %v513 = vpack.c.b16 %v476, %v475
        %v514 = vpack.c.b16 %v478, %v477
        %v515 = vpack.c.b16 %v480, %v479
        %v516 = vpack.c.b16 %v482, %v481
        %v517 = vpack.c.b16 %v484, %v483
        %v518 = vpack.c.b16 %v486, %v485
        %551 = vmatpush.bf16.msra.mxu0 %v494
        %552 = vmatpush.bf16.msra.mxu0 %v493
        %553 = vmatpush.bf16.msra.mxu0 %v492
        %554 = vmatpush.bf16.msra.mxu0 %v491
        %555 = vmatpush.bf16.msra.mxu0 %v490
        %556 = vmatpush.bf16.msra.mxu0 %v489
        %557 = vmatpush.bf16.msra.mxu0 %v488
        %558 = vmatpush.bf16.msra.mxu0 %v487
        %559 = vmatmul.bf16.gmra.mxu0 %v351
        %v560 = vpop.f32.mrf.mxu0
        %v561 = vadd.f32 0.0, %v560
        %v562 = vpop.f32.mrf.mxu0
        %v563 = vadd.f32 0.0, %v562
        %564 = vdwg.mxu0
        %565 = vmatpush.bf16.msra.mxu0 %v502
        %566 = vmatpush.bf16.msra.mxu0 %v501
        %567 = vmatpush.bf16.msra.mxu0 %v500
        %568 = vmatpush.bf16.msra.mxu0 %v499
        %569 = vmatpush.bf16.msra.mxu0 %v498
        %570 = vmatpush.bf16.msra.mxu0 %v497
        %571 = vmatpush.bf16.msra.mxu0 %v496
        %572 = vmatpush.bf16.msra.mxu0 %v495
        %573 = vmatmul.bf16.gmra.mxu0 %v352
        %v574 = vpop.f32.mrf.mxu0
        %v575 = vadd.f32 %v561, %v574
        %v576 = vpop.f32.mrf.mxu0
        %v577 = vadd.f32 %v563, %v576
        %578 = vdwg.mxu0
        %579 = vmatpush.bf16.msra.mxu0 %v510
        %580 = vmatpush.bf16.msra.mxu0 %v509
        %581 = vmatpush.bf16.msra.mxu0 %v508
        %582 = vmatpush.bf16.msra.mxu0 %v507
        %583 = vmatpush.bf16.msra.mxu0 %v506
        %584 = vmatpush.bf16.msra.mxu0 %v505
        %585 = vmatpush.bf16.msra.mxu0 %v504
        %586 = vmatpush.bf16.msra.mxu0 %v503
        %587 = vmatmul.bf16.gmra.mxu0 %v353
        %v588 = vpop.f32.mrf.mxu0
        %v589 = vadd.f32 %v575, %v588
        %v590 = vpop.f32.mrf.mxu0
        %v591 = vadd.f32 %v577, %v590
        %592 = vdwg.mxu0
        %593 = vmatpush.bf16.msra.mxu0 %v518
        %594 = vmatpush.bf16.msra.mxu0 %v517
        %595 = vmatpush.bf16.msra.mxu0 %v516
        %596 = vmatpush.bf16.msra.mxu0 %v515
        %597 = vmatpush.bf16.msra.mxu0 %v514
        %598 = vmatpush.bf16.msra.mxu0 %v513
        %599 = vmatpush.bf16.msra.mxu0 %v512
        %600 = vmatpush.bf16.msra.mxu0 %v511
        %601 = vmatmul.bf16.gmra.mxu0 %v354
        %v602 = vpop.f32.mrf.mxu0
        %v603 = vadd.f32 %v589, %v602
        %v604 = vpop.f32.mrf.mxu0
        %v605 = vadd.f32 %v591, %v604
        %606 = vdwg.mxu0
        %v607 = vadd.f32 %v269, %v603
        %v608 = vadd.f32 %v270, %v605
        %609 = vst [vmem:[#allocation2] sm:$0xff] %v607
        %610 = vst [vmem:[#allocation2 + $0x8] sm:$0xff] %v608
        %p611 = scmp.eq.s32.totalorder %s16, 1
        // Predicated region
        $region68: #{discriminator_mwm_forward.6} parent=58 // pred_check
          %p612 = pneg %p611
        $region69: #{discriminator_mwm_forward.6} parent=58 // pred_check_branch
          %614 = sbr.rel (%p612) target = $region71
        $region70: #{discriminator_mwm_forward.6} parent=58 // pred_region
          %v615 = vld [vmem:[#allocation2] sm:$0xff]
          %v616 = vld [vmem:[#allocation2 + $0x8] sm:$0xff]
          %v617 = vadd.f32 %v615, %v616
          %v618 = vrot.slane %v617, 4
          %v619 = vadd.f32 %v617, %v618
          %v620 = vrot.slane %v619, 2
          %v621 = vadd.f32 %v619, %v620
          %v622 = vrot.slane %v621, 1
          %v623 = vadd.f32 %v621, %v622
          %v624 = vmul.f32 %v623, 0.0625
          %v625 = vsub.f32 %v615, %v624
          %v626 = vsub.f32 %v616, %v624
          %v627 = vmul.f32 %v625, %v625
          %v628 = vmul.f32 %v626, %v626
          %v629 = vadd.f32 %v627, %v628
          %v630 = vrot.slane %v629, 4
          %v631 = vadd.f32 %v629, %v630
          %v632 = vrot.slane %v631, 2
          %v633 = vadd.f32 %v631, %v632
          %v634 = vrot.slane %v633, 1
          %v635 = vadd.f32 %v633, %v634
          %v636 = vmul.f32 %v635, 0.0625
          %v637 = vadd.f32 %v636, 1e-05
          %v638 = vrsqrt.pop %v637
          %v639 = vmul.f32 %v638, %v637
          %v640 = vmul.f32 %v639, %v638
          %v641 = vmul.f32 0.5, %v640
          %v642 = vsub.f32 1.5, %v641
          %v643 = vmul.f32 %v638, %v642
          %vm644 = vweird.f32 %v637
          %vm645 = vweird.f32 %v638
          %vm646 = vmor %vm644, %vm645
          %v647 = vsel %vm646, %v638, %v643
          %v648 = vmul.f32 %v625, %v647
          %v649 = vmul.f32 %v626, %v647
          %v650 = vld [vmem:[%s3] sm:$0x1]
          %v652 = vperm.slane %v650, 0
          %v654 = vmul.f32 %v648, %v652
          %v655 = vmul.f32 %v649, %v652
          %v656 = vld [vmem:[%s4] sm:$0x1]
          %v658 = vperm.slane %v656, 0
          %v660 = vadd.f32 %v654, %v658
          %v661 = vadd.f32 %v655, %v658
          %v662 = vmul.f32 %v660, 0.2
          %v663 = vmul.f32 %v661, 0.2
          %v664 = vmax.f32 %v660, %v662
          %v665 = vmax.f32 %v661, %v663
          %v666 = vpack.c.bf16 %v664, %v664
          %v667 = vpack.c.bf16 %v665, %v665
          %668 = vst [vmem:[%s5] sm:$0xf] %v666
          %669 = vst [vmem:[%s5 + $0x4] sm:$0xf] %v667
        $region71: #{discriminator_mwm_forward.6} parent=58 // pred_fallthru
          _
        // Predicated region
        $region72: #{discriminator_mwm_forward.6} parent=58 // pred_check
          %p670 = pneg %p144
        $region73: #{discriminator_mwm_forward.6} parent=58 // pred_check_branch
          %672 = sbr.rel (%p670) target = $region75
        $region74: #{discriminator_mwm_forward.6} parent=58 // pred_region
          _
        $region75: #{discriminator_mwm_forward.6} parent=58 // pred_fallthru
          _
        // Predicated region
        $region76: #{discriminator_mwm_forward.6} parent=58 // pred_check
          %p673 = pneg %p144
        $region77: #{discriminator_mwm_forward.6} parent=58 // pred_check_branch
          %675 = sbr.rel (%p673) target = $region79
        $region78: #{discriminator_mwm_forward.6} parent=58 // pred_region
          _
        $region79: #{discriminator_mwm_forward.6} parent=58 // pred_fallthru
          _
      $region59: #{discriminator_mwm_forward.6} parent=5 // pred_fallthru
        _
      %p676 = scmp.le.s32.totalorder 2, %s11
      // Predicated region
      $region80: #{discriminator_mwm_forward.6} parent=5 // pred_check
        %p677 = pneg %p676
      $region81: #{discriminator_mwm_forward.6} parent=5 // pred_check_branch
        %679 = sbr.rel (%p677) target = $region83
      $region82: #{discriminator_mwm_forward.6} parent=5 // pred_region
        %s680 = ssub.s32 %s11, 2
      $region83: #{discriminator_mwm_forward.6} parent=5 // pred_fallthru
        _
    $region6: #{discriminator_mwm_forward.6} parent=1 // loop_footer
      %s15 = sadd.s32 1, %s11
    $region7: #{discriminator_mwm_forward.6} parent=1 // loop_footer_branch
      %10 = sbr.rel target = $region3
    $region8: #{discriminator_mwm_forward.6} parent=1 // loop_exit
      _

// kernel: discriminator_mwm_forward.7
$region0: #{discriminator_mwm_forward.7}
  #allocation0 [shape = 'u32[]', space=smem, size = 0x4, offset = 0x4, fixed_abs, tag = 'smem constant byte address 0x4 - core index']
  #allocation1 [shape = 'u32[72,128]{1,0:T(1,128)}', space=vmem, size = 0x9000, scoped, tag = 'internal scratch']
  %s0 = inlined_call_operand.vmem [shape: bf16[4,512], index: 0, kind: input, shape index: {}]
  %s1 = inlined_call_operand.vmem [shape: bf16[512,1024], index: 1, kind: input, shape index: {}]
  %s2 = inlined_call_operand.vmem [shape: f32[1,1024], index: 2, kind: input, shape index: {}]
  %s3 = inlined_call_operand.vmem [shape: f32[1,1024], index: 3, kind: input, shape index: {}]
  %s4 = inlined_call_operand.vmem [shape: f32[1,1024], index: 4, kind: input, shape index: {}]
  %s5 = inlined_call_operand.vmem [shape: f32[1024,13], index: 5, kind: input, shape index: {}]
  %s6 = inlined_call_operand.vmem [shape: f32[1,13], index: 6, kind: input, shape index: {}]
  %s7 = inlined_call_operand.vmem [shape: f32[4,13], index: 7, kind: output, shape index: {}]
  %s8 = sld [smem:[#allocation0]]
  $region38: #{discriminator_mwm_forward.7} parent=0
    _
  %s10 = ssub.s32 1, %s8
  %s11 = scalar_select 0, %s10, %s8
  // Predicated region
  $region2: #{discriminator_mwm_forward.7} parent=0 // pred_check
    _
  $region3: #{discriminator_mwm_forward.7} parent=0 // pred_check_branch
    %13 = sbr.rel (0) target = $region5
  $region4: #{discriminator_mwm_forward.7} parent=0 // pred_region
    _
  $region5: #{discriminator_mwm_forward.7} parent=0 // pred_fallthru
    _
  // Predicated region
  $region6: #{discriminator_mwm_forward.7} parent=0 // pred_check
    _
  $region7: #{discriminator_mwm_forward.7} parent=0 // pred_check_branch
    %15 = sbr.rel (0) target = $region9
  $region8: #{discriminator_mwm_forward.7} parent=0 // pred_region
    _
  $region9: #{discriminator_mwm_forward.7} parent=0 // pred_fallthru
    _
  // Predicated region
  $region10: #{discriminator_mwm_forward.7} parent=0 // pred_check
    _
  $region11: #{discriminator_mwm_forward.7} parent=0 // pred_check_branch
    %17 = sbr.rel (0) target = $region13
  $region12: #{discriminator_mwm_forward.7} parent=0 // pred_region
    _
  $region13: #{discriminator_mwm_forward.7} parent=0 // pred_fallthru
    _
  // Predicated region
  $region14: #{discriminator_mwm_forward.7} parent=0 // pred_check
    _
  $region15: #{discriminator_mwm_forward.7} parent=0 // pred_check_branch
    %19 = sbr.rel (0) target = $region17
  $region16: #{discriminator_mwm_forward.7} parent=0 // pred_region
    _
  $region17: #{discriminator_mwm_forward.7} parent=0 // pred_fallthru
    _
  // Predicated region
  $region18: #{discriminator_mwm_forward.7} parent=0 // pred_check
    _
  $region19: #{discriminator_mwm_forward.7} parent=0 // pred_check_branch
    %21 = sbr.rel (0) target = $region21
  $region20: #{discriminator_mwm_forward.7} parent=0 // pred_region
    _
  $region21: #{discriminator_mwm_forward.7} parent=0 // pred_fallthru
    _
  // Predicated region
  $region22: #{discriminator_mwm_forward.7} parent=0 // pred_check
    _
  $region23: #{discriminator_mwm_forward.7} parent=0 // pred_check_branch
    %23 = sbr.rel (0) target = $region25
  $region24: #{discriminator_mwm_forward.7} parent=0 // pred_region
    _
  $region25: #{discriminator_mwm_forward.7} parent=0 // pred_fallthru
    _
  // Predicated region
  $region26: #{discriminator_mwm_forward.7} parent=0 // pred_check
    _
  $region27: #{discriminator_mwm_forward.7} parent=0 // pred_check_branch
    %25 = sbr.rel (0) target = $region29
  $region28: #{discriminator_mwm_forward.7} parent=0 // pred_region
    _
  $region29: #{discriminator_mwm_forward.7} parent=0 // pred_fallthru
    _
  %v26 = vld [vmem:[%s0] sm:$0xff]
  %v27 = vld [vmem:[%s1] sm:$0xff]
  %v28 = vld [vmem:[%s1 + $0x8] sm:$0xff]
  %v29 = vld [vmem:[%s1 + $0x10] sm:$0xff]
  %v30 = vld [vmem:[%s1 + $0x18] sm:$0xff]
  %v31 = vld [vmem:[%s1 + $0x20] sm:$0xff]
  %v32 = vld [vmem:[%s1 + $0x28] sm:$0xff]
  %v33 = vld [vmem:[%s1 + $0x30] sm:$0xff]
  %v34 = vld [vmem:[%s1 + $0x38] sm:$0xff]
  %v35 = vld [vmem:[%s1 + $0x40] sm:$0xff]
  %v36 = vld [vmem:[%s1 + $0x48] sm:$0xff]
  %v37 = vld [vmem:[%s1 + $0x50] sm:$0xff]
  %v38 = vld [vmem:[%s1 + $0x58] sm:$0xff]
  %v39 = vld [vmem:[%s1 + $0x60] sm:$0xff]
  %v40 = vld [vmem:[%s1 + $0x68] sm:$0xff]
  %v41 = vld [vmem:[%s1 + $0x70] sm:$0xff]
  %v42 = vld [vmem:[%s1 + $0x78] sm:$0xff]
  %v43 = vld [vmem:[%s1 + $0x80] sm:$0xff]
  %v44 = vld [vmem:[%s1 + $0x88] sm:$0xff]
  %v45 = vld [vmem:[%s1 + $0x90] sm:$0xff]
  %v46 = vld [vmem:[%s1 + $0x98] sm:$0xff]
  %v47 = vld [vmem:[%s1 + $0xa0] sm:$0xff]
  %v48 = vld [vmem:[%s1 + $0xa8] sm:$0xff]
  %v49 = vld [vmem:[%s1 + $0xb0] sm:$0xff]
  %v50 = vld [vmem:[%s1 + $0xb8] sm:$0xff]
  %v51 = vld [vmem:[%s1 + $0xc0] sm:$0xff]
  %v52 = vld [vmem:[%s1 + $0xc8] sm:$0xff]
  %v53 = vld [vmem:[%s1 + $0xd0] sm:$0xff]
  %v54 = vld [vmem:[%s1 + $0xd8] sm:$0xff]
  %v55 = vld [vmem:[%s1 + $0xe0] sm:$0xff]
  %v56 = vld [vmem:[%s1 + $0xe8] sm:$0xff]
  %v57 = vld [vmem:[%s1 + $0xf0] sm:$0xff]
  %v58 = vld [vmem:[%s1 + $0xf8] sm:$0xff]
  %v59 = vld [vmem:[%s1 + $0x100] sm:$0xff]
  %v60 = vld [vmem:[%s1 + $0x108] sm:$0xff]
  %v61 = vld [vmem:[%s1 + $0x110] sm:$0xff]
  %v62 = vld [vmem:[%s1 + $0x118] sm:$0xff]
  %v63 = vld [vmem:[%s1 + $0x120] sm:$0xff]
  %v64 = vld [vmem:[%s1 + $0x128] sm:$0xff]
  %v65 = vld [vmem:[%s1 + $0x130] sm:$0xff]
  %v66 = vld [vmem:[%s1 + $0x138] sm:$0xff]
  %v67 = vld [vmem:[%s1 + $0x140] sm:$0xff]
  %v68 = vld [vmem:[%s1 + $0x148] sm:$0xff]
  %v69 = vld [vmem:[%s1 + $0x150] sm:$0xff]
  %v70 = vld [vmem:[%s1 + $0x158] sm:$0xff]
  %v71 = vld [vmem:[%s1 + $0x160] sm:$0xff]
  %v72 = vld [vmem:[%s1 + $0x168] sm:$0xff]
  %v73 = vld [vmem:[%s1 + $0x170] sm:$0xff]
  %v74 = vld [vmem:[%s1 + $0x178] sm:$0xff]
  %v75 = vld [vmem:[%s1 + $0x180] sm:$0xff]
  %v76 = vld [vmem:[%s1 + $0x188] sm:$0xff]
  %v77 = vld [vmem:[%s1 + $0x190] sm:$0xff]
  %v78 = vld [vmem:[%s1 + $0x198] sm:$0xff]
  %v79 = vld [vmem:[%s1 + $0x1a0] sm:$0xff]
  %v80 = vld [vmem:[%s1 + $0x1a8] sm:$0xff]
  %v81 = vld [vmem:[%s1 + $0x1b0] sm:$0xff]
  %v82 = vld [vmem:[%s1 + $0x1b8] sm:$0xff]
  %v83 = vld [vmem:[%s1 + $0x1c0] sm:$0xff]
  %v84 = vld [vmem:[%s1 + $0x1c8] sm:$0xff]
  %v85 = vld [vmem:[%s1 + $0x1d0] sm:$0xff]
  %v86 = vld [vmem:[%s1 + $0x1d8] sm:$0xff]
  %v87 = vld [vmem:[%s1 + $0x1e0] sm:$0xff]
  %v88 = vld [vmem:[%s1 + $0x1e8] sm:$0xff]
  %v89 = vld [vmem:[%s1 + $0x1f0] sm:$0xff]
  %v90 = vld [vmem:[%s1 + $0x1f8] sm:$0xff]
  %v91 = vld [vmem:[%s1 + $0x200] sm:$0xff]
  %v92 = vld [vmem:[%s1 + $0x208] sm:$0xff]
  %v93 = vld [vmem:[%s1 + $0x210] sm:$0xff]
  %v94 = vld [vmem:[%s1 + $0x218] sm:$0xff]
  %v95 = vld [vmem:[%s1 + $0x220] sm:$0xff]
  %v96 = vld [vmem:[%s1 + $0x228] sm:$0xff]
  %v97 = vld [vmem:[%s1 + $0x230] sm:$0xff]
  %v98 = vld [vmem:[%s1 + $0x238] sm:$0xff]
  %v99 = vld [vmem:[%s1 + $0x240] sm:$0xff]
  %v100 = vld [vmem:[%s1 + $0x248] sm:$0xff]
  %v101 = vld [vmem:[%s1 + $0x250] sm:$0xff]
  %v102 = vld [vmem:[%s1 + $0x258] sm:$0xff]
  %v103 = vld [vmem:[%s1 + $0x260] sm:$0xff]
  %v104 = vld [vmem:[%s1 + $0x268] sm:$0xff]
  %v105 = vld [vmem:[%s1 + $0x270] sm:$0xff]
  %v106 = vld [vmem:[%s1 + $0x278] sm:$0xff]
  %v107 = vld [vmem:[%s1 + $0x280] sm:$0xff]
  %v108 = vld [vmem:[%s1 + $0x288] sm:$0xff]
  %v109 = vld [vmem:[%s1 + $0x290] sm:$0xff]
  %v110 = vld [vmem:[%s1 + $0x298] sm:$0xff]
  %v111 = vld [vmem:[%s1 + $0x2a0] sm:$0xff]
  %v112 = vld [vmem:[%s1 + $0x2a8] sm:$0xff]
  %v113 = vld [vmem:[%s1 + $0x2b0] sm:$0xff]
  %v114 = vld [vmem:[%s1 + $0x2b8] sm:$0xff]
  %v115 = vld [vmem:[%s1 + $0x2c0] sm:$0xff]
  %v116 = vld [vmem:[%s1 + $0x2c8] sm:$0xff]
  %v117 = vld [vmem:[%s1 + $0x2d0] sm:$0xff]
  %v118 = vld [vmem:[%s1 + $0x2d8] sm:$0xff]
  %v119 = vld [vmem:[%s1 + $0x2e0] sm:$0xff]
  %v120 = vld [vmem:[%s1 + $0x2e8] sm:$0xff]
  %v121 = vld [vmem:[%s1 + $0x2f0] sm:$0xff]
  %v122 = vld [vmem:[%s1 + $0x2f8] sm:$0xff]
  %v123 = vld [vmem:[%s1 + $0x300] sm:$0xff]
  %v124 = vld [vmem:[%s1 + $0x308] sm:$0xff]
  %v125 = vld [vmem:[%s1 + $0x310] sm:$0xff]
  %v126 = vld [vmem:[%s1 + $0x318] sm:$0xff]
  %v127 = vld [vmem:[%s1 + $0x320] sm:$0xff]
  %v128 = vld [vmem:[%s1 + $0x328] sm:$0xff]
  %v129 = vld [vmem:[%s1 + $0x330] sm:$0xff]
  %v130 = vld [vmem:[%s1 + $0x338] sm:$0xff]
  %v131 = vld [vmem:[%s1 + $0x340] sm:$0xff]
  %v132 = vld [vmem:[%s1 + $0x348] sm:$0xff]
  %v133 = vld [vmem:[%s1 + $0x350] sm:$0xff]
  %v134 = vld [vmem:[%s1 + $0x358] sm:$0xff]
  %v135 = vld [vmem:[%s1 + $0x360] sm:$0xff]
  %v136 = vld [vmem:[%s1 + $0x368] sm:$0xff]
  %v137 = vld [vmem:[%s1 + $0x370] sm:$0xff]
  %v138 = vld [vmem:[%s1 + $0x378] sm:$0xff]
  %v139 = vld [vmem:[%s1 + $0x380] sm:$0xff]
  %v140 = vld [vmem:[%s1 + $0x388] sm:$0xff]
  %v141 = vld [vmem:[%s1 + $0x390] sm:$0xff]
  %v142 = vld [vmem:[%s1 + $0x398] sm:$0xff]
  %v143 = vld [vmem:[%s1 + $0x3a0] sm:$0xff]
  %v144 = vld [vmem:[%s1 + $0x3a8] sm:$0xff]
  %v145 = vld [vmem:[%s1 + $0x3b0] sm:$0xff]
  %v146 = vld [vmem:[%s1 + $0x3b8] sm:$0xff]
  %v147 = vld [vmem:[%s1 + $0x3c0] sm:$0xff]
  %v148 = vld [vmem:[%s1 + $0x3c8] sm:$0xff]
  %v149 = vld [vmem:[%s1 + $0x3d0] sm:$0xff]
  %v150 = vld [vmem:[%s1 + $0x3d8] sm:$0xff]
  %v151 = vld [vmem:[%s1 + $0x3e0] sm:$0xff]
  %v152 = vld [vmem:[%s1 + $0x3e8] sm:$0xff]
  %v153 = vld [vmem:[%s1 + $0x3f0] sm:$0xff]
  %v154 = vld [vmem:[%s1 + $0x3f8] sm:$0xff]
  %v155 = vld [vmem:[%s1 + $0x400] sm:$0xff]
  %v156 = vld [vmem:[%s1 + $0x408] sm:$0xff]
  %v157 = vld [vmem:[%s1 + $0x410] sm:$0xff]
  %v158 = vld [vmem:[%s1 + $0x418] sm:$0xff]
  %v159 = vld [vmem:[%s1 + $0x420] sm:$0xff]
  %v160 = vld [vmem:[%s1 + $0x428] sm:$0xff]
  %v161 = vld [vmem:[%s1 + $0x430] sm:$0xff]
  %v162 = vld [vmem:[%s1 + $0x438] sm:$0xff]
  %v163 = vld [vmem:[%s1 + $0x440] sm:$0xff]
  %v164 = vld [vmem:[%s1 + $0x448] sm:$0xff]
  %v165 = vld [vmem:[%s1 + $0x450] sm:$0xff]
  %v166 = vld [vmem:[%s1 + $0x458] sm:$0xff]
  %v167 = vld [vmem:[%s1 + $0x460] sm:$0xff]
  %v168 = vld [vmem:[%s1 + $0x468] sm:$0xff]
  %v169 = vld [vmem:[%s1 + $0x470] sm:$0xff]
  %v170 = vld [vmem:[%s1 + $0x478] sm:$0xff]
  %v171 = vld [vmem:[%s1 + $0x480] sm:$0xff]
  %v172 = vld [vmem:[%s1 + $0x488] sm:$0xff]
  %v173 = vld [vmem:[%s1 + $0x490] sm:$0xff]
  %v174 = vld [vmem:[%s1 + $0x498] sm:$0xff]
  %v175 = vld [vmem:[%s1 + $0x4a0] sm:$0xff]
  %v176 = vld [vmem:[%s1 + $0x4a8] sm:$0xff]
  %v177 = vld [vmem:[%s1 + $0x4b0] sm:$0xff]
  %v178 = vld [vmem:[%s1 + $0x4b8] sm:$0xff]
  %v179 = vld [vmem:[%s1 + $0x4c0] sm:$0xff]
  %v180 = vld [vmem:[%s1 + $0x4c8] sm:$0xff]
  %v181 = vld [vmem:[%s1 + $0x4d0] sm:$0xff]
  %v182 = vld [vmem:[%s1 + $0x4d8] sm:$0xff]
  %v183 = vld [vmem:[%s1 + $0x4e0] sm:$0xff]
  %v184 = vld [vmem:[%s1 + $0x4e8] sm:$0xff]
  %v185 = vld [vmem:[%s1 + $0x4f0] sm:$0xff]
  %v186 = vld [vmem:[%s1 + $0x4f8] sm:$0xff]
  %v187 = vld [vmem:[%s1 + $0x500] sm:$0xff]
  %v188 = vld [vmem:[%s1 + $0x508] sm:$0xff]
  %v189 = vld [vmem:[%s1 + $0x510] sm:$0xff]
  %v190 = vld [vmem:[%s1 + $0x518] sm:$0xff]
  %v191 = vld [vmem:[%s1 + $0x520] sm:$0xff]
  %v192 = vld [vmem:[%s1 + $0x528] sm:$0xff]
  %v193 = vld [vmem:[%s1 + $0x530] sm:$0xff]
  %v194 = vld [vmem:[%s1 + $0x538] sm:$0xff]
  %v195 = vld [vmem:[%s1 + $0x540] sm:$0xff]
  %v196 = vld [vmem:[%s1 + $0x548] sm:$0xff]
  %v197 = vld [vmem:[%s1 + $0x550] sm:$0xff]
  %v198 = vld [vmem:[%s1 + $0x558] sm:$0xff]
  %v199 = vld [vmem:[%s1 + $0x560] sm:$0xff]
  %v200 = vld [vmem:[%s1 + $0x568] sm:$0xff]
  %v201 = vld [vmem:[%s1 + $0x570] sm:$0xff]
  %v202 = vld [vmem:[%s1 + $0x578] sm:$0xff]
  %v203 = vld [vmem:[%s1 + $0x580] sm:$0xff]
  %v204 = vld [vmem:[%s1 + $0x588] sm:$0xff]
  %v205 = vld [vmem:[%s1 + $0x590] sm:$0xff]
  %v206 = vld [vmem:[%s1 + $0x598] sm:$0xff]
  %v207 = vld [vmem:[%s1 + $0x5a0] sm:$0xff]
  %v208 = vld [vmem:[%s1 + $0x5a8] sm:$0xff]
  %v209 = vld [vmem:[%s1 + $0x5b0] sm:$0xff]
  %v210 = vld [vmem:[%s1 + $0x5b8] sm:$0xff]
  %v211 = vld [vmem:[%s1 + $0x5c0] sm:$0xff]
  %v212 = vld [vmem:[%s1 + $0x5c8] sm:$0xff]
  %v213 = vld [vmem:[%s1 + $0x5d0] sm:$0xff]
  %v214 = vld [vmem:[%s1 + $0x5d8] sm:$0xff]
  %v215 = vld [vmem:[%s1 + $0x5e0] sm:$0xff]
  %v216 = vld [vmem:[%s1 + $0x5e8] sm:$0xff]
  %v217 = vld [vmem:[%s1 + $0x5f0] sm:$0xff]
  %v218 = vld [vmem:[%s1 + $0x5f8] sm:$0xff]
  %v219 = vld [vmem:[%s1 + $0x600] sm:$0xff]
  %v220 = vld [vmem:[%s1 + $0x608] sm:$0xff]
  %v221 = vld [vmem:[%s1 + $0x610] sm:$0xff]
  %v222 = vld [vmem:[%s1 + $0x618] sm:$0xff]
  %v223 = vld [vmem:[%s1 + $0x620] sm:$0xff]
  %v224 = vld [vmem:[%s1 + $0x628] sm:$0xff]
  %v225 = vld [vmem:[%s1 + $0x630] sm:$0xff]
  %v226 = vld [vmem:[%s1 + $0x638] sm:$0xff]
  %v227 = vld [vmem:[%s1 + $0x640] sm:$0xff]
  %v228 = vld [vmem:[%s1 + $0x648] sm:$0xff]
  %v229 = vld [vmem:[%s1 + $0x650] sm:$0xff]
  %v230 = vld [vmem:[%s1 + $0x658] sm:$0xff]
  %v231 = vld [vmem:[%s1 + $0x660] sm:$0xff]
  %v232 = vld [vmem:[%s1 + $0x668] sm:$0xff]
  %v233 = vld [vmem:[%s1 + $0x670] sm:$0xff]
  %v234 = vld [vmem:[%s1 + $0x678] sm:$0xff]
  %v235 = vld [vmem:[%s1 + $0x680] sm:$0xff]
  %v236 = vld [vmem:[%s1 + $0x688] sm:$0xff]
  %v237 = vld [vmem:[%s1 + $0x690] sm:$0xff]
  %v238 = vld [vmem:[%s1 + $0x698] sm:$0xff]
  %v239 = vld [vmem:[%s1 + $0x6a0] sm:$0xff]
  %v240 = vld [vmem:[%s1 + $0x6a8] sm:$0xff]
  %v241 = vld [vmem:[%s1 + $0x6b0] sm:$0xff]
  %v242 = vld [vmem:[%s1 + $0x6b8] sm:$0xff]
  %v243 = vld [vmem:[%s1 + $0x6c0] sm:$0xff]
  %v244 = vld [vmem:[%s1 + $0x6c8] sm:$0xff]
  %v245 = vld [vmem:[%s1 + $0x6d0] sm:$0xff]
  %v246 = vld [vmem:[%s1 + $0x6d8] sm:$0xff]
  %v247 = vld [vmem:[%s1 + $0x6e0] sm:$0xff]
  %v248 = vld [vmem:[%s1 + $0x6e8] sm:$0xff]
  %v249 = vld [vmem:[%s1 + $0x6f0] sm:$0xff]
  %v250 = vld [vmem:[%s1 + $0x6f8] sm:$0xff]
  %v251 = vld [vmem:[%s1 + $0x700] sm:$0xff]
  %v252 = vld [vmem:[%s1 + $0x708] sm:$0xff]
  %v253 = vld [vmem:[%s1 + $0x710] sm:$0xff]
  %v254 = vld [vmem:[%s1 + $0x718] sm:$0xff]
  %v255 = vld [vmem:[%s1 + $0x720] sm:$0xff]
  %v256 = vld [vmem:[%s1 + $0x728] sm:$0xff]
  %v257 = vld [vmem:[%s1 + $0x730] sm:$0xff]
  %v258 = vld [vmem:[%s1 + $0x738] sm:$0xff]
  %v259 = vld [vmem:[%s1 + $0x740] sm:$0xff]
  %v260 = vld [vmem:[%s1 + $0x748] sm:$0xff]
  %v261 = vld [vmem:[%s1 + $0x750] sm:$0xff]
  %v262 = vld [vmem:[%s1 + $0x758] sm:$0xff]
  %v263 = vld [vmem:[%s1 + $0x760] sm:$0xff]
  %v264 = vld [vmem:[%s1 + $0x768] sm:$0xff]
  %v265 = vld [vmem:[%s1 + $0x770] sm:$0xff]
  %v266 = vld [vmem:[%s1 + $0x778] sm:$0xff]
  %v267 = vld [vmem:[%s1 + $0x780] sm:$0xff]
  %v268 = vld [vmem:[%s1 + $0x788] sm:$0xff]
  %v269 = vld [vmem:[%s1 + $0x790] sm:$0xff]
  %v270 = vld [vmem:[%s1 + $0x798] sm:$0xff]
  %v271 = vld [vmem:[%s1 + $0x7a0] sm:$0xff]
  %v272 = vld [vmem:[%s1 + $0x7a8] sm:$0xff]
  %v273 = vld [vmem:[%s1 + $0x7b0] sm:$0xff]
  %v274 = vld [vmem:[%s1 + $0x7b8] sm:$0xff]
  %v275 = vld [vmem:[%s1 + $0x7c0] sm:$0xff]
  %v276 = vld [vmem:[%s1 + $0x7c8] sm:$0xff]
  %v277 = vld [vmem:[%s1 + $0x7d0] sm:$0xff]
  %v278 = vld [vmem:[%s1 + $0x7d8] sm:$0xff]
  %v279 = vld [vmem:[%s1 + $0x7e0] sm:$0xff]
  %v280 = vld [vmem:[%s1 + $0x7e8] sm:$0xff]
  %v281 = vld [vmem:[%s1 + $0x7f0] sm:$0xff]
  %v282 = vld [vmem:[%s1 + $0x7f8] sm:$0xff]
  %v283 = vld [vmem:[%s2] sm:$0xff]
  %v285 = vperm.slane %v283, 0
  %v286 = vperm.slane %v283, 1
  %v287 = vperm.slane %v283, 2
  %v288 = vperm.slane %v283, 3
  %v289 = vperm.slane %v283, 4
  %v290 = vperm.slane %v283, 5
  %v291 = vperm.slane %v283, 6
  %v292 = vperm.slane %v283, 7
  %302 = vst [vmem:[#allocation1] ss:$4 sm:$0xff] %v26
  %v303 = vld.sshfl [vmem:[#allocation1] sm:$0xff pattern:$0x73625140]
  %v304 = vld.sshfl [vmem:[#allocation1 + $0x8] sm:$0xff pattern:$0x73625140]
  %v305 = vld.sshfl [vmem:[#allocation1 + $0x10] sm:$0xff pattern:$0x73625140]
  %v306 = vld.sshfl [vmem:[#allocation1 + $0x18] sm:$0xff pattern:$0x73625140]
  %v567 = vunpack.c.l.b16 %v27
  %v568 = vunpack.c.h.b16 %v27
  %v569 = vunpack.c.l.b16 %v28
  %v570 = vunpack.c.h.b16 %v28
  %v571 = vunpack.c.l.b16 %v29
  %v572 = vunpack.c.h.b16 %v29
  %v573 = vunpack.c.l.b16 %v30
  %v574 = vunpack.c.h.b16 %v30
  %v575 = vunpack.c.l.b16 %v31
  %v576 = vunpack.c.h.b16 %v31
  %v577 = vunpack.c.l.b16 %v32
  %v578 = vunpack.c.h.b16 %v32
  %v579 = vunpack.c.l.b16 %v33
  %v580 = vunpack.c.h.b16 %v33
  %v581 = vunpack.c.l.b16 %v34
  %v582 = vunpack.c.h.b16 %v34
  %v583 = vunpack.c.l.b16 %v35
  %v584 = vunpack.c.h.b16 %v35
  %v585 = vunpack.c.l.b16 %v36
  %v586 = vunpack.c.h.b16 %v36
  %v587 = vunpack.c.l.b16 %v37
  %v588 = vunpack.c.h.b16 %v37
  %v589 = vunpack.c.l.b16 %v38
  %v590 = vunpack.c.h.b16 %v38
  %v591 = vunpack.c.l.b16 %v39
  %v592 = vunpack.c.h.b16 %v39
  %v593 = vunpack.c.l.b16 %v40
  %v594 = vunpack.c.h.b16 %v40
  %v595 = vunpack.c.l.b16 %v41
  %v596 = vunpack.c.h.b16 %v41
  %v597 = vunpack.c.l.b16 %v42
  %v598 = vunpack.c.h.b16 %v42
  %v599 = vunpack.c.l.b16 %v43
  %v600 = vunpack.c.h.b16 %v43
  %v601 = vunpack.c.l.b16 %v44
  %v602 = vunpack.c.h.b16 %v44
  %v603 = vunpack.c.l.b16 %v45
  %v604 = vunpack.c.h.b16 %v45
  %v605 = vunpack.c.l.b16 %v46
  %v606 = vunpack.c.h.b16 %v46
  %v607 = vunpack.c.l.b16 %v47
  %v608 = vunpack.c.h.b16 %v47
  %v609 = vunpack.c.l.b16 %v48
  %v610 = vunpack.c.h.b16 %v48
  %v611 = vunpack.c.l.b16 %v49
  %v612 = vunpack.c.h.b16 %v49
  %v613 = vunpack.c.l.b16 %v50
  %v614 = vunpack.c.h.b16 %v50
  %v615 = vunpack.c.l.b16 %v51
  %v616 = vunpack.c.h.b16 %v51
  %v617 = vunpack.c.l.b16 %v52
  %v618 = vunpack.c.h.b16 %v52
  %v619 = vunpack.c.l.b16 %v53
  %v620 = vunpack.c.h.b16 %v53
  %v621 = vunpack.c.l.b16 %v54
  %v622 = vunpack.c.h.b16 %v54
  %v623 = vunpack.c.l.b16 %v55
  %v624 = vunpack.c.h.b16 %v55
  %v625 = vunpack.c.l.b16 %v56
  %v626 = vunpack.c.h.b16 %v56
  %v627 = vunpack.c.l.b16 %v57
  %v628 = vunpack.c.h.b16 %v57
  %v629 = vunpack.c.l.b16 %v58
  %v630 = vunpack.c.h.b16 %v58
  %v631 = vunpack.c.l.b16 %v59
  %v632 = vunpack.c.h.b16 %v59
  %v633 = vunpack.c.l.b16 %v60
  %v634 = vunpack.c.h.b16 %v60
  %v635 = vunpack.c.l.b16 %v61
  %v636 = vunpack.c.h.b16 %v61
  %v637 = vunpack.c.l.b16 %v62
  %v638 = vunpack.c.h.b16 %v62
  %v639 = vunpack.c.l.b16 %v63
  %v640 = vunpack.c.h.b16 %v63
  %v641 = vunpack.c.l.b16 %v64
  %v642 = vunpack.c.h.b16 %v64
  %v643 = vunpack.c.l.b16 %v65
  %v644 = vunpack.c.h.b16 %v65
  %v645 = vunpack.c.l.b16 %v66
  %v646 = vunpack.c.h.b16 %v66
  %v647 = vunpack.c.l.b16 %v67
  %v648 = vunpack.c.h.b16 %v67
  %v649 = vunpack.c.l.b16 %v68
  %v650 = vunpack.c.h.b16 %v68
  %v651 = vunpack.c.l.b16 %v69
  %v652 = vunpack.c.h.b16 %v69
  %v653 = vunpack.c.l.b16 %v70
  %v654 = vunpack.c.h.b16 %v70
  %v655 = vunpack.c.l.b16 %v71
  %v656 = vunpack.c.h.b16 %v71
  %v657 = vunpack.c.l.b16 %v72
  %v658 = vunpack.c.h.b16 %v72
  %v659 = vunpack.c.l.b16 %v73
  %v660 = vunpack.c.h.b16 %v73
  %v661 = vunpack.c.l.b16 %v74
  %v662 = vunpack.c.h.b16 %v74
  %v663 = vunpack.c.l.b16 %v75
  %v664 = vunpack.c.h.b16 %v75
  %v665 = vunpack.c.l.b16 %v76
  %v666 = vunpack.c.h.b16 %v76
  %v667 = vunpack.c.l.b16 %v77
  %v668 = vunpack.c.h.b16 %v77
  %v669 = vunpack.c.l.b16 %v78
  %v670 = vunpack.c.h.b16 %v78
  %v671 = vunpack.c.l.b16 %v79
  %v672 = vunpack.c.h.b16 %v79
  %v673 = vunpack.c.l.b16 %v80
  %v674 = vunpack.c.h.b16 %v80
  %v675 = vunpack.c.l.b16 %v81
  %v676 = vunpack.c.h.b16 %v81
  %v677 = vunpack.c.l.b16 %v82
  %v678 = vunpack.c.h.b16 %v82
  %v679 = vunpack.c.l.b16 %v83
  %v680 = vunpack.c.h.b16 %v83
  %v681 = vunpack.c.l.b16 %v84
  %v682 = vunpack.c.h.b16 %v84
  %v683 = vunpack.c.l.b16 %v85
  %v684 = vunpack.c.h.b16 %v85
  %v685 = vunpack.c.l.b16 %v86
  %v686 = vunpack.c.h.b16 %v86
  %v687 = vunpack.c.l.b16 %v87
  %v688 = vunpack.c.h.b16 %v87
  %v689 = vunpack.c.l.b16 %v88
  %v690 = vunpack.c.h.b16 %v88
  %v691 = vunpack.c.l.b16 %v89
  %v692 = vunpack.c.h.b16 %v89
  %v693 = vunpack.c.l.b16 %v90
  %v694 = vunpack.c.h.b16 %v90
  %v695 = vunpack.c.l.b16 %v91
  %v696 = vunpack.c.h.b16 %v91
  %v697 = vunpack.c.l.b16 %v92
  %v698 = vunpack.c.h.b16 %v92
  %v699 = vunpack.c.l.b16 %v93
  %v700 = vunpack.c.h.b16 %v93
  %v701 = vunpack.c.l.b16 %v94
  %v702 = vunpack.c.h.b16 %v94
  %v703 = vunpack.c.l.b16 %v95
  %v704 = vunpack.c.h.b16 %v95
  %v705 = vunpack.c.l.b16 %v96
  %v706 = vunpack.c.h.b16 %v96
  %v707 = vunpack.c.l.b16 %v97
  %v708 = vunpack.c.h.b16 %v97
  %v709 = vunpack.c.l.b16 %v98
  %v710 = vunpack.c.h.b16 %v98
  %v711 = vunpack.c.l.b16 %v99
  %v712 = vunpack.c.h.b16 %v99
  %v713 = vunpack.c.l.b16 %v100
  %v714 = vunpack.c.h.b16 %v100
  %v715 = vunpack.c.l.b16 %v101
  %v716 = vunpack.c.h.b16 %v101
  %v717 = vunpack.c.l.b16 %v102
  %v718 = vunpack.c.h.b16 %v102
  %v719 = vunpack.c.l.b16 %v103
  %v720 = vunpack.c.h.b16 %v103
  %v721 = vunpack.c.l.b16 %v104
  %v722 = vunpack.c.h.b16 %v104
  %v723 = vunpack.c.l.b16 %v105
  %v724 = vunpack.c.h.b16 %v105
  %v725 = vunpack.c.l.b16 %v106
  %v726 = vunpack.c.h.b16 %v106
  %v727 = vunpack.c.l.b16 %v107
  %v728 = vunpack.c.h.b16 %v107
  %v729 = vunpack.c.l.b16 %v108
  %v730 = vunpack.c.h.b16 %v108
  %v731 = vunpack.c.l.b16 %v109
  %v732 = vunpack.c.h.b16 %v109
  %v733 = vunpack.c.l.b16 %v110
  %v734 = vunpack.c.h.b16 %v110
  %v735 = vunpack.c.l.b16 %v111
  %v736 = vunpack.c.h.b16 %v111
  %v737 = vunpack.c.l.b16 %v112
  %v738 = vunpack.c.h.b16 %v112
  %v739 = vunpack.c.l.b16 %v113
  %v740 = vunpack.c.h.b16 %v113
  %v741 = vunpack.c.l.b16 %v114
  %v742 = vunpack.c.h.b16 %v114
  %v743 = vunpack.c.l.b16 %v115
  %v744 = vunpack.c.h.b16 %v115
  %v745 = vunpack.c.l.b16 %v116
  %v746 = vunpack.c.h.b16 %v116
  %v747 = vunpack.c.l.b16 %v117
  %v748 = vunpack.c.h.b16 %v117
  %v749 = vunpack.c.l.b16 %v118
  %v750 = vunpack.c.h.b16 %v118
  %v751 = vunpack.c.l.b16 %v119
  %v752 = vunpack.c.h.b16 %v119
  %v753 = vunpack.c.l.b16 %v120
  %v754 = vunpack.c.h.b16 %v120
  %v755 = vunpack.c.l.b16 %v121
  %v756 = vunpack.c.h.b16 %v121
  %v757 = vunpack.c.l.b16 %v122
  %v758 = vunpack.c.h.b16 %v122
  %v759 = vunpack.c.l.b16 %v123
  %v760 = vunpack.c.h.b16 %v123
  %v761 = vunpack.c.l.b16 %v124
  %v762 = vunpack.c.h.b16 %v124
  %v763 = vunpack.c.l.b16 %v125
  %v764 = vunpack.c.h.b16 %v125
  %v765 = vunpack.c.l.b16 %v126
  %v766 = vunpack.c.h.b16 %v126
  %v767 = vunpack.c.l.b16 %v127
  %v768 = vunpack.c.h.b16 %v127
  %v769 = vunpack.c.l.b16 %v128
  %v770 = vunpack.c.h.b16 %v128
  %v771 = vunpack.c.l.b16 %v129
  %v772 = vunpack.c.h.b16 %v129
  %v773 = vunpack.c.l.b16 %v130
  %v774 = vunpack.c.h.b16 %v130
  %v775 = vunpack.c.l.b16 %v131
  %v776 = vunpack.c.h.b16 %v131
  %v777 = vunpack.c.l.b16 %v132
  %v778 = vunpack.c.h.b16 %v132
  %v779 = vunpack.c.l.b16 %v133
  %v780 = vunpack.c.h.b16 %v133
  %v781 = vunpack.c.l.b16 %v134
  %v782 = vunpack.c.h.b16 %v134
  %v783 = vunpack.c.l.b16 %v135
  %v784 = vunpack.c.h.b16 %v135
  %v785 = vunpack.c.l.b16 %v136
  %v786 = vunpack.c.h.b16 %v136
  %v787 = vunpack.c.l.b16 %v137
  %v788 = vunpack.c.h.b16 %v137
  %v789 = vunpack.c.l.b16 %v138
  %v790 = vunpack.c.h.b16 %v138
  %v791 = vunpack.c.l.b16 %v139
  %v792 = vunpack.c.h.b16 %v139
  %v793 = vunpack.c.l.b16 %v140
  %v794 = vunpack.c.h.b16 %v140
  %v795 = vunpack.c.l.b16 %v141
  %v796 = vunpack.c.h.b16 %v141
  %v797 = vunpack.c.l.b16 %v142
  %v798 = vunpack.c.h.b16 %v142
  %v799 = vunpack.c.l.b16 %v143
  %v800 = vunpack.c.h.b16 %v143
  %v801 = vunpack.c.l.b16 %v144
  %v802 = vunpack.c.h.b16 %v144
  %v803 = vunpack.c.l.b16 %v145
  %v804 = vunpack.c.h.b16 %v145
  %v805 = vunpack.c.l.b16 %v146
  %v806 = vunpack.c.h.b16 %v146
  %v807 = vunpack.c.l.b16 %v147
  %v808 = vunpack.c.h.b16 %v147
  %v809 = vunpack.c.l.b16 %v148
  %v810 = vunpack.c.h.b16 %v148
  %v811 = vunpack.c.l.b16 %v149
  %v812 = vunpack.c.h.b16 %v149
  %v813 = vunpack.c.l.b16 %v150
  %v814 = vunpack.c.h.b16 %v150
  %v815 = vunpack.c.l.b16 %v151
  %v816 = vunpack.c.h.b16 %v151
  %v817 = vunpack.c.l.b16 %v152
  %v818 = vunpack.c.h.b16 %v152
  %v819 = vunpack.c.l.b16 %v153
  %v820 = vunpack.c.h.b16 %v153
  %v821 = vunpack.c.l.b16 %v154
  %v822 = vunpack.c.h.b16 %v154
  %v823 = vunpack.c.l.b16 %v155
  %v824 = vunpack.c.h.b16 %v155
  %v825 = vunpack.c.l.b16 %v156
  %v826 = vunpack.c.h.b16 %v156
  %v827 = vunpack.c.l.b16 %v157
  %v828 = vunpack.c.h.b16 %v157
  %v829 = vunpack.c.l.b16 %v158
  %v830 = vunpack.c.h.b16 %v158
  %v831 = vunpack.c.l.b16 %v159
  %v832 = vunpack.c.h.b16 %v159
  %v833 = vunpack.c.l.b16 %v160
  %v834 = vunpack.c.h.b16 %v160
  %v835 = vunpack.c.l.b16 %v161
  %v836 = vunpack.c.h.b16 %v161
  %v837 = vunpack.c.l.b16 %v162
  %v838 = vunpack.c.h.b16 %v162
  %v839 = vunpack.c.l.b16 %v163
  %v840 = vunpack.c.h.b16 %v163
  %v841 = vunpack.c.l.b16 %v164
  %v842 = vunpack.c.h.b16 %v164
  %v843 = vunpack.c.l.b16 %v165
  %v844 = vunpack.c.h.b16 %v165
  %v845 = vunpack.c.l.b16 %v166
  %v846 = vunpack.c.h.b16 %v166
  %v847 = vunpack.c.l.b16 %v167
  %v848 = vunpack.c.h.b16 %v167
  %v849 = vunpack.c.l.b16 %v168
  %v850 = vunpack.c.h.b16 %v168
  %v851 = vunpack.c.l.b16 %v169
  %v852 = vunpack.c.h.b16 %v169
  %v853 = vunpack.c.l.b16 %v170
  %v854 = vunpack.c.h.b16 %v170
  %v855 = vunpack.c.l.b16 %v171
  %v856 = vunpack.c.h.b16 %v171
  %v857 = vunpack.c.l.b16 %v172
  %v858 = vunpack.c.h.b16 %v172
  %v859 = vunpack.c.l.b16 %v173
  %v860 = vunpack.c.h.b16 %v173
  %v861 = vunpack.c.l.b16 %v174
  %v862 = vunpack.c.h.b16 %v174
  %v863 = vunpack.c.l.b16 %v175
  %v864 = vunpack.c.h.b16 %v175
  %v865 = vunpack.c.l.b16 %v176
  %v866 = vunpack.c.h.b16 %v176
  %v867 = vunpack.c.l.b16 %v177
  %v868 = vunpack.c.h.b16 %v177
  %v869 = vunpack.c.l.b16 %v178
  %v870 = vunpack.c.h.b16 %v178
  %v871 = vunpack.c.l.b16 %v179
  %v872 = vunpack.c.h.b16 %v179
  %v873 = vunpack.c.l.b16 %v180
  %v874 = vunpack.c.h.b16 %v180
  %v875 = vunpack.c.l.b16 %v181
  %v876 = vunpack.c.h.b16 %v181
  %v877 = vunpack.c.l.b16 %v182
  %v878 = vunpack.c.h.b16 %v182
  %v879 = vunpack.c.l.b16 %v183
  %v880 = vunpack.c.h.b16 %v183
  %v881 = vunpack.c.l.b16 %v184
  %v882 = vunpack.c.h.b16 %v184
  %v883 = vunpack.c.l.b16 %v185
  %v884 = vunpack.c.h.b16 %v185
  %v885 = vunpack.c.l.b16 %v186
  %v886 = vunpack.c.h.b16 %v186
  %v887 = vunpack.c.l.b16 %v187
  %v888 = vunpack.c.h.b16 %v187
  %v889 = vunpack.c.l.b16 %v188
  %v890 = vunpack.c.h.b16 %v188
  %v891 = vunpack.c.l.b16 %v189
  %v892 = vunpack.c.h.b16 %v189
  %v893 = vunpack.c.l.b16 %v190
  %v894 = vunpack.c.h.b16 %v190
  %v895 = vunpack.c.l.b16 %v191
  %v896 = vunpack.c.h.b16 %v191
  %v897 = vunpack.c.l.b16 %v192
  %v898 = vunpack.c.h.b16 %v192
  %v899 = vunpack.c.l.b16 %v193
  %v900 = vunpack.c.h.b16 %v193
  %v901 = vunpack.c.l.b16 %v194
  %v902 = vunpack.c.h.b16 %v194
  %v903 = vunpack.c.l.b16 %v195
  %v904 = vunpack.c.h.b16 %v195
  %v905 = vunpack.c.l.b16 %v196
  %v906 = vunpack.c.h.b16 %v196
  %v907 = vunpack.c.l.b16 %v197
  %v908 = vunpack.c.h.b16 %v197
  %v909 = vunpack.c.l.b16 %v198
  %v910 = vunpack.c.h.b16 %v198
  %v911 = vunpack.c.l.b16 %v199
  %v912 = vunpack.c.h.b16 %v199
  %v913 = vunpack.c.l.b16 %v200
  %v914 = vunpack.c.h.b16 %v200
  %v915 = vunpack.c.l.b16 %v201
  %v916 = vunpack.c.h.b16 %v201
  %v917 = vunpack.c.l.b16 %v202
  %v918 = vunpack.c.h.b16 %v202
  %v919 = vunpack.c.l.b16 %v203
  %v920 = vunpack.c.h.b16 %v203
  %v921 = vunpack.c.l.b16 %v204
  %v922 = vunpack.c.h.b16 %v204
  %v923 = vunpack.c.l.b16 %v205
  %v924 = vunpack.c.h.b16 %v205
  %v925 = vunpack.c.l.b16 %v206
  %v926 = vunpack.c.h.b16 %v206
  %v927 = vunpack.c.l.b16 %v207
  %v928 = vunpack.c.h.b16 %v207
  %v929 = vunpack.c.l.b16 %v208
  %v930 = vunpack.c.h.b16 %v208
  %v931 = vunpack.c.l.b16 %v209
  %v932 = vunpack.c.h.b16 %v209
  %v933 = vunpack.c.l.b16 %v210
  %v934 = vunpack.c.h.b16 %v210
  %v935 = vunpack.c.l.b16 %v211
  %v936 = vunpack.c.h.b16 %v211
  %v937 = vunpack.c.l.b16 %v212
  %v938 = vunpack.c.h.b16 %v212
  %v939 = vunpack.c.l.b16 %v213
  %v940 = vunpack.c.h.b16 %v213
  %v941 = vunpack.c.l.b16 %v214
  %v942 = vunpack.c.h.b16 %v214
  %v943 = vunpack.c.l.b16 %v215
  %v944 = vunpack.c.h.b16 %v215
  %v945 = vunpack.c.l.b16 %v216
  %v946 = vunpack.c.h.b16 %v216
  %v947 = vunpack.c.l.b16 %v217
  %v948 = vunpack.c.h.b16 %v217
  %v949 = vunpack.c.l.b16 %v218
  %v950 = vunpack.c.h.b16 %v218
  %v951 = vunpack.c.l.b16 %v219
  %v952 = vunpack.c.h.b16 %v219
  %v953 = vunpack.c.l.b16 %v220
  %v954 = vunpack.c.h.b16 %v220
  %v955 = vunpack.c.l.b16 %v221
  %v956 = vunpack.c.h.b16 %v221
  %v957 = vunpack.c.l.b16 %v222
  %v958 = vunpack.c.h.b16 %v222
  %v959 = vunpack.c.l.b16 %v223
  %v960 = vunpack.c.h.b16 %v223
  %v961 = vunpack.c.l.b16 %v224
  %v962 = vunpack.c.h.b16 %v224
  %v963 = vunpack.c.l.b16 %v225
  %v964 = vunpack.c.h.b16 %v225
  %v965 = vunpack.c.l.b16 %v226
  %v966 = vunpack.c.h.b16 %v226
  %v967 = vunpack.c.l.b16 %v227
  %v968 = vunpack.c.h.b16 %v227
  %v969 = vunpack.c.l.b16 %v228
  %v970 = vunpack.c.h.b16 %v228
  %v971 = vunpack.c.l.b16 %v229
  %v972 = vunpack.c.h.b16 %v229
  %v973 = vunpack.c.l.b16 %v230
  %v974 = vunpack.c.h.b16 %v230
  %v975 = vunpack.c.l.b16 %v231
  %v976 = vunpack.c.h.b16 %v231
  %v977 = vunpack.c.l.b16 %v232
  %v978 = vunpack.c.h.b16 %v232
  %v979 = vunpack.c.l.b16 %v233
  %v980 = vunpack.c.h.b16 %v233
  %v981 = vunpack.c.l.b16 %v234
  %v982 = vunpack.c.h.b16 %v234
  %v983 = vunpack.c.l.b16 %v235
  %v984 = vunpack.c.h.b16 %v235
  %v985 = vunpack.c.l.b16 %v236
  %v986 = vunpack.c.h.b16 %v236
  %v987 = vunpack.c.l.b16 %v237
  %v988 = vunpack.c.h.b16 %v237
  %v989 = vunpack.c.l.b16 %v238
  %v990 = vunpack.c.h.b16 %v238
  %v991 = vunpack.c.l.b16 %v239
  %v992 = vunpack.c.h.b16 %v239
  %v993 = vunpack.c.l.b16 %v240
  %v994 = vunpack.c.h.b16 %v240
  %v995 = vunpack.c.l.b16 %v241
  %v996 = vunpack.c.h.b16 %v241
  %v997 = vunpack.c.l.b16 %v242
  %v998 = vunpack.c.h.b16 %v242
  %v999 = vunpack.c.l.b16 %v243
  %v1000 = vunpack.c.h.b16 %v243
  %v1001 = vunpack.c.l.b16 %v244
  %v1002 = vunpack.c.h.b16 %v244
  %v1003 = vunpack.c.l.b16 %v245
  %v1004 = vunpack.c.h.b16 %v245
  %v1005 = vunpack.c.l.b16 %v246
  %v1006 = vunpack.c.h.b16 %v246
  %v1007 = vunpack.c.l.b16 %v247
  %v1008 = vunpack.c.h.b16 %v247
  %v1009 = vunpack.c.l.b16 %v248
  %v1010 = vunpack.c.h.b16 %v248
  %v1011 = vunpack.c.l.b16 %v249
  %v1012 = vunpack.c.h.b16 %v249
  %v1013 = vunpack.c.l.b16 %v250
  %v1014 = vunpack.c.h.b16 %v250
  %v1015 = vunpack.c.l.b16 %v251
  %v1016 = vunpack.c.h.b16 %v251
  %v1017 = vunpack.c.l.b16 %v252
  %v1018 = vunpack.c.h.b16 %v252
  %v1019 = vunpack.c.l.b16 %v253
  %v1020 = vunpack.c.h.b16 %v253
  %v1021 = vunpack.c.l.b16 %v254
  %v1022 = vunpack.c.h.b16 %v254
  %v1023 = vunpack.c.l.b16 %v255
  %v1024 = vunpack.c.h.b16 %v255
  %v1025 = vunpack.c.l.b16 %v256
  %v1026 = vunpack.c.h.b16 %v256
  %v1027 = vunpack.c.l.b16 %v257
  %v1028 = vunpack.c.h.b16 %v257
  %v1029 = vunpack.c.l.b16 %v258
  %v1030 = vunpack.c.h.b16 %v258
  %v1031 = vunpack.c.l.b16 %v259
  %v1032 = vunpack.c.h.b16 %v259
  %v1033 = vunpack.c.l.b16 %v260
  %v1034 = vunpack.c.h.b16 %v260
  %v1035 = vunpack.c.l.b16 %v261
  %v1036 = vunpack.c.h.b16 %v261
  %v1037 = vunpack.c.l.b16 %v262
  %v1038 = vunpack.c.h.b16 %v262
  %v1039 = vunpack.c.l.b16 %v263
  %v1040 = vunpack.c.h.b16 %v263
  %v1041 = vunpack.c.l.b16 %v264
  %v1042 = vunpack.c.h.b16 %v264
  %v1043 = vunpack.c.l.b16 %v265
  %v1044 = vunpack.c.h.b16 %v265
  %v1045 = vunpack.c.l.b16 %v266
  %v1046 = vunpack.c.h.b16 %v266
  %v1047 = vunpack.c.l.b16 %v267
  %v1048 = vunpack.c.h.b16 %v267
  %v1049 = vunpack.c.l.b16 %v268
  %v1050 = vunpack.c.h.b16 %v268
  %v1051 = vunpack.c.l.b16 %v269
  %v1052 = vunpack.c.h.b16 %v269
  %v1053 = vunpack.c.l.b16 %v270
  %v1054 = vunpack.c.h.b16 %v270
  %v1055 = vunpack.c.l.b16 %v271
  %v1056 = vunpack.c.h.b16 %v271
  %v1057 = vunpack.c.l.b16 %v272
  %v1058 = vunpack.c.h.b16 %v272
  %v1059 = vunpack.c.l.b16 %v273
  %v1060 = vunpack.c.h.b16 %v273
  %v1061 = vunpack.c.l.b16 %v274
  %v1062 = vunpack.c.h.b16 %v274
  %v1063 = vunpack.c.l.b16 %v275
  %v1064 = vunpack.c.h.b16 %v275
  %v1065 = vunpack.c.l.b16 %v276
  %v1066 = vunpack.c.h.b16 %v276
  %v1067 = vunpack.c.l.b16 %v277
  %v1068 = vunpack.c.h.b16 %v277
  %v1069 = vunpack.c.l.b16 %v278
  %v1070 = vunpack.c.h.b16 %v278
  %v1071 = vunpack.c.l.b16 %v279
  %v1072 = vunpack.c.h.b16 %v279
  %v1073 = vunpack.c.l.b16 %v280
  %v1074 = vunpack.c.h.b16 %v280
  %v1075 = vunpack.c.l.b16 %v281
  %v1076 = vunpack.c.h.b16 %v281
  %v1077 = vunpack.c.l.b16 %v282
  %v1078 = vunpack.c.h.b16 %v282
  %v1079 = vpack.c.b16 %v575, %v567
  %v1080 = vpack.c.b16 %v576, %v568
  %v1081 = vpack.c.b16 %v577, %v569
  %v1082 = vpack.c.b16 %v578, %v570
  %v1083 = vpack.c.b16 %v579, %v571
  %v1084 = vpack.c.b16 %v580, %v572
  %v1085 = vpack.c.b16 %v581, %v573
  %v1086 = vpack.c.b16 %v582, %v574
  %v1087 = vpack.c.b16 %v591, %v583
  %v1088 = vpack.c.b16 %v592, %v584
  %v1089 = vpack.c.b16 %v593, %v585
  %v1090 = vpack.c.b16 %v594, %v586
  %v1091 = vpack.c.b16 %v595, %v587
  %v1092 = vpack.c.b16 %v596, %v588
  %v1093 = vpack.c.b16 %v597, %v589
  %v1094 = vpack.c.b16 %v598, %v590
  %v1095 = vpack.c.b16 %v607, %v599
  %v1096 = vpack.c.b16 %v608, %v600
  %v1097 = vpack.c.b16 %v609, %v601
  %v1098 = vpack.c.b16 %v610, %v602
  %v1099 = vpack.c.b16 %v611, %v603
  %v1100 = vpack.c.b16 %v612, %v604
  %v1101 = vpack.c.b16 %v613, %v605
  %v1102 = vpack.c.b16 %v614, %v606
  %v1103 = vpack.c.b16 %v623, %v615
  %v1104 = vpack.c.b16 %v624, %v616
  %v1105 = vpack.c.b16 %v625, %v617
  %v1106 = vpack.c.b16 %v626, %v618
  %v1107 = vpack.c.b16 %v627, %v619
  %v1108 = vpack.c.b16 %v628, %v620
  %v1109 = vpack.c.b16 %v629, %v621
  %v1110 = vpack.c.b16 %v630, %v622
  %v1111 = vpack.c.b16 %v639, %v631
  %v1112 = vpack.c.b16 %v640, %v632
  %v1113 = vpack.c.b16 %v641, %v633
  %v1114 = vpack.c.b16 %v642, %v634
  %v1115 = vpack.c.b16 %v643, %v635
  %v1116 = vpack.c.b16 %v644, %v636
  %v1117 = vpack.c.b16 %v645, %v637
  %v1118 = vpack.c.b16 %v646, %v638
  %v1119 = vpack.c.b16 %v655, %v647
  %v1120 = vpack.c.b16 %v656, %v648
  %v1121 = vpack.c.b16 %v657, %v649
  %v1122 = vpack.c.b16 %v658, %v650
  %v1123 = vpack.c.b16 %v659, %v651
  %v1124 = vpack.c.b16 %v660, %v652
  %v1125 = vpack.c.b16 %v661, %v653
  %v1126 = vpack.c.b16 %v662, %v654
  %v1127 = vpack.c.b16 %v671, %v663
  %v1128 = vpack.c.b16 %v672, %v664
  %v1129 = vpack.c.b16 %v673, %v665
  %v1130 = vpack.c.b16 %v674, %v666
  %v1131 = vpack.c.b16 %v675, %v667
  %v1132 = vpack.c.b16 %v676, %v668
  %v1133 = vpack.c.b16 %v677, %v669
  %v1134 = vpack.c.b16 %v678, %v670
  %v1135 = vpack.c.b16 %v687, %v679
  %v1136 = vpack.c.b16 %v688, %v680
  %v1137 = vpack.c.b16 %v689, %v681
  %v1138 = vpack.c.b16 %v690, %v682
  %v1139 = vpack.c.b16 %v691, %v683
  %v1140 = vpack.c.b16 %v692, %v684
  %v1141 = vpack.c.b16 %v693, %v685
  %v1142 = vpack.c.b16 %v694, %v686
  %v1143 = vpack.c.b16 %v703, %v695
  %v1144 = vpack.c.b16 %v704, %v696
  %v1145 = vpack.c.b16 %v705, %v697
  %v1146 = vpack.c.b16 %v706, %v698
  %v1147 = vpack.c.b16 %v707, %v699
  %v1148 = vpack.c.b16 %v708, %v700
  %v1149 = vpack.c.b16 %v709, %v701
  %v1150 = vpack.c.b16 %v710, %v702
  %v1151 = vpack.c.b16 %v719, %v711
  %v1152 = vpack.c.b16 %v720, %v712
  %v1153 = vpack.c.b16 %v721, %v713
  %v1154 = vpack.c.b16 %v722, %v714
  %v1155 = vpack.c.b16 %v723, %v715
  %v1156 = vpack.c.b16 %v724, %v716
  %v1157 = vpack.c.b16 %v725, %v717
  %v1158 = vpack.c.b16 %v726, %v718
  %v1159 = vpack.c.b16 %v735, %v727
  %v1160 = vpack.c.b16 %v736, %v728
  %v1161 = vpack.c.b16 %v737, %v729
  %v1162 = vpack.c.b16 %v738, %v730
  %v1163 = vpack.c.b16 %v739, %v731
  %v1164 = vpack.c.b16 %v740, %v732
  %v1165 = vpack.c.b16 %v741, %v733
  %v1166 = vpack.c.b16 %v742, %v734
  %v1167 = vpack.c.b16 %v751, %v743
  %v1168 = vpack.c.b16 %v752, %v744
  %v1169 = vpack.c.b16 %v753, %v745
  %v1170 = vpack.c.b16 %v754, %v746
  %v1171 = vpack.c.b16 %v755, %v747
  %v1172 = vpack.c.b16 %v756, %v748
  %v1173 = vpack.c.b16 %v757, %v749
  %v1174 = vpack.c.b16 %v758, %v750
  %v1175 = vpack.c.b16 %v767, %v759
  %v1176 = vpack.c.b16 %v768, %v760
  %v1177 = vpack.c.b16 %v769, %v761
  %v1178 = vpack.c.b16 %v770, %v762
  %v1179 = vpack.c.b16 %v771, %v763
  %v1180 = vpack.c.b16 %v772, %v764
  %v1181 = vpack.c.b16 %v773, %v765
  %v1182 = vpack.c.b16 %v774, %v766
  %v1183 = vpack.c.b16 %v783, %v775
  %v1184 = vpack.c.b16 %v784, %v776
  %v1185 = vpack.c.b16 %v785, %v777
  %v1186 = vpack.c.b16 %v786, %v778
  %v1187 = vpack.c.b16 %v787, %v779
  %v1188 = vpack.c.b16 %v788, %v780
  %v1189 = vpack.c.b16 %v789, %v781
  %v1190 = vpack.c.b16 %v790, %v782
  %v1191 = vpack.c.b16 %v799, %v791
  %v1192 = vpack.c.b16 %v800, %v792
  %v1193 = vpack.c.b16 %v801, %v793
  %v1194 = vpack.c.b16 %v802, %v794
  %v1195 = vpack.c.b16 %v803, %v795
  %v1196 = vpack.c.b16 %v804, %v796
  %v1197 = vpack.c.b16 %v805, %v797
  %v1198 = vpack.c.b16 %v806, %v798
  %v1199 = vpack.c.b16 %v815, %v807
  %v1200 = vpack.c.b16 %v816, %v808
  %v1201 = vpack.c.b16 %v817, %v809
  %v1202 = vpack.c.b16 %v818, %v810
  %v1203 = vpack.c.b16 %v819, %v811
  %v1204 = vpack.c.b16 %v820, %v812
  %v1205 = vpack.c.b16 %v821, %v813
  %v1206 = vpack.c.b16 %v822, %v814
  %v1207 = vpack.c.b16 %v831, %v823
  %v1208 = vpack.c.b16 %v832, %v824
  %v1209 = vpack.c.b16 %v833, %v825
  %v1210 = vpack.c.b16 %v834, %v826
  %v1211 = vpack.c.b16 %v835, %v827
  %v1212 = vpack.c.b16 %v836, %v828
  %v1213 = vpack.c.b16 %v837, %v829
  %v1214 = vpack.c.b16 %v838, %v830
  %v1215 = vpack.c.b16 %v847, %v839
  %v1216 = vpack.c.b16 %v848, %v840
  %v1217 = vpack.c.b16 %v849, %v841
  %v1218 = vpack.c.b16 %v850, %v842
  %v1219 = vpack.c.b16 %v851, %v843
  %v1220 = vpack.c.b16 %v852, %v844
  %v1221 = vpack.c.b16 %v853, %v845
  %v1222 = vpack.c.b16 %v854, %v846
  %v1223 = vpack.c.b16 %v863, %v855
  %v1224 = vpack.c.b16 %v864, %v856
  %v1225 = vpack.c.b16 %v865, %v857
  %v1226 = vpack.c.b16 %v866, %v858
  %v1227 = vpack.c.b16 %v867, %v859
  %v1228 = vpack.c.b16 %v868, %v860
  %v1229 = vpack.c.b16 %v869, %v861
  %v1230 = vpack.c.b16 %v870, %v862
  %v1231 = vpack.c.b16 %v879, %v871
  %v1232 = vpack.c.b16 %v880, %v872
  %v1233 = vpack.c.b16 %v881, %v873
  %v1234 = vpack.c.b16 %v882, %v874
  %v1235 = vpack.c.b16 %v883, %v875
  %v1236 = vpack.c.b16 %v884, %v876
  %v1237 = vpack.c.b16 %v885, %v877
  %v1238 = vpack.c.b16 %v886, %v878
  %v1239 = vpack.c.b16 %v895, %v887
  %v1240 = vpack.c.b16 %v896, %v888
  %v1241 = vpack.c.b16 %v897, %v889
  %v1242 = vpack.c.b16 %v898, %v890
  %v1243 = vpack.c.b16 %v899, %v891
  %v1244 = vpack.c.b16 %v900, %v892
  %v1245 = vpack.c.b16 %v901, %v893
  %v1246 = vpack.c.b16 %v902, %v894
  %v1247 = vpack.c.b16 %v911, %v903
  %v1248 = vpack.c.b16 %v912, %v904
  %v1249 = vpack.c.b16 %v913, %v905
  %v1250 = vpack.c.b16 %v914, %v906
  %v1251 = vpack.c.b16 %v915, %v907
  %v1252 = vpack.c.b16 %v916, %v908
  %v1253 = vpack.c.b16 %v917, %v909
  %v1254 = vpack.c.b16 %v918, %v910
  %v1255 = vpack.c.b16 %v927, %v919
  %v1256 = vpack.c.b16 %v928, %v920
  %v1257 = vpack.c.b16 %v929, %v921
  %v1258 = vpack.c.b16 %v930, %v922
  %v1259 = vpack.c.b16 %v931, %v923
  %v1260 = vpack.c.b16 %v932, %v924
  %v1261 = vpack.c.b16 %v933, %v925
  %v1262 = vpack.c.b16 %v934, %v926
  %v1263 = vpack.c.b16 %v943, %v935
  %v1264 = vpack.c.b16 %v944, %v936
  %v1265 = vpack.c.b16 %v945, %v937
  %v1266 = vpack.c.b16 %v946, %v938
  %v1267 = vpack.c.b16 %v947, %v939
  %v1268 = vpack.c.b16 %v948, %v940
  %v1269 = vpack.c.b16 %v949, %v941
  %v1270 = vpack.c.b16 %v950, %v942
  %v1271 = vpack.c.b16 %v959, %v951
  %v1272 = vpack.c.b16 %v960, %v952
  %v1273 = vpack.c.b16 %v961, %v953
  %v1274 = vpack.c.b16 %v962, %v954
  %v1275 = vpack.c.b16 %v963, %v955
  %v1276 = vpack.c.b16 %v964, %v956
  %v1277 = vpack.c.b16 %v965, %v957
  %v1278 = vpack.c.b16 %v966, %v958
  %v1279 = vpack.c.b16 %v975, %v967
  %v1280 = vpack.c.b16 %v976, %v968
  %v1281 = vpack.c.b16 %v977, %v969
  %v1282 = vpack.c.b16 %v978, %v970
  %v1283 = vpack.c.b16 %v979, %v971
  %v1284 = vpack.c.b16 %v980, %v972
  %v1285 = vpack.c.b16 %v981, %v973
  %v1286 = vpack.c.b16 %v982, %v974
  %v1287 = vpack.c.b16 %v991, %v983
  %v1288 = vpack.c.b16 %v992, %v984
  %v1289 = vpack.c.b16 %v993, %v985
  %v1290 = vpack.c.b16 %v994, %v986
  %v1291 = vpack.c.b16 %v995, %v987
  %v1292 = vpack.c.b16 %v996, %v988
  %v1293 = vpack.c.b16 %v997, %v989
  %v1294 = vpack.c.b16 %v998, %v990
  %v1295 = vpack.c.b16 %v1007, %v999
  %v1296 = vpack.c.b16 %v1008, %v1000
  %v1297 = vpack.c.b16 %v1009, %v1001
  %v1298 = vpack.c.b16 %v1010, %v1002
  %v1299 = vpack.c.b16 %v1011, %v1003
  %v1300 = vpack.c.b16 %v1012, %v1004
  %v1301 = vpack.c.b16 %v1013, %v1005
  %v1302 = vpack.c.b16 %v1014, %v1006
  %v1303 = vpack.c.b16 %v1023, %v1015
  %v1304 = vpack.c.b16 %v1024, %v1016
  %v1305 = vpack.c.b16 %v1025, %v1017
  %v1306 = vpack.c.b16 %v1026, %v1018
  %v1307 = vpack.c.b16 %v1027, %v1019
  %v1308 = vpack.c.b16 %v1028, %v1020
  %v1309 = vpack.c.b16 %v1029, %v1021
  %v1310 = vpack.c.b16 %v1030, %v1022
  %v1311 = vpack.c.b16 %v1039, %v1031
  %v1312 = vpack.c.b16 %v1040, %v1032
  %v1313 = vpack.c.b16 %v1041, %v1033
  %v1314 = vpack.c.b16 %v1042, %v1034
  %v1315 = vpack.c.b16 %v1043, %v1035
  %v1316 = vpack.c.b16 %v1044, %v1036
  %v1317 = vpack.c.b16 %v1045, %v1037
  %v1318 = vpack.c.b16 %v1046, %v1038
  %v1319 = vpack.c.b16 %v1055, %v1047
  %v1320 = vpack.c.b16 %v1056, %v1048
  %v1321 = vpack.c.b16 %v1057, %v1049
  %v1322 = vpack.c.b16 %v1058, %v1050
  %v1323 = vpack.c.b16 %v1059, %v1051
  %v1324 = vpack.c.b16 %v1060, %v1052
  %v1325 = vpack.c.b16 %v1061, %v1053
  %v1326 = vpack.c.b16 %v1062, %v1054
  %v1327 = vpack.c.b16 %v1071, %v1063
  %v1328 = vpack.c.b16 %v1072, %v1064
  %v1329 = vpack.c.b16 %v1073, %v1065
  %v1330 = vpack.c.b16 %v1074, %v1066
  %v1331 = vpack.c.b16 %v1075, %v1067
  %v1332 = vpack.c.b16 %v1076, %v1068
  %v1333 = vpack.c.b16 %v1077, %v1069
  %v1334 = vpack.c.b16 %v1078, %v1070
  %1591 = vmatpush.bf16.msra.mxu0 %v1135
  %1592 = vmatpush.bf16.msra.mxu0 %v1127
  %1593 = vmatpush.bf16.msra.mxu0 %v1119
  %1594 = vmatpush.bf16.msra.mxu0 %v1111
  %1595 = vmatpush.bf16.msra.mxu0 %v1103
  %1596 = vmatpush.bf16.msra.mxu0 %v1095
  %1597 = vmatpush.bf16.msra.mxu0 %v1087
  %1598 = vmatpush.bf16.msra.mxu0 %v1079
  %1599 = vmatmul.bf16.gmra.mxu0 %v303
  %v1600 = vpop.f32.mrf.mxu0
  %v1601 = vadd.f32 %v285, %v1600
  %v1602 = vpop.f32.mrf.mxu0
  %1603 = vdwg.mxu0
  %1604 = vmatpush.bf16.msra.mxu0 %v1199
  %1605 = vmatpush.bf16.msra.mxu0 %v1191
  %1606 = vmatpush.bf16.msra.mxu0 %v1183
  %1607 = vmatpush.bf16.msra.mxu0 %v1175
  %1608 = vmatpush.bf16.msra.mxu0 %v1167
  %1609 = vmatpush.bf16.msra.mxu0 %v1159
  %1610 = vmatpush.bf16.msra.mxu0 %v1151
  %1611 = vmatpush.bf16.msra.mxu0 %v1143
  %1612 = vmatmul.bf16.gmra.mxu0 %v304
  %v1613 = vpop.f32.mrf.mxu0
  %v1614 = vadd.f32 %v1601, %v1613
  %v1615 = vpop.f32.mrf.mxu0
  %1616 = vdwg.mxu0
  %1617 = vmatpush.bf16.msra.mxu0 %v1263
  %1618 = vmatpush.bf16.msra.mxu0 %v1255
  %1619 = vmatpush.bf16.msra.mxu0 %v1247
  %1620 = vmatpush.bf16.msra.mxu0 %v1239
  %1621 = vmatpush.bf16.msra.mxu0 %v1231
  %1622 = vmatpush.bf16.msra.mxu0 %v1223
  %1623 = vmatpush.bf16.msra.mxu0 %v1215
  %1624 = vmatpush.bf16.msra.mxu0 %v1207
  %1625 = vmatmul.bf16.gmra.mxu0 %v305
  %v1626 = vpop.f32.mrf.mxu0
  %v1627 = vadd.f32 %v1614, %v1626
  %v1628 = vpop.f32.mrf.mxu0
  %1629 = vdwg.mxu0
  %1630 = vmatpush.bf16.msra.mxu0 %v1327
  %1631 = vmatpush.bf16.msra.mxu0 %v1319
  %1632 = vmatpush.bf16.msra.mxu0 %v1311
  %1633 = vmatpush.bf16.msra.mxu0 %v1303
  %1634 = vmatpush.bf16.msra.mxu0 %v1295
  %1635 = vmatpush.bf16.msra.mxu0 %v1287
  %1636 = vmatpush.bf16.msra.mxu0 %v1279
  %1637 = vmatpush.bf16.msra.mxu0 %v1271
  %1638 = vmatmul.bf16.gmra.mxu0 %v306
  %v1639 = vpop.f32.mrf.mxu0
  %v1640 = vadd.f32 %v1627, %v1639
  %v1641 = vpop.f32.mrf.mxu0
  %1642 = vdwg.mxu0
  %1643 = vmatpush.bf16.msra.mxu0 %v1136
  %1644 = vmatpush.bf16.msra.mxu0 %v1128
  %1645 = vmatpush.bf16.msra.mxu0 %v1120
  %1646 = vmatpush.bf16.msra.mxu0 %v1112
  %1647 = vmatpush.bf16.msra.mxu0 %v1104
  %1648 = vmatpush.bf16.msra.mxu0 %v1096
  %1649 = vmatpush.bf16.msra.mxu0 %v1088
  %1650 = vmatpush.bf16.msra.mxu0 %v1080
  %1651 = vmatmul.bf16.gmra.mxu0 %v303
  %v1652 = vpop.f32.mrf.mxu0
  %v1653 = vadd.f32 %v286, %v1652
  %v1654 = vpop.f32.mrf.mxu0
  %1655 = vdwg.mxu0
  %1656 = vmatpush.bf16.msra.mxu0 %v1200
  %1657 = vmatpush.bf16.msra.mxu0 %v1192
  %1658 = vmatpush.bf16.msra.mxu0 %v1184
  %1659 = vmatpush.bf16.msra.mxu0 %v1176
  %1660 = vmatpush.bf16.msra.mxu0 %v1168
  %1661 = vmatpush.bf16.msra.mxu0 %v1160
  %1662 = vmatpush.bf16.msra.mxu0 %v1152
  %1663 = vmatpush.bf16.msra.mxu0 %v1144
  %1664 = vmatmul.bf16.gmra.mxu0 %v304
  %v1665 = vpop.f32.mrf.mxu0
  %v1666 = vadd.f32 %v1653, %v1665
  %v1667 = vpop.f32.mrf.mxu0
  %1668 = vdwg.mxu0
  %1669 = vmatpush.bf16.msra.mxu0 %v1264
  %1670 = vmatpush.bf16.msra.mxu0 %v1256
  %1671 = vmatpush.bf16.msra.mxu0 %v1248
  %1672 = vmatpush.bf16.msra.mxu0 %v1240
  %1673 = vmatpush.bf16.msra.mxu0 %v1232
  %1674 = vmatpush.bf16.msra.mxu0 %v1224
  %1675 = vmatpush.bf16.msra.mxu0 %v1216
  %1676 = vmatpush.bf16.msra.mxu0 %v1208
  %1677 = vmatmul.bf16.gmra.mxu0 %v305
  %v1678 = vpop.f32.mrf.mxu0
  %v1679 = vadd.f32 %v1666, %v1678
  %v1680 = vpop.f32.mrf.mxu0
  %1681 = vdwg.mxu0
  %1682 = vmatpush.bf16.msra.mxu0 %v1328
  %1683 = vmatpush.bf16.msra.mxu0 %v1320
  %1684 = vmatpush.bf16.msra.mxu0 %v1312
  %1685 = vmatpush.bf16.msra.mxu0 %v1304
  %1686 = vmatpush.bf16.msra.mxu0 %v1296
  %1687 = vmatpush.bf16.msra.mxu0 %v1288
  %1688 = vmatpush.bf16.msra.mxu0 %v1280
  %1689 = vmatpush.bf16.msra.mxu0 %v1272
  %1690 = vmatmul.bf16.gmra.mxu0 %v306
  %v1691 = vpop.f32.mrf.mxu0
  %v1692 = vadd.f32 %v1679, %v1691
  %v1693 = vpop.f32.mrf.mxu0
  %1694 = vdwg.mxu0
  %1695 = vmatpush.bf16.msra.mxu0 %v1137
  %1696 = vmatpush.bf16.msra.mxu0 %v1129
  %1697 = vmatpush.bf16.msra.mxu0 %v1121
  %1698 = vmatpush.bf16.msra.mxu0 %v1113
  %1699 = vmatpush.bf16.msra.mxu0 %v1105
  %1700 = vmatpush.bf16.msra.mxu0 %v1097
  %1701 = vmatpush.bf16.msra.mxu0 %v1089
  %1702 = vmatpush.bf16.msra.mxu0 %v1081
  %1703 = vmatmul.bf16.gmra.mxu0 %v303
  %v1704 = vpop.f32.mrf.mxu0
  %v1705 = vadd.f32 %v287, %v1704
  %v1706 = vpop.f32.mrf.mxu0
  %1707 = vdwg.mxu0
  %1708 = vmatpush.bf16.msra.mxu0 %v1201
  %1709 = vmatpush.bf16.msra.mxu0 %v1193
  %1710 = vmatpush.bf16.msra.mxu0 %v1185
  %1711 = vmatpush.bf16.msra.mxu0 %v1177
  %1712 = vmatpush.bf16.msra.mxu0 %v1169
  %1713 = vmatpush.bf16.msra.mxu0 %v1161
  %1714 = vmatpush.bf16.msra.mxu0 %v1153
  %1715 = vmatpush.bf16.msra.mxu0 %v1145
  %1716 = vmatmul.bf16.gmra.mxu0 %v304
  %v1717 = vpop.f32.mrf.mxu0
  %v1718 = vadd.f32 %v1705, %v1717
  %v1719 = vpop.f32.mrf.mxu0
  %1720 = vdwg.mxu0
  %1721 = vmatpush.bf16.msra.mxu0 %v1265
  %1722 = vmatpush.bf16.msra.mxu0 %v1257
  %1723 = vmatpush.bf16.msra.mxu0 %v1249
  %1724 = vmatpush.bf16.msra.mxu0 %v1241
  %1725 = vmatpush.bf16.msra.mxu0 %v1233
  %1726 = vmatpush.bf16.msra.mxu0 %v1225
  %1727 = vmatpush.bf16.msra.mxu0 %v1217
  %1728 = vmatpush.bf16.msra.mxu0 %v1209
  %1729 = vmatmul.bf16.gmra.mxu0 %v305
  %v1730 = vpop.f32.mrf.mxu0
  %v1731 = vadd.f32 %v1718, %v1730
  %v1732 = vpop.f32.mrf.mxu0
  %1733 = vdwg.mxu0
  %1734 = vmatpush.bf16.msra.mxu0 %v1329
  %1735 = vmatpush.bf16.msra.mxu0 %v1321
  %1736 = vmatpush.bf16.msra.mxu0 %v1313
  %1737 = vmatpush.bf16.msra.mxu0 %v1305
  %1738 = vmatpush.bf16.msra.mxu0 %v1297
  %1739 = vmatpush.bf16.msra.mxu0 %v1289
  %1740 = vmatpush.bf16.msra.mxu0 %v1281
  %1741 = vmatpush.bf16.msra.mxu0 %v1273
  %1742 = vmatmul.bf16.gmra.mxu0 %v306
  %v1743 = vpop.f32.mrf.mxu0
  %v1744 = vadd.f32 %v1731, %v1743
  %v1745 = vpop.f32.mrf.mxu0
  %1746 = vdwg.mxu0
  %1747 = vmatpush.bf16.msra.mxu0 %v1138
  %1748 = vmatpush.bf16.msra.mxu0 %v1130
  %1749 = vmatpush.bf16.msra.mxu0 %v1122
  %1750 = vmatpush.bf16.msra.mxu0 %v1114
  %1751 = vmatpush.bf16.msra.mxu0 %v1106
  %1752 = vmatpush.bf16.msra.mxu0 %v1098
  %1753 = vmatpush.bf16.msra.mxu0 %v1090
  %1754 = vmatpush.bf16.msra.mxu0 %v1082
  %1755 = vmatmul.bf16.gmra.mxu0 %v303
  %v1756 = vpop.f32.mrf.mxu0
  %v1757 = vadd.f32 %v288, %v1756
  %v1758 = vpop.f32.mrf.mxu0
  %1759 = vdwg.mxu0
  %1760 = vmatpush.bf16.msra.mxu0 %v1202
  %1761 = vmatpush.bf16.msra.mxu0 %v1194
  %1762 = vmatpush.bf16.msra.mxu0 %v1186
  %1763 = vmatpush.bf16.msra.mxu0 %v1178
  %1764 = vmatpush.bf16.msra.mxu0 %v1170
  %1765 = vmatpush.bf16.msra.mxu0 %v1162
  %1766 = vmatpush.bf16.msra.mxu0 %v1154
  %1767 = vmatpush.bf16.msra.mxu0 %v1146
  %1768 = vmatmul.bf16.gmra.mxu0 %v304
  %v1769 = vpop.f32.mrf.mxu0
  %v1770 = vadd.f32 %v1757, %v1769
  %v1771 = vpop.f32.mrf.mxu0
  %1772 = vdwg.mxu0
  %1773 = vmatpush.bf16.msra.mxu0 %v1266
  %1774 = vmatpush.bf16.msra.mxu0 %v1258
  %1775 = vmatpush.bf16.msra.mxu0 %v1250
  %1776 = vmatpush.bf16.msra.mxu0 %v1242
  %1777 = vmatpush.bf16.msra.mxu0 %v1234
  %1778 = vmatpush.bf16.msra.mxu0 %v1226
  %1779 = vmatpush.bf16.msra.mxu0 %v1218
  %1780 = vmatpush.bf16.msra.mxu0 %v1210
  %1781 = vmatmul.bf16.gmra.mxu0 %v305
  %v1782 = vpop.f32.mrf.mxu0
  %v1783 = vadd.f32 %v1770, %v1782
  %v1784 = vpop.f32.mrf.mxu0
  %1785 = vdwg.mxu0
  %1786 = vmatpush.bf16.msra.mxu0 %v1330
  %1787 = vmatpush.bf16.msra.mxu0 %v1322
  %1788 = vmatpush.bf16.msra.mxu0 %v1314
  %1789 = vmatpush.bf16.msra.mxu0 %v1306
  %1790 = vmatpush.bf16.msra.mxu0 %v1298
  %1791 = vmatpush.bf16.msra.mxu0 %v1290
  %1792 = vmatpush.bf16.msra.mxu0 %v1282
  %1793 = vmatpush.bf16.msra.mxu0 %v1274
  %1794 = vmatmul.bf16.gmra.mxu0 %v306
  %v1795 = vpop.f32.mrf.mxu0
  %v1796 = vadd.f32 %v1783, %v1795
  %v1797 = vpop.f32.mrf.mxu0
  %1798 = vdwg.mxu0
  %1799 = vmatpush.bf16.msra.mxu0 %v1139
  %1800 = vmatpush.bf16.msra.mxu0 %v1131
  %1801 = vmatpush.bf16.msra.mxu0 %v1123
  %1802 = vmatpush.bf16.msra.mxu0 %v1115
  %1803 = vmatpush.bf16.msra.mxu0 %v1107
  %1804 = vmatpush.bf16.msra.mxu0 %v1099
  %1805 = vmatpush.bf16.msra.mxu0 %v1091
  %1806 = vmatpush.bf16.msra.mxu0 %v1083
  %1807 = vmatmul.bf16.gmra.mxu0 %v303
  %v1808 = vpop.f32.mrf.mxu0
  %v1809 = vadd.f32 %v289, %v1808
  %v1810 = vpop.f32.mrf.mxu0
  %1811 = vdwg.mxu0
  %1812 = vmatpush.bf16.msra.mxu0 %v1203
  %1813 = vmatpush.bf16.msra.mxu0 %v1195
  %1814 = vmatpush.bf16.msra.mxu0 %v1187
  %1815 = vmatpush.bf16.msra.mxu0 %v1179
  %1816 = vmatpush.bf16.msra.mxu0 %v1171
  %1817 = vmatpush.bf16.msra.mxu0 %v1163
  %1818 = vmatpush.bf16.msra.mxu0 %v1155
  %1819 = vmatpush.bf16.msra.mxu0 %v1147
  %1820 = vmatmul.bf16.gmra.mxu0 %v304
  %v1821 = vpop.f32.mrf.mxu0
  %v1822 = vadd.f32 %v1809, %v1821
  %v1823 = vpop.f32.mrf.mxu0
  %1824 = vdwg.mxu0
  %1825 = vmatpush.bf16.msra.mxu0 %v1267
  %1826 = vmatpush.bf16.msra.mxu0 %v1259
  %1827 = vmatpush.bf16.msra.mxu0 %v1251
  %1828 = vmatpush.bf16.msra.mxu0 %v1243
  %1829 = vmatpush.bf16.msra.mxu0 %v1235
  %1830 = vmatpush.bf16.msra.mxu0 %v1227
  %1831 = vmatpush.bf16.msra.mxu0 %v1219
  %1832 = vmatpush.bf16.msra.mxu0 %v1211
  %1833 = vmatmul.bf16.gmra.mxu0 %v305
  %v1834 = vpop.f32.mrf.mxu0
  %v1835 = vadd.f32 %v1822, %v1834
  %v1836 = vpop.f32.mrf.mxu0
  %1837 = vdwg.mxu0
  %1838 = vmatpush.bf16.msra.mxu0 %v1331
  %1839 = vmatpush.bf16.msra.mxu0 %v1323
  %1840 = vmatpush.bf16.msra.mxu0 %v1315
  %1841 = vmatpush.bf16.msra.mxu0 %v1307
  %1842 = vmatpush.bf16.msra.mxu0 %v1299
  %1843 = vmatpush.bf16.msra.mxu0 %v1291
  %1844 = vmatpush.bf16.msra.mxu0 %v1283
  %1845 = vmatpush.bf16.msra.mxu0 %v1275
  %1846 = vmatmul.bf16.gmra.mxu0 %v306
  %v1847 = vpop.f32.mrf.mxu0
  %v1848 = vadd.f32 %v1835, %v1847
  %v1849 = vpop.f32.mrf.mxu0
  %1850 = vdwg.mxu0
  %1851 = vmatpush.bf16.msra.mxu0 %v1140
  %1852 = vmatpush.bf16.msra.mxu0 %v1132
  %1853 = vmatpush.bf16.msra.mxu0 %v1124
  %1854 = vmatpush.bf16.msra.mxu0 %v1116
  %1855 = vmatpush.bf16.msra.mxu0 %v1108
  %1856 = vmatpush.bf16.msra.mxu0 %v1100
  %1857 = vmatpush.bf16.msra.mxu0 %v1092
  %1858 = vmatpush.bf16.msra.mxu0 %v1084
  %1859 = vmatmul.bf16.gmra.mxu0 %v303
  %v1860 = vpop.f32.mrf.mxu0
  %v1861 = vadd.f32 %v290, %v1860
  %v1862 = vpop.f32.mrf.mxu0
  %1863 = vdwg.mxu0
  %1864 = vmatpush.bf16.msra.mxu0 %v1204
  %1865 = vmatpush.bf16.msra.mxu0 %v1196
  %1866 = vmatpush.bf16.msra.mxu0 %v1188
  %1867 = vmatpush.bf16.msra.mxu0 %v1180
  %1868 = vmatpush.bf16.msra.mxu0 %v1172
  %1869 = vmatpush.bf16.msra.mxu0 %v1164
  %1870 = vmatpush.bf16.msra.mxu0 %v1156
  %1871 = vmatpush.bf16.msra.mxu0 %v1148
  %1872 = vmatmul.bf16.gmra.mxu0 %v304
  %v1873 = vpop.f32.mrf.mxu0
  %v1874 = vadd.f32 %v1861, %v1873
  %v1875 = vpop.f32.mrf.mxu0
  %1876 = vdwg.mxu0
  %1877 = vmatpush.bf16.msra.mxu0 %v1268
  %1878 = vmatpush.bf16.msra.mxu0 %v1260
  %1879 = vmatpush.bf16.msra.mxu0 %v1252
  %1880 = vmatpush.bf16.msra.mxu0 %v1244
  %1881 = vmatpush.bf16.msra.mxu0 %v1236
  %1882 = vmatpush.bf16.msra.mxu0 %v1228
  %1883 = vmatpush.bf16.msra.mxu0 %v1220
  %1884 = vmatpush.bf16.msra.mxu0 %v1212
  %1885 = vmatmul.bf16.gmra.mxu0 %v305
  %v1886 = vpop.f32.mrf.mxu0
  %v1887 = vadd.f32 %v1874, %v1886
  %v1888 = vpop.f32.mrf.mxu0
  %1889 = vdwg.mxu0
  %1890 = vmatpush.bf16.msra.mxu0 %v1332
  %1891 = vmatpush.bf16.msra.mxu0 %v1324
  %1892 = vmatpush.bf16.msra.mxu0 %v1316
  %1893 = vmatpush.bf16.msra.mxu0 %v1308
  %1894 = vmatpush.bf16.msra.mxu0 %v1300
  %1895 = vmatpush.bf16.msra.mxu0 %v1292
  %1896 = vmatpush.bf16.msra.mxu0 %v1284
  %1897 = vmatpush.bf16.msra.mxu0 %v1276
  %1898 = vmatmul.bf16.gmra.mxu0 %v306
  %v1899 = vpop.f32.mrf.mxu0
  %v1900 = vadd.f32 %v1887, %v1899
  %v1901 = vpop.f32.mrf.mxu0
  %1902 = vdwg.mxu0
  %1903 = vmatpush.bf16.msra.mxu0 %v1141
  %1904 = vmatpush.bf16.msra.mxu0 %v1133
  %1905 = vmatpush.bf16.msra.mxu0 %v1125
  %1906 = vmatpush.bf16.msra.mxu0 %v1117
  %1907 = vmatpush.bf16.msra.mxu0 %v1109
  %1908 = vmatpush.bf16.msra.mxu0 %v1101
  %1909 = vmatpush.bf16.msra.mxu0 %v1093
  %1910 = vmatpush.bf16.msra.mxu0 %v1085
  %1911 = vmatmul.bf16.gmra.mxu0 %v303
  %v1912 = vpop.f32.mrf.mxu0
  %v1913 = vadd.f32 %v291, %v1912
  %v1914 = vpop.f32.mrf.mxu0
  %1915 = vdwg.mxu0
  %1916 = vmatpush.bf16.msra.mxu0 %v1205
  %1917 = vmatpush.bf16.msra.mxu0 %v1197
  %1918 = vmatpush.bf16.msra.mxu0 %v1189
  %1919 = vmatpush.bf16.msra.mxu0 %v1181
  %1920 = vmatpush.bf16.msra.mxu0 %v1173
  %1921 = vmatpush.bf16.msra.mxu0 %v1165
  %1922 = vmatpush.bf16.msra.mxu0 %v1157
  %1923 = vmatpush.bf16.msra.mxu0 %v1149
  %1924 = vmatmul.bf16.gmra.mxu0 %v304
  %v1925 = vpop.f32.mrf.mxu0
  %v1926 = vadd.f32 %v1913, %v1925
  %v1927 = vpop.f32.mrf.mxu0
  %1928 = vdwg.mxu0
  %1929 = vmatpush.bf16.msra.mxu0 %v1269
  %1930 = vmatpush.bf16.msra.mxu0 %v1261
  %1931 = vmatpush.bf16.msra.mxu0 %v1253
  %1932 = vmatpush.bf16.msra.mxu0 %v1245
  %1933 = vmatpush.bf16.msra.mxu0 %v1237
  %1934 = vmatpush.bf16.msra.mxu0 %v1229
  %1935 = vmatpush.bf16.msra.mxu0 %v1221
  %1936 = vmatpush.bf16.msra.mxu0 %v1213
  %1937 = vmatmul.bf16.gmra.mxu0 %v305
  %v1938 = vpop.f32.mrf.mxu0
  %v1939 = vadd.f32 %v1926, %v1938
  %v1940 = vpop.f32.mrf.mxu0
  %1941 = vdwg.mxu0
  %1942 = vmatpush.bf16.msra.mxu0 %v1333
  %1943 = vmatpush.bf16.msra.mxu0 %v1325
  %1944 = vmatpush.bf16.msra.mxu0 %v1317
  %1945 = vmatpush.bf16.msra.mxu0 %v1309
  %1946 = vmatpush.bf16.msra.mxu0 %v1301
  %1947 = vmatpush.bf16.msra.mxu0 %v1293
  %1948 = vmatpush.bf16.msra.mxu0 %v1285
  %1949 = vmatpush.bf16.msra.mxu0 %v1277
  %1950 = vmatmul.bf16.gmra.mxu0 %v306
  %v1951 = vpop.f32.mrf.mxu0
  %v1952 = vadd.f32 %v1939, %v1951
  %v1953 = vpop.f32.mrf.mxu0
  %1954 = vdwg.mxu0
  %1955 = vmatpush.bf16.msra.mxu0 %v1142
  %1956 = vmatpush.bf16.msra.mxu0 %v1134
  %1957 = vmatpush.bf16.msra.mxu0 %v1126
  %1958 = vmatpush.bf16.msra.mxu0 %v1118
  %1959 = vmatpush.bf16.msra.mxu0 %v1110
  %1960 = vmatpush.bf16.msra.mxu0 %v1102
  %1961 = vmatpush.bf16.msra.mxu0 %v1094
  %1962 = vmatpush.bf16.msra.mxu0 %v1086
  %1963 = vmatmul.bf16.gmra.mxu0 %v303
  %v1964 = vpop.f32.mrf.mxu0
  %v1965 = vadd.f32 %v292, %v1964
  %v1966 = vpop.f32.mrf.mxu0
  %1967 = vdwg.mxu0
  %1968 = vmatpush.bf16.msra.mxu0 %v1206
  %1969 = vmatpush.bf16.msra.mxu0 %v1198
  %1970 = vmatpush.bf16.msra.mxu0 %v1190
  %1971 = vmatpush.bf16.msra.mxu0 %v1182
  %1972 = vmatpush.bf16.msra.mxu0 %v1174
  %1973 = vmatpush.bf16.msra.mxu0 %v1166
  %1974 = vmatpush.bf16.msra.mxu0 %v1158
  %1975 = vmatpush.bf16.msra.mxu0 %v1150
  %1976 = vmatmul.bf16.gmra.mxu0 %v304
  %v1977 = vpop.f32.mrf.mxu0
  %v1978 = vadd.f32 %v1965, %v1977
  %v1979 = vpop.f32.mrf.mxu0
  %1980 = vdwg.mxu0
  %1981 = vmatpush.bf16.msra.mxu0 %v1270
  %1982 = vmatpush.bf16.msra.mxu0 %v1262
  %1983 = vmatpush.bf16.msra.mxu0 %v1254
  %1984 = vmatpush.bf16.msra.mxu0 %v1246
  %1985 = vmatpush.bf16.msra.mxu0 %v1238
  %1986 = vmatpush.bf16.msra.mxu0 %v1230
  %1987 = vmatpush.bf16.msra.mxu0 %v1222
  %1988 = vmatpush.bf16.msra.mxu0 %v1214
  %1989 = vmatmul.bf16.gmra.mxu0 %v305
  %v1990 = vpop.f32.mrf.mxu0
  %v1991 = vadd.f32 %v1978, %v1990
  %v1992 = vpop.f32.mrf.mxu0
  %1993 = vdwg.mxu0
  %1994 = vmatpush.bf16.msra.mxu0 %v1334
  %1995 = vmatpush.bf16.msra.mxu0 %v1326
  %1996 = vmatpush.bf16.msra.mxu0 %v1318
  %1997 = vmatpush.bf16.msra.mxu0 %v1310
  %1998 = vmatpush.bf16.msra.mxu0 %v1302
  %1999 = vmatpush.bf16.msra.mxu0 %v1294
  %2000 = vmatpush.bf16.msra.mxu0 %v1286
  %2001 = vmatpush.bf16.msra.mxu0 %v1278
  %2002 = vmatmul.bf16.gmra.mxu0 %v306
  %v2003 = vpop.f32.mrf.mxu0
  %v2004 = vadd.f32 %v1991, %v2003
  %v2005 = vpop.f32.mrf.mxu0
  %2006 = vdwg.mxu0
  %vm2007 = vcmask 1043456
  %v2008 = vsel %vm2007, %v1640, 0.0
  %v2009 = vrot.slane %v2008, 4
  %v2010 = vadd.f32 %v2008, %v2009
  %v2011 = vrot.slane %v2010, 2
  %v2012 = vadd.f32 %v2010, %v2011
  %v2013 = vrot.slane %v2012, 1
  %v2014 = vadd.f32 %v2012, %v2013
  %v2015 = vsel %vm2007, %v1692, 0.0
  %v2016 = vrot.slane %v2015, 4
  %v2017 = vadd.f32 %v2015, %v2016
  %v2018 = vrot.slane %v2017, 2
  %v2019 = vadd.f32 %v2017, %v2018
  %v2020 = vrot.slane %v2019, 1
  %v2021 = vadd.f32 %v2019, %v2020
  %v2022 = vsel %vm2007, %v1744, 0.0
  %v2023 = vrot.slane %v2022, 4
  %v2024 = vadd.f32 %v2022, %v2023
  %v2025 = vrot.slane %v2024, 2
  %v2026 = vadd.f32 %v2024, %v2025
  %v2027 = vrot.slane %v2026, 1
  %v2028 = vadd.f32 %v2026, %v2027
  %v2029 = vsel %vm2007, %v1796, 0.0
  %v2030 = vrot.slane %v2029, 4
  %v2031 = vadd.f32 %v2029, %v2030
  %v2032 = vrot.slane %v2031, 2
  %v2033 = vadd.f32 %v2031, %v2032
  %v2034 = vrot.slane %v2033, 1
  %v2035 = vadd.f32 %v2033, %v2034
  %v2036 = vsel %vm2007, %v1848, 0.0
  %v2037 = vrot.slane %v2036, 4
  %v2038 = vadd.f32 %v2036, %v2037
  %v2039 = vrot.slane %v2038, 2
  %v2040 = vadd.f32 %v2038, %v2039
  %v2041 = vrot.slane %v2040, 1
  %v2042 = vadd.f32 %v2040, %v2041
  %v2043 = vsel %vm2007, %v1900, 0.0
  %v2044 = vrot.slane %v2043, 4
  %v2045 = vadd.f32 %v2043, %v2044
  %v2046 = vrot.slane %v2045, 2
  %v2047 = vadd.f32 %v2045, %v2046
  %v2048 = vrot.slane %v2047, 1
  %v2049 = vadd.f32 %v2047, %v2048
  %v2050 = vsel %vm2007, %v1952, 0.0
  %v2051 = vrot.slane %v2050, 4
  %v2052 = vadd.f32 %v2050, %v2051
  %v2053 = vrot.slane %v2052, 2
  %v2054 = vadd.f32 %v2052, %v2053
  %v2055 = vrot.slane %v2054, 1
  %v2056 = vadd.f32 %v2054, %v2055
  %v2057 = vsel %vm2007, %v2004, 0.0
  %v2058 = vrot.slane %v2057, 4
  %v2059 = vadd.f32 %v2057, %v2058
  %v2060 = vrot.slane %v2059, 2
  %v2061 = vadd.f32 %v2059, %v2060
  %v2062 = vrot.slane %v2061, 1
  %v2063 = vadd.f32 %v2061, %v2062
  %v2064 = vmul.f32 %v2014, 0.25
  %v2065 = vmul.f32 %v2021, 0.25
  %v2066 = vmul.f32 %v2028, 0.25
  %v2067 = vmul.f32 %v2035, 0.25
  %v2068 = vmul.f32 %v2042, 0.25
  %v2069 = vmul.f32 %v2049, 0.25
  %v2070 = vmul.f32 %v2056, 0.25
  %v2071 = vmul.f32 %v2063, 0.25
  %v2072 = vsub.f32 %v1640, %v2064
  %v2073 = vsub.f32 %v1692, %v2065
  %v2074 = vsub.f32 %v1744, %v2066
  %v2075 = vsub.f32 %v1796, %v2067
  %v2076 = vsub.f32 %v1848, %v2068
  %v2077 = vsub.f32 %v1900, %v2069
  %v2078 = vsub.f32 %v1952, %v2070
  %v2079 = vsub.f32 %v2004, %v2071
  %v2080 = vmul.f32 %v2072, %v2072
  %v2081 = vmul.f32 %v2073, %v2073
  %v2082 = vmul.f32 %v2074, %v2074
  %v2083 = vmul.f32 %v2075, %v2075
  %v2084 = vmul.f32 %v2076, %v2076
  %v2085 = vmul.f32 %v2077, %v2077
  %v2086 = vmul.f32 %v2078, %v2078
  %v2087 = vmul.f32 %v2079, %v2079
  %v2088 = vsel %vm2007, %v2080, 0.0
  %v2089 = vrot.slane %v2088, 4
  %v2090 = vadd.f32 %v2088, %v2089
  %v2091 = vrot.slane %v2090, 2
  %v2092 = vadd.f32 %v2090, %v2091
  %v2093 = vrot.slane %v2092, 1
  %v2094 = vadd.f32 %v2092, %v2093
  %v2095 = vsel %vm2007, %v2081, 0.0
  %v2096 = vrot.slane %v2095, 4
  %v2097 = vadd.f32 %v2095, %v2096
  %v2098 = vrot.slane %v2097, 2
  %v2099 = vadd.f32 %v2097, %v2098
  %v2100 = vrot.slane %v2099, 1
  %v2101 = vadd.f32 %v2099, %v2100
  %v2102 = vsel %vm2007, %v2082, 0.0
  %v2103 = vrot.slane %v2102, 4
  %v2104 = vadd.f32 %v2102, %v2103
  %v2105 = vrot.slane %v2104, 2
  %v2106 = vadd.f32 %v2104, %v2105
  %v2107 = vrot.slane %v2106, 1
  %v2108 = vadd.f32 %v2106, %v2107
  %v2109 = vsel %vm2007, %v2083, 0.0
  %v2110 = vrot.slane %v2109, 4
  %v2111 = vadd.f32 %v2109, %v2110
  %v2112 = vrot.slane %v2111, 2
  %v2113 = vadd.f32 %v2111, %v2112
  %v2114 = vrot.slane %v2113, 1
  %v2115 = vadd.f32 %v2113, %v2114
  %v2116 = vsel %vm2007, %v2084, 0.0
  %v2117 = vrot.slane %v2116, 4
  %v2118 = vadd.f32 %v2116, %v2117
  %v2119 = vrot.slane %v2118, 2
  %v2120 = vadd.f32 %v2118, %v2119
  %v2121 = vrot.slane %v2120, 1
  %v2122 = vadd.f32 %v2120, %v2121
  %v2123 = vsel %vm2007, %v2085, 0.0
  %v2124 = vrot.slane %v2123, 4
  %v2125 = vadd.f32 %v2123, %v2124
  %v2126 = vrot.slane %v2125, 2
  %v2127 = vadd.f32 %v2125, %v2126
  %v2128 = vrot.slane %v2127, 1
  %v2129 = vadd.f32 %v2127, %v2128
  %v2130 = vsel %vm2007, %v2086, 0.0
  %v2131 = vrot.slane %v2130, 4
  %v2132 = vadd.f32 %v2130, %v2131
  %v2133 = vrot.slane %v2132, 2
  %v2134 = vadd.f32 %v2132, %v2133
  %v2135 = vrot.slane %v2134, 1
  %v2136 = vadd.f32 %v2134, %v2135
  %v2137 = vsel %vm2007, %v2087, 0.0
  %v2138 = vrot.slane %v2137, 4
  %v2139 = vadd.f32 %v2137, %v2138
  %v2140 = vrot.slane %v2139, 2
  %v2141 = vadd.f32 %v2139, %v2140
  %v2142 = vrot.slane %v2141, 1
  %v2143 = vadd.f32 %v2141, %v2142
  %v2144 = vmul.f32 %v2094, 0.25
  %v2145 = vmul.f32 %v2101, 0.25
  %v2146 = vmul.f32 %v2108, 0.25
  %v2147 = vmul.f32 %v2115, 0.25
  %v2148 = vmul.f32 %v2122, 0.25
  %v2149 = vmul.f32 %v2129, 0.25
  %v2150 = vmul.f32 %v2136, 0.25
  %v2151 = vmul.f32 %v2143, 0.25
  %v2152 = vadd.f32 %v2144, 1e-05
  %v2153 = vadd.f32 %v2145, 1e-05
  %v2154 = vadd.f32 %v2146, 1e-05
  %v2155 = vadd.f32 %v2147, 1e-05
  %v2156 = vadd.f32 %v2148, 1e-05
  %v2157 = vadd.f32 %v2149, 1e-05
  %v2158 = vadd.f32 %v2150, 1e-05
  %v2159 = vadd.f32 %v2151, 1e-05
  %v2160 = vrsqrt.pop %v2152
  %v2161 = vmul.f32 %v2160, %v2152
  %v2162 = vmul.f32 %v2161, %v2160
  %v2163 = vmul.f32 0.5, %v2162
  %v2164 = vsub.f32 1.5, %v2163
  %v2165 = vmul.f32 %v2160, %v2164
  %vm2166 = vweird.f32 %v2152
  %vm2167 = vweird.f32 %v2160
  %vm2168 = vmor %vm2166, %vm2167
  %v2169 = vsel %vm2168, %v2160, %v2165
  %v2170 = vrsqrt.pop %v2153
  %v2171 = vmul.f32 %v2170, %v2153
  %v2172 = vmul.f32 %v2171, %v2170
  %v2173 = vmul.f32 0.5, %v2172
  %v2174 = vsub.f32 1.5, %v2173
  %v2175 = vmul.f32 %v2170, %v2174
  %vm2176 = vweird.f32 %v2153
  %vm2177 = vweird.f32 %v2170
  %vm2178 = vmor %vm2176, %vm2177
  %v2179 = vsel %vm2178, %v2170, %v2175
  %v2180 = vrsqrt.pop %v2154
  %v2181 = vmul.f32 %v2180, %v2154
  %v2182 = vmul.f32 %v2181, %v2180
  %v2183 = vmul.f32 0.5, %v2182
  %v2184 = vsub.f32 1.5, %v2183
  %v2185 = vmul.f32 %v2180, %v2184
  %vm2186 = vweird.f32 %v2154
  %vm2187 = vweird.f32 %v2180
  %vm2188 = vmor %vm2186, %vm2187
  %v2189 = vsel %vm2188, %v2180, %v2185
  %v2190 = vrsqrt.pop %v2155
  %v2191 = vmul.f32 %v2190, %v2155
  %v2192 = vmul.f32 %v2191, %v2190
  %v2193 = vmul.f32 0.5, %v2192
  %v2194 = vsub.f32 1.5, %v2193
  %v2195 = vmul.f32 %v2190, %v2194
  %vm2196 = vweird.f32 %v2155
  %vm2197 = vweird.f32 %v2190
  %vm2198 = vmor %vm2196, %vm2197
  %v2199 = vsel %vm2198, %v2190, %v2195
  %v2200 = vrsqrt.pop %v2156
  %v2201 = vmul.f32 %v2200, %v2156
  %v2202 = vmul.f32 %v2201, %v2200
  %v2203 = vmul.f32 0.5, %v2202
  %v2204 = vsub.f32 1.5, %v2203
  %v2205 = vmul.f32 %v2200, %v2204
  %vm2206 = vweird.f32 %v2156
  %vm2207 = vweird.f32 %v2200
  %vm2208 = vmor %vm2206, %vm2207
  %v2209 = vsel %vm2208, %v2200, %v2205
  %v2210 = vrsqrt.pop %v2157
  %v2211 = vmul.f32 %v2210, %v2157
  %v2212 = vmul.f32 %v2211, %v2210
  %v2213 = vmul.f32 0.5, %v2212
  %v2214 = vsub.f32 1.5, %v2213
  %v2215 = vmul.f32 %v2210, %v2214
  %vm2216 = vweird.f32 %v2157
  %vm2217 = vweird.f32 %v2210
  %vm2218 = vmor %vm2216, %vm2217
  %v2219 = vsel %vm2218, %v2210, %v2215
  %v2220 = vrsqrt.pop %v2158
  %v2221 = vmul.f32 %v2220, %v2158
  %v2222 = vmul.f32 %v2221, %v2220
  %v2223 = vmul.f32 0.5, %v2222
  %v2224 = vsub.f32 1.5, %v2223
  %v2225 = vmul.f32 %v2220, %v2224
  %vm2226 = vweird.f32 %v2158
  %vm2227 = vweird.f32 %v2220
  %vm2228 = vmor %vm2226, %vm2227
  %v2229 = vsel %vm2228, %v2220, %v2225
  %v2230 = vrsqrt.pop %v2159
  %v2231 = vmul.f32 %v2230, %v2159
  %v2232 = vmul.f32 %v2231, %v2230
  %v2233 = vmul.f32 0.5, %v2232
  %v2234 = vsub.f32 1.5, %v2233
  %v2235 = vmul.f32 %v2230, %v2234
  %vm2236 = vweird.f32 %v2159
  %vm2237 = vweird.f32 %v2230
  %vm2238 = vmor %vm2236, %vm2237
  %v2239 = vsel %vm2238, %v2230, %v2235
  %v2240 = vmul.f32 %v2072, %v2169
  %v2241 = vmul.f32 %v2073, %v2179
  %v2242 = vmul.f32 %v2074, %v2189
  %v2243 = vmul.f32 %v2075, %v2199
  %v2244 = vmul.f32 %v2076, %v2209
  %v2245 = vmul.f32 %v2077, %v2219
  %v2246 = vmul.f32 %v2078, %v2229
  %v2247 = vmul.f32 %v2079, %v2239
  %v2248 = vld [vmem:[%s3] sm:$0xff]
  %v2250 = vperm.slane %v2248, 0
  %v2251 = vperm.slane %v2248, 1
  %v2252 = vperm.slane %v2248, 2
  %v2253 = vperm.slane %v2248, 3
  %v2254 = vperm.slane %v2248, 4
  %v2255 = vperm.slane %v2248, 5
  %v2256 = vperm.slane %v2248, 6
  %v2257 = vperm.slane %v2248, 7
  %v2266 = vmul.f32 %v2240, %v2250
  %v2267 = vmul.f32 %v2241, %v2251
  %v2268 = vmul.f32 %v2242, %v2252
  %v2269 = vmul.f32 %v2243, %v2253
  %v2270 = vmul.f32 %v2244, %v2254
  %v2271 = vmul.f32 %v2245, %v2255
  %v2272 = vmul.f32 %v2246, %v2256
  %v2273 = vmul.f32 %v2247, %v2257
  %v2274 = vld [vmem:[%s4] sm:$0xff]
  %v2276 = vperm.slane %v2274, 0
  %v2277 = vperm.slane %v2274, 1
  %v2278 = vperm.slane %v2274, 2
  %v2279 = vperm.slane %v2274, 3
  %v2280 = vperm.slane %v2274, 4
  %v2281 = vperm.slane %v2274, 5
  %v2282 = vperm.slane %v2274, 6
  %v2283 = vperm.slane %v2274, 7
  %v2292 = vadd.f32 %v2266, %v2276
  %v2293 = vadd.f32 %v2267, %v2277
  %v2294 = vadd.f32 %v2268, %v2278
  %v2295 = vadd.f32 %v2269, %v2279
  %v2296 = vadd.f32 %v2270, %v2280
  %v2297 = vadd.f32 %v2271, %v2281
  %v2298 = vadd.f32 %v2272, %v2282
  %v2299 = vadd.f32 %v2273, %v2283
  %v2300 = vmul.f32 %v2292, 0.2
  %v2301 = vmul.f32 %v2293, 0.2
  %v2302 = vmul.f32 %v2294, 0.2
  %v2303 = vmul.f32 %v2295, 0.2
  %v2304 = vmul.f32 %v2296, 0.2
  %v2305 = vmul.f32 %v2297, 0.2
  %v2306 = vmul.f32 %v2298, 0.2
  %v2307 = vmul.f32 %v2299, 0.2
  %v2308 = vmax.f32 %v2292, %v2300
  %v2309 = vmax.f32 %v2293, %v2301
  %v2310 = vmax.f32 %v2294, %v2302
  %v2311 = vmax.f32 %v2295, %v2303
  %v2312 = vmax.f32 %v2296, %v2304
  %v2313 = vmax.f32 %v2297, %v2305
  %v2314 = vmax.f32 %v2298, %v2306
  %v2315 = vmax.f32 %v2299, %v2307
  %v2316 = vld [vmem:[%s5] sm:$0xff]
  %v2317 = vld [vmem:[%s5 + $0x8] sm:$0xff]
  %v2318 = vld [vmem:[%s5 + $0x10] sm:$0xff]
  %v2319 = vld [vmem:[%s5 + $0x18] sm:$0xff]
  %v2320 = vld [vmem:[%s5 + $0x20] sm:$0xff]
  %v2321 = vld [vmem:[%s5 + $0x28] sm:$0xff]
  %v2322 = vld [vmem:[%s5 + $0x30] sm:$0xff]
  %v2323 = vld [vmem:[%s5 + $0x38] sm:$0xff]
  %v2324 = vld [vmem:[%s5 + $0x40] sm:$0xff]
  %v2325 = vld [vmem:[%s5 + $0x48] sm:$0xff]
  %v2326 = vld [vmem:[%s5 + $0x50] sm:$0xff]
  %v2327 = vld [vmem:[%s5 + $0x58] sm:$0xff]
  %v2328 = vld [vmem:[%s5 + $0x60] sm:$0xff]
  %v2329 = vld [vmem:[%s5 + $0x68] sm:$0xff]
  %v2330 = vld [vmem:[%s5 + $0x70] sm:$0xff]
  %v2331 = vld [vmem:[%s5 + $0x78] sm:$0xff]
  %v2332 = vld [vmem:[%s5 + $0x80] sm:$0xff]
  %v2333 = vld [vmem:[%s5 + $0x88] sm:$0xff]
  %v2334 = vld [vmem:[%s5 + $0x90] sm:$0xff]
  %v2335 = vld [vmem:[%s5 + $0x98] sm:$0xff]
  %v2336 = vld [vmem:[%s5 + $0xa0] sm:$0xff]
  %v2337 = vld [vmem:[%s5 + $0xa8] sm:$0xff]
  %v2338 = vld [vmem:[%s5 + $0xb0] sm:$0xff]
  %v2339 = vld [vmem:[%s5 + $0xb8] sm:$0xff]
  %v2340 = vld [vmem:[%s5 + $0xc0] sm:$0xff]
  %v2341 = vld [vmem:[%s5 + $0xc8] sm:$0xff]
  %v2342 = vld [vmem:[%s5 + $0xd0] sm:$0xff]
  %v2343 = vld [vmem:[%s5 + $0xd8] sm:$0xff]
  %v2344 = vld [vmem:[%s5 + $0xe0] sm:$0xff]
  %v2345 = vld [vmem:[%s5 + $0xe8] sm:$0xff]
  %v2346 = vld [vmem:[%s5 + $0xf0] sm:$0xff]
  %v2347 = vld [vmem:[%s5 + $0xf8] sm:$0xff]
  %v2348 = vld [vmem:[%s5 + $0x100] sm:$0xff]
  %v2349 = vld [vmem:[%s5 + $0x108] sm:$0xff]
  %v2350 = vld [vmem:[%s5 + $0x110] sm:$0xff]
  %v2351 = vld [vmem:[%s5 + $0x118] sm:$0xff]
  %v2352 = vld [vmem:[%s5 + $0x120] sm:$0xff]
  %v2353 = vld [vmem:[%s5 + $0x128] sm:$0xff]
  %v2354 = vld [vmem:[%s5 + $0x130] sm:$0xff]
  %v2355 = vld [vmem:[%s5 + $0x138] sm:$0xff]
  %v2356 = vld [vmem:[%s5 + $0x140] sm:$0xff]
  %v2357 = vld [vmem:[%s5 + $0x148] sm:$0xff]
  %v2358 = vld [vmem:[%s5 + $0x150] sm:$0xff]
  %v2359 = vld [vmem:[%s5 + $0x158] sm:$0xff]
  %v2360 = vld [vmem:[%s5 + $0x160] sm:$0xff]
  %v2361 = vld [vmem:[%s5 + $0x168] sm:$0xff]
  %v2362 = vld [vmem:[%s5 + $0x170] sm:$0xff]
  %v2363 = vld [vmem:[%s5 + $0x178] sm:$0xff]
  %v2364 = vld [vmem:[%s5 + $0x180] sm:$0xff]
  %v2365 = vld [vmem:[%s5 + $0x188] sm:$0xff]
  %v2366 = vld [vmem:[%s5 + $0x190] sm:$0xff]
  %v2367 = vld [vmem:[%s5 + $0x198] sm:$0xff]
  %v2368 = vld [vmem:[%s5 + $0x1a0] sm:$0xff]
  %v2369 = vld [vmem:[%s5 + $0x1a8] sm:$0xff]
  %v2370 = vld [vmem:[%s5 + $0x1b0] sm:$0xff]
  %v2371 = vld [vmem:[%s5 + $0x1b8] sm:$0xff]
  %v2372 = vld [vmem:[%s5 + $0x1c0] sm:$0xff]
  %v2373 = vld [vmem:[%s5 + $0x1c8] sm:$0xff]
  %v2374 = vld [vmem:[%s5 + $0x1d0] sm:$0xff]
  %v2375 = vld [vmem:[%s5 + $0x1d8] sm:$0xff]
  %v2376 = vld [vmem:[%s5 + $0x1e0] sm:$0xff]
  %v2377 = vld [vmem:[%s5 + $0x1e8] sm:$0xff]
  %v2378 = vld [vmem:[%s5 + $0x1f0] sm:$0xff]
  %v2379 = vld [vmem:[%s5 + $0x1f8] sm:$0xff]
  %v2380 = vld [vmem:[%s5 + $0x200] sm:$0xff]
  %v2381 = vld [vmem:[%s5 + $0x208] sm:$0xff]
  %v2382 = vld [vmem:[%s5 + $0x210] sm:$0xff]
  %v2383 = vld [vmem:[%s5 + $0x218] sm:$0xff]
  %v2384 = vld [vmem:[%s5 + $0x220] sm:$0xff]
  %v2385 = vld [vmem:[%s5 + $0x228] sm:$0xff]
  %v2386 = vld [vmem:[%s5 + $0x230] sm:$0xff]
  %v2387 = vld [vmem:[%s5 + $0x238] sm:$0xff]
  %v2388 = vld [vmem:[%s5 + $0x240] sm:$0xff]
  %v2389 = vld [vmem:[%s5 + $0x248] sm:$0xff]
  %v2390 = vld [vmem:[%s5 + $0x250] sm:$0xff]
  %v2391 = vld [vmem:[%s5 + $0x258] sm:$0xff]
  %v2392 = vld [vmem:[%s5 + $0x260] sm:$0xff]
  %v2393 = vld [vmem:[%s5 + $0x268] sm:$0xff]
  %v2394 = vld [vmem:[%s5 + $0x270] sm:$0xff]
  %v2395 = vld [vmem:[%s5 + $0x278] sm:$0xff]
  %v2396 = vld [vmem:[%s5 + $0x280] sm:$0xff]
  %v2397 = vld [vmem:[%s5 + $0x288] sm:$0xff]
  %v2398 = vld [vmem:[%s5 + $0x290] sm:$0xff]
  %v2399 = vld [vmem:[%s5 + $0x298] sm:$0xff]
  %v2400 = vld [vmem:[%s5 + $0x2a0] sm:$0xff]
  %v2401 = vld [vmem:[%s5 + $0x2a8] sm:$0xff]
  %v2402 = vld [vmem:[%s5 + $0x2b0] sm:$0xff]
  %v2403 = vld [vmem:[%s5 + $0x2b8] sm:$0xff]
  %v2404 = vld [vmem:[%s5 + $0x2c0] sm:$0xff]
  %v2405 = vld [vmem:[%s5 + $0x2c8] sm:$0xff]
  %v2406 = vld [vmem:[%s5 + $0x2d0] sm:$0xff]
  %v2407 = vld [vmem:[%s5 + $0x2d8] sm:$0xff]
  %v2408 = vld [vmem:[%s5 + $0x2e0] sm:$0xff]
  %v2409 = vld [vmem:[%s5 + $0x2e8] sm:$0xff]
  %v2410 = vld [vmem:[%s5 + $0x2f0] sm:$0xff]
  %v2411 = vld [vmem:[%s5 + $0x2f8] sm:$0xff]
  %v2412 = vld [vmem:[%s5 + $0x300] sm:$0xff]
  %v2413 = vld [vmem:[%s5 + $0x308] sm:$0xff]
  %v2414 = vld [vmem:[%s5 + $0x310] sm:$0xff]
  %v2415 = vld [vmem:[%s5 + $0x318] sm:$0xff]
  %v2416 = vld [vmem:[%s5 + $0x320] sm:$0xff]
  %v2417 = vld [vmem:[%s5 + $0x328] sm:$0xff]
  %v2418 = vld [vmem:[%s5 + $0x330] sm:$0xff]
  %v2419 = vld [vmem:[%s5 + $0x338] sm:$0xff]
  %v2420 = vld [vmem:[%s5 + $0x340] sm:$0xff]
  %v2421 = vld [vmem:[%s5 + $0x348] sm:$0xff]
  %v2422 = vld [vmem:[%s5 + $0x350] sm:$0xff]
  %v2423 = vld [vmem:[%s5 + $0x358] sm:$0xff]
  %v2424 = vld [vmem:[%s5 + $0x360] sm:$0xff]
  %v2425 = vld [vmem:[%s5 + $0x368] sm:$0xff]
  %v2426 = vld [vmem:[%s5 + $0x370] sm:$0xff]
  %v2427 = vld [vmem:[%s5 + $0x378] sm:$0xff]
  %v2428 = vld [vmem:[%s5 + $0x380] sm:$0xff]
  %v2429 = vld [vmem:[%s5 + $0x388] sm:$0xff]
  %v2430 = vld [vmem:[%s5 + $0x390] sm:$0xff]
  %v2431 = vld [vmem:[%s5 + $0x398] sm:$0xff]
  %v2432 = vld [vmem:[%s5 + $0x3a0] sm:$0xff]
  %v2433 = vld [vmem:[%s5 + $0x3a8] sm:$0xff]
  %v2434 = vld [vmem:[%s5 + $0x3b0] sm:$0xff]
  %v2435 = vld [vmem:[%s5 + $0x3b8] sm:$0xff]
  %v2436 = vld [vmem:[%s5 + $0x3c0] sm:$0xff]
  %v2437 = vld [vmem:[%s5 + $0x3c8] sm:$0xff]
  %v2438 = vld [vmem:[%s5 + $0x3d0] sm:$0xff]
  %v2439 = vld [vmem:[%s5 + $0x3d8] sm:$0xff]
  %v2440 = vld [vmem:[%s5 + $0x3e0] sm:$0xff]
  %v2441 = vld [vmem:[%s5 + $0x3e8] sm:$0xff]
  %v2442 = vld [vmem:[%s5 + $0x3f0] sm:$0xff]
  %v2443 = vld [vmem:[%s5 + $0x3f8] sm:$0xff]
  %v2444 = vld [vmem:[%s6] sm:$0x1]
  %v2446 = vperm.slane %v2444, 0
  %2448 = vmatpush.msra.mxu0 %v2331
  %2449 = vmatpush.msra.mxu0 %v2330
  %2450 = vmatpush.msra.mxu0 %v2329
  %2451 = vmatpush.msra.mxu0 %v2328
  %2452 = vmatpush.msra.mxu0 %v2327
  %2453 = vmatpush.msra.mxu0 %v2326
  %2454 = vmatpush.msra.mxu0 %v2325
  %2455 = vmatpush.msra.mxu0 %v2324
  %2456 = vmatpush.msra.mxu0 %v2323
  %2457 = vmatpush.msra.mxu0 %v2322
  %2458 = vmatpush.msra.mxu0 %v2321
  %2459 = vmatpush.msra.mxu0 %v2320
  %2460 = vmatpush.msra.mxu0 %v2319
  %2461 = vmatpush.msra.mxu0 %v2318
  %2462 = vmatpush.msra.mxu0 %v2317
  %2463 = vmatpush.msra.mxu0 %v2316
  %2464 = vmatmul.f32.gmra.mxu0 %v2308
  %v2465 = vpop.f32.mrf.mxu0
  %v2466 = vadd.f32 %v2446, %v2465
  %2467 = vdwg.mxu0
  %2468 = vmatpush.msra.mxu0 %v2347
  %2469 = vmatpush.msra.mxu0 %v2346
  %2470 = vmatpush.msra.mxu0 %v2345
  %2471 = vmatpush.msra.mxu0 %v2344
  %2472 = vmatpush.msra.mxu0 %v2343
  %2473 = vmatpush.msra.mxu0 %v2342
  %2474 = vmatpush.msra.mxu0 %v2341
  %2475 = vmatpush.msra.mxu0 %v2340
  %2476 = vmatpush.msra.mxu0 %v2339
  %2477 = vmatpush.msra.mxu0 %v2338
  %2478 = vmatpush.msra.mxu0 %v2337
  %2479 = vmatpush.msra.mxu0 %v2336
  %2480 = vmatpush.msra.mxu0 %v2335
  %2481 = vmatpush.msra.mxu0 %v2334
  %2482 = vmatpush.msra.mxu0 %v2333
  %2483 = vmatpush.msra.mxu0 %v2332
  %2484 = vmatmul.f32.gmra.mxu0 %v2309
  %v2485 = vpop.f32.mrf.mxu0
  %v2486 = vadd.f32 %v2466, %v2485
  %2487 = vdwg.mxu0
  %2488 = vmatpush.msra.mxu0 %v2363
  %2489 = vmatpush.msra.mxu0 %v2362
  %2490 = vmatpush.msra.mxu0 %v2361
  %2491 = vmatpush.msra.mxu0 %v2360
  %2492 = vmatpush.msra.mxu0 %v2359
  %2493 = vmatpush.msra.mxu0 %v2358
  %2494 = vmatpush.msra.mxu0 %v2357
  %2495 = vmatpush.msra.mxu0 %v2356
  %2496 = vmatpush.msra.mxu0 %v2355
  %2497 = vmatpush.msra.mxu0 %v2354
  %2498 = vmatpush.msra.mxu0 %v2353
  %2499 = vmatpush.msra.mxu0 %v2352
  %2500 = vmatpush.msra.mxu0 %v2351
  %2501 = vmatpush.msra.mxu0 %v2350
  %2502 = vmatpush.msra.mxu0 %v2349
  %2503 = vmatpush.msra.mxu0 %v2348
  %2504 = vmatmul.f32.gmra.mxu0 %v2310
  %v2505 = vpop.f32.mrf.mxu0
  %v2506 = vadd.f32 %v2486, %v2505
  %2507 = vdwg.mxu0
  %2508 = vmatpush.msra.mxu0 %v2379
  %2509 = vmatpush.msra.mxu0 %v2378
  %2510 = vmatpush.msra.mxu0 %v2377
  %2511 = vmatpush.msra.mxu0 %v2376
  %2512 = vmatpush.msra.mxu0 %v2375
  %2513 = vmatpush.msra.mxu0 %v2374
  %2514 = vmatpush.msra.mxu0 %v2373
  %2515 = vmatpush.msra.mxu0 %v2372
  %2516 = vmatpush.msra.mxu0 %v2371
  %2517 = vmatpush.msra.mxu0 %v2370
  %2518 = vmatpush.msra.mxu0 %v2369
  %2519 = vmatpush.msra.mxu0 %v2368
  %2520 = vmatpush.msra.mxu0 %v2367
  %2521 = vmatpush.msra.mxu0 %v2366
  %2522 = vmatpush.msra.mxu0 %v2365
  %2523 = vmatpush.msra.mxu0 %v2364
  %2524 = vmatmul.f32.gmra.mxu0 %v2311
  %v2525 = vpop.f32.mrf.mxu0
  %v2526 = vadd.f32 %v2506, %v2525
  %2527 = vdwg.mxu0
  %2528 = vmatpush.msra.mxu0 %v2395
  %2529 = vmatpush.msra.mxu0 %v2394
  %2530 = vmatpush.msra.mxu0 %v2393
  %2531 = vmatpush.msra.mxu0 %v2392
  %2532 = vmatpush.msra.mxu0 %v2391
  %2533 = vmatpush.msra.mxu0 %v2390
  %2534 = vmatpush.msra.mxu0 %v2389
  %2535 = vmatpush.msra.mxu0 %v2388
  %2536 = vmatpush.msra.mxu0 %v2387
  %2537 = vmatpush.msra.mxu0 %v2386
  %2538 = vmatpush.msra.mxu0 %v2385
  %2539 = vmatpush.msra.mxu0 %v2384
  %2540 = vmatpush.msra.mxu0 %v2383
  %2541 = vmatpush.msra.mxu0 %v2382
  %2542 = vmatpush.msra.mxu0 %v2381
  %2543 = vmatpush.msra.mxu0 %v2380
  %2544 = vmatmul.f32.gmra.mxu0 %v2312
  %v2545 = vpop.f32.mrf.mxu0
  %v2546 = vadd.f32 %v2526, %v2545
  %2547 = vdwg.mxu0
  %2548 = vmatpush.msra.mxu0 %v2411
  %2549 = vmatpush.msra.mxu0 %v2410
  %2550 = vmatpush.msra.mxu0 %v2409
  %2551 = vmatpush.msra.mxu0 %v2408
  %2552 = vmatpush.msra.mxu0 %v2407
  %2553 = vmatpush.msra.mxu0 %v2406
  %2554 = vmatpush.msra.mxu0 %v2405
  %2555 = vmatpush.msra.mxu0 %v2404
  %2556 = vmatpush.msra.mxu0 %v2403
  %2557 = vmatpush.msra.mxu0 %v2402
  %2558 = vmatpush.msra.mxu0 %v2401
  %2559 = vmatpush.msra.mxu0 %v2400
  %2560 = vmatpush.msra.mxu0 %v2399
  %2561 = vmatpush.msra.mxu0 %v2398
  %2562 = vmatpush.msra.mxu0 %v2397
  %2563 = vmatpush.msra.mxu0 %v2396
  %2564 = vmatmul.f32.gmra.mxu0 %v2313
  %v2565 = vpop.f32.mrf.mxu0
  %v2566 = vadd.f32 %v2546, %v2565
  %2567 = vdwg.mxu0
  %2568 = vmatpush.msra.mxu0 %v2427
  %2569 = vmatpush.msra.mxu0 %v2426
  %2570 = vmatpush.msra.mxu0 %v2425
  %2571 = vmatpush.msra.mxu0 %v2424
  %2572 = vmatpush.msra.mxu0 %v2423
  %2573 = vmatpush.msra.mxu0 %v2422
  %2574 = vmatpush.msra.mxu0 %v2421
  %2575 = vmatpush.msra.mxu0 %v2420
  %2576 = vmatpush.msra.mxu0 %v2419
  %2577 = vmatpush.msra.mxu0 %v2418
  %2578 = vmatpush.msra.mxu0 %v2417
  %2579 = vmatpush.msra.mxu0 %v2416
  %2580 = vmatpush.msra.mxu0 %v2415
  %2581 = vmatpush.msra.mxu0 %v2414
  %2582 = vmatpush.msra.mxu0 %v2413
  %2583 = vmatpush.msra.mxu0 %v2412
  %2584 = vmatmul.f32.gmra.mxu0 %v2314
  %v2585 = vpop.f32.mrf.mxu0
  %v2586 = vadd.f32 %v2566, %v2585
  %2587 = vdwg.mxu0
  %2588 = vmatpush.msra.mxu0 %v2443
  %2589 = vmatpush.msra.mxu0 %v2442
  %2590 = vmatpush.msra.mxu0 %v2441
  %2591 = vmatpush.msra.mxu0 %v2440
  %2592 = vmatpush.msra.mxu0 %v2439
  %2593 = vmatpush.msra.mxu0 %v2438
  %2594 = vmatpush.msra.mxu0 %v2437
  %2595 = vmatpush.msra.mxu0 %v2436
  %2596 = vmatpush.msra.mxu0 %v2435
  %2597 = vmatpush.msra.mxu0 %v2434
  %2598 = vmatpush.msra.mxu0 %v2433
  %2599 = vmatpush.msra.mxu0 %v2432
  %2600 = vmatpush.msra.mxu0 %v2431
  %2601 = vmatpush.msra.mxu0 %v2430
  %2602 = vmatpush.msra.mxu0 %v2429
  %2603 = vmatpush.msra.mxu0 %v2428
  %2604 = vmatmul.f32.gmra.mxu0 %v2315
  %v2605 = vpop.f32.mrf.mxu0
  %v2606 = vadd.f32 %v2586, %v2605
  %2607 = vdwg.mxu0
  %vm2608 = vcmask 101376
  %2609 = vst.msk [vmem:[%s7] sm:$0xf] %vm2608, %v2606
  // Predicated region
  $region30: #{discriminator_mwm_forward.7} parent=0 // pred_check
    _
  $region31: #{discriminator_mwm_forward.7} parent=0 // pred_check_branch
    %2611 = sbr.rel (0) target = $region33
  $region32: #{discriminator_mwm_forward.7} parent=0 // pred_region
    _
  $region33: #{discriminator_mwm_forward.7} parent=0 // pred_fallthru
    _
  // Predicated region
  $region34: #{discriminator_mwm_forward.7} parent=0 // pred_check
    _
  $region35: #{discriminator_mwm_forward.7} parent=0 // pred_check_branch
    %2613 = sbr.rel (0) target = $region37
  $region36: #{discriminator_mwm_forward.7} parent=0 // pred_region
    _
  $region37: #{discriminator_mwm_forward.7} parent=0 // pred_fallthru
    _

</llo_original>
